<compile_context>
chip_gen: v7x
topology: tpu7x:2x2x1
jax: 0.10.0
libtpu: 0.0.40
codegen_flags: <defaults>
</compile_context>

<pallas_src>
import jax
import jax.numpy as jnp
from jax.experimental import pallas as pl
from jax.experimental.pallas import tpu as pltpu  # noqa: F401  (TPU backend extensions)

# ---- small, module-consistent synthetic sizes ----
S = 16            # spatial tokens per frame (e.g. H*W)
B = 2             # frames (b*t)
D = 32            # d_model (cfg.MODEL.TASTVG.HIDDEN)
FF = 64           # dim_feedforward
H = 4             # attention heads
DH = D // H
NUM_LAYERS = 2
EPS = 1e-5
N = S * B         # total tokens processed as one slab

WIDE = max(2 * D, FF)         # width of the "wide" weight / bias slabs
BIAS_ROWS = 16                # padded row count of the bias slab (sublane multiple)
# bias-slab row indices
R_BQK, R_B1, R_BV, R_BO, R_G1, R_BE1, R_B2, R_G2, R_BE2 = range(9)


def _layernorm(x, g, b):
    mu = jnp.mean(x, axis=-1, keepdims=True)
    var = jnp.mean((x - mu) ** 2, axis=-1, keepdims=True)
    return (x - mu) * jax.lax.rsqrt(var + EPS) * g + b


# --------------------------------------------------------------------------
# Fused kernel: all encoder layers + final LayerNorm + frame/video means.
# Inputs are 2-D token slabs [N, D] with rows ordered (s, b); packed weights.
# --------------------------------------------------------------------------
def fused_encoder_kernel(src_ref, pos_ref, w_wide_ref, w_narrow_ref, bias_ref,
                         fnorm_ref, out_ref, frame_ref, video_ref):
    x = src_ref[...]            # [N, D]
    pos = pos_ref[...]          # [N, D]

    # Block-diagonal mask: token n belongs to frame n % B; attention only
    # within the same frame.  Built once and reused by every layer/head
    # (hoisted out of the static loops -- JAX does not CSE broadcasts).
    row_b = jax.lax.broadcasted_iota(jnp.int32, (N, N), 0) % B
    col_b = jax.lax.broadcasted_iota(jnp.int32, (N, N), 1) % B
    attn_mask = jnp.where(row_b == col_b, 0.0, -1e30).astype(jnp.float32)

    for l in range(NUM_LAYERS):                     # static unrolled layer loop
        w_wide = w_wide_ref[l]                      # [2D, WIDE]
        w_nar = w_narrow_ref[l]                     # [2D+FF, D]
        bias = bias_ref[l]                          # [BIAS_ROWS, WIDE]

        w_qk = w_wide[0:D, 0:2 * D]                 # [D, 2D]  (q half pre-scaled)
        w_ff1 = w_wide[D:2 * D, 0:FF]               # [D, FF]
        w_v = w_nar[0:D, :]                         # [D, D]
        w_o = w_nar[D:2 * D, :]                     # [D, D]
        w_ff2 = w_nar[2 * D:2 * D + FF, :]          # [FF, D]

        b_qk = bias[R_BQK:R_BQK + 1, 0:2 * D]
        b_ff1 = bias[R_B1:R_B1 + 1, 0:FF]
        b_v = bias[R_BV:R_BV + 1, 0:D]
        b_o = bias[R_BO:R_BO + 1, 0:D]
        g1 = bias[R_G1:R_G1 + 1, 0:D]
        be1 = bias[R_BE1:R_BE1 + 1, 0:D]
        b_ff2 = bias[R_B2:R_B2 + 1, 0:D]
        g2 = bias[R_G2:R_G2 + 1, 0:D]
        be2 = bias[R_BE2:R_BE2 + 1, 0:D]

        xp = x + pos                                # q = k = src + pos ; value = src
        qk = jnp.dot(xp, w_qk, preferred_element_type=jnp.float32) + b_qk   # [N, 2D]
        v = jnp.dot(x, w_v, preferred_element_type=jnp.float32) + b_v       # [N, D]

        # concat-free multi-head attention: accumulate o_h @ Wo[h*DH:(h+1)*DH, :]
        attn = jnp.broadcast_to(b_o, (N, D))        # accumulator seeded with out-proj bias
        for h in range(H):                          # static head loop
            qh = qk[:, h * DH:(h + 1) * DH]
            kh = qk[:, D + h * DH:D + (h + 1) * DH]
            vh = v[:, h * DH:(h + 1) * DH]
            s = jnp.dot(qh, kh.T, preferred_element_type=jnp.float32) + attn_mask
            s = s - jnp.max(s, axis=-1, keepdims=True)
            e = jnp.exp(s)
            pr = e * pl.reciprocal(jnp.sum(e, axis=-1, keepdims=True), approx=True)
            oh = jnp.dot(pr, vh, preferred_element_type=jnp.float32)        # [N, DH]
            attn = attn + jnp.dot(oh, w_o[h * DH:(h + 1) * DH, :],
                                  preferred_element_type=jnp.float32)       # [N, D]

        y = _layernorm(x + attn, g1, be1)                                   # norm1
        ff = jnp.dot(y, w_ff1, preferred_element_type=jnp.float32) + b_ff1
        ff = jnp.maximum(ff, 0.0)                                           # ReLU
        ff = jnp.dot(ff, w_ff2, preferred_element_type=jnp.float32) + b_ff2
        x = _layernorm(y + ff, g2, be2)                                     # norm2

    # final LayerNorm (self.norm) + reductions
    normed = _layernorm(x, fnorm_ref[0:1, :], fnorm_ref[1:2, :])            # [N, D]
    out_ref[...] = normed

    # frame_src[b] = mean over s of output[s, b, :]  (rows with n % B == b),
    # expressed as one small MXU matmul instead of a strided gather/reduce.
    bi = jax.lax.broadcasted_iota(jnp.int32, (B, N), 0)
    ni = jax.lax.broadcasted_iota(jnp.int32, (B, N), 1)
    sel = jnp.where(ni % B == bi, 1.0 / S, 0.0).astype(jnp.float32)         # [B, N]
    frame = jnp.dot(sel, normed, preferred_element_type=jnp.float32)        # [B, D]
    frame_ref[...] = frame
    video_ref[...] = jnp.mean(frame, axis=0, keepdims=True)                 # [1, D]


# --------------------------------------------------------------------------
# Wrapper reproducing SpatialTemporalEncoder.forward semantics.
# --------------------------------------------------------------------------
def spatial_temporal_encoder_forward(src, pos, packed):
    """src, pos: [S, B, D] (PyTorch seq-first).
       Returns (output [S, B, D], frame_src [B, D], video_src [D])."""
    w_wide, w_narrow, bias, fnorm = packed
    Sn, Bn, Dn = src.shape
    src2d = src.reshape(Sn * Bn, Dn)     # free: contiguous row-major reshape
    pos2d = pos.reshape(Sn * Bn, Dn)
    out2d, frame, video = pl.pallas_call(
        fused_encoder_kernel,
        out_shape=(jax.ShapeDtypeStruct((Sn * Bn, Dn), jnp.float32),
                   jax.ShapeDtypeStruct((Bn, Dn), jnp.float32),
                   jax.ShapeDtypeStruct((1, Dn), jnp.float32)),
    )(src2d, pos2d, w_wide, w_narrow, bias, fnorm)
    return out2d.reshape(Sn, Bn, Dn), frame, video[0]


# --------------------------------------------------------------------------
# Parameter init (weights stored so the kernel computes x @ W + b) and
# packing into contiguous slabs.
# --------------------------------------------------------------------------
def init_layer_params(key):
    ks = jax.random.split(key, 16)

    def lin(k, din, dout):
        return jax.random.normal(k, (din, dout), jnp.float32) / jnp.sqrt(jnp.float32(din))

    def vec(k, n, scale=0.1):
        return scale * jax.random.normal(k, (n,), jnp.float32)

    return {
        "wq": lin(ks[0], D, D),  "bq": vec(ks[1], D),
        "wk": lin(ks[2], D, D),  "bk": vec(ks[3], D),
        "wv": lin(ks[4], D, D),  "bv": vec(ks[5], D),
        "wo": lin(ks[6], D, D),  "bo": vec(ks[7], D),
        "g1": 1.0 + vec(ks[8], D), "be1": vec(ks[9], D),
        "w1": lin(ks[10], D, FF), "b1": vec(ks[11], FF),
        "w2": lin(ks[12], FF, D), "b2": vec(ks[13], D),
        "g2": 1.0 + vec(ks[14], D), "be2": vec(ks[15], D),
    }


def pack_params(layer_params, norm_g, norm_b):
    """Pack per-layer params into 3 stacked slabs + final-norm array.
       The 1/sqrt(DH) attention scale is folded into Wq / bq here."""
    scale = 1.0 / (DH ** 0.5)
    w_wide_l, w_narrow_l, bias_l = [], [], []
    for prm in layer_params:
        wqk = jnp.concatenate([prm["wq"] * scale, prm["wk"]], axis=1)       # [D, 2D]
        w_wide = jnp.zeros((2 * D, WIDE), jnp.float32)
        w_wide = w_wide.at[0:D, 0:2 * D].set(wqk)
        w_wide = w_wide.at[D:2 * D, 0:FF].set(prm["w1"])
        w_narrow = jnp.concatenate([prm["wv"], prm["wo"], prm["w2"]], axis=0)  # [2D+FF, D]

        bias = jnp.zeros((BIAS_ROWS, WIDE), jnp.float32)
        bias = bias.at[R_BQK, 0:2 * D].set(
            jnp.concatenate([prm["bq"] * scale, prm["bk"]]))
        bias = bias.at[R_B1, 0:FF].set(prm["b1"])
        bias = bias.at[R_BV, 0:D].set(prm["bv"])
        bias = bias.at[R_BO, 0:D].set(prm["bo"])
        bias = bias.at[R_G1, 0:D].set(prm["g1"])
        bias = bias.at[R_BE1, 0:D].set(prm["be1"])
        bias = bias.at[R_B2, 0:D].set(prm["b2"])
        bias = bias.at[R_G2, 0:D].set(prm["g2"])
        bias = bias.at[R_BE2, 0:D].set(prm["be2"])

        w_wide_l.append(w_wide)
        w_narrow_l.append(w_narrow)
        bias_l.append(bias)

    fnorm = jnp.stack([norm_g, norm_b], axis=0)                             # [2, D]
    return (jnp.stack(w_wide_l), jnp.stack(w_narrow_l), jnp.stack(bias_l), fnorm)


# --------------------------------------------------------------------------
# Pure-JAX reference (mirrors the PyTorch module) for a numerical sanity check.
# --------------------------------------------------------------------------
def reference_forward(src, pos, layer_params, norm_g, norm_b):
    x = src
    scale = 1.0 / (DH ** 0.5)
    for prm in layer_params:
        xp = x + pos
        q = (xp @ prm["wq"] + prm["bq"]).reshape(S, B, H, DH)
        k = (xp @ prm["wk"] + prm["bk"]).reshape(S, B, H, DH)
        v = (x @ prm["wv"] + prm["bv"]).reshape(S, B, H, DH)
        s = jnp.einsum('sbhd,tbhd->bhst', q, k) * scale
        p = jax.nn.softmax(s, axis=-1)
        o = jnp.einsum('bhst,tbhd->sbhd', p, v).reshape(S, B, D)
        o = o @ prm["wo"] + prm["bo"]
        y = _layernorm(x + o, prm["g1"], prm["be1"])
        ff = jax.nn.relu(y @ prm["w1"] + prm["b1"]) @ prm["w2"] + prm["b2"]
        x = _layernorm(y + ff, prm["g2"], prm["be2"])
    out = _layernorm(x, norm_g, norm_b)
    frame = jnp.mean(out, axis=0)
    video = jnp.mean(frame, axis=0)
    return out, frame, video


if __name__ == "__main__":
    key = jax.random.PRNGKey(0)
    k_src, k_pos, k_par, k_ng, k_nb = jax.random.split(key, 5)

    src = jax.random.normal(k_src, (S, B, D), jnp.float32)   # [seq, batch, d_model]
    pos = jax.random.normal(k_pos, (S, B, D), jnp.float32)

    layer_keys = jax.random.split(k_par, NUM_LAYERS)
    layer_params = [init_layer_params(layer_keys[i]) for i in range(NUM_LAYERS)]
    norm_g = 1.0 + 0.1 * jax.random.normal(k_ng, (D,), jnp.float32)  # self.norm
    norm_b = 0.1 * jax.random.normal(k_nb, (D,), jnp.float32)

    packed = pack_params(layer_params, norm_g, norm_b)

    fwd = jax.jit(spatial_temporal_encoder_forward)
    output, frame_src, video_src = fwd(src, pos, packed)
    jax.block_until_ready((output, frame_src, video_src))

    assert output.shape == (S, B, D)
    assert frame_src.shape == (B, D)
    assert video_src.shape == (D,)

    # numerical sanity check vs. pure-JAX reference (loose tolerance: the
    # kernel uses the EUP approximate reciprocal in the softmax).
    ref_out, ref_frame, ref_video = reference_forward(src, pos, layer_params,
                                                      norm_g, norm_b)
    assert jnp.allclose(output, ref_out, atol=5e-2, rtol=5e-2)
    assert jnp.allclose(frame_src, ref_frame, atol=5e-2, rtol=5e-2)
    assert jnp.allclose(video_src, ref_video, atol=5e-2, rtol=5e-2)

    print("KERNEL_OK")
</pallas_src>

<mosaic_0001>
module attributes {stable_mosaic.version = 11 : i64} {
  func.func @fused_encoder_kernel(%arg0: memref<32x32xf32, #tpu.memory_space<vmem>>, %arg1: memref<32x32xf32, #tpu.memory_space<vmem>>, %arg2: memref<2x64x64xf32, #tpu.memory_space<vmem>>, %arg3: memref<2x128x32xf32, #tpu.memory_space<vmem>>, %arg4: memref<2x16x64xf32, #tpu.memory_space<vmem>>, %arg5: memref<2x32xf32, #tpu.memory_space<vmem>>, %arg6: memref<32x32xf32, #tpu.memory_space<vmem>>, %arg7: memref<2x32xf32, #tpu.memory_space<vmem>>, %arg8: memref<1x32xf32, #tpu.memory_space<vmem>>) attributes {dimension_semantics = [], scalar_prefetch = 0 : i64, scratch_operands = 0 : i64, tpu.core_type = #tpu.core_type<tc>} {
    %c0 = arith.constant 0 : index
    %c0_0 = arith.constant 0 : index
    %0 = vector.load %arg0[%c0, %c0_0] : memref<32x32xf32, #tpu.memory_space<vmem>>, vector<32x32xf32>
    %c0_1 = arith.constant 0 : index
    %c0_2 = arith.constant 0 : index
    %1 = vector.load %arg1[%c0_1, %c0_2] : memref<32x32xf32, #tpu.memory_space<vmem>>, vector<32x32xf32>
    %2 = tpu.iota {dimensions = array<i32: 0>} : vector<32x32xi32>
    %c2_i32 = arith.constant 2 : i32
    %c0_i32 = arith.constant 0 : i32
    %3 = arith.cmpi eq, %c2_i32, %c0_i32 : i32
    %c1_i32 = arith.constant 1 : i32
    %4 = arith.select %3, %c1_i32, %c2_i32 : i32
    %5 = vector.broadcast %4 : i32 to vector<32x32xi32>
    %6 = arith.remsi %2, %5 : vector<32x32xi32>
    %c0_i32_3 = arith.constant 0 : i32
    %7 = vector.broadcast %c0_i32_3 : i32 to vector<32x32xi32>
    %8 = arith.cmpi ne, %6, %7 : vector<32x32xi32>
    %c0_i32_4 = arith.constant 0 : i32
    %9 = vector.broadcast %c0_i32_4 : i32 to vector<32x32xi32>
    %10 = arith.cmpi slt, %6, %9 : vector<32x32xi32>
    %c0_i32_5 = arith.constant 0 : i32
    %11 = arith.cmpi slt, %4, %c0_i32_5 : i32
    %12 = vector.broadcast %11 : i1 to vector<32x32xi1>
    %13 = vector.broadcast %12 : vector<32x32xi1> to vector<32x32xi1>
    %14 = arith.xori %10, %13 : vector<32x32xi1>
    %15 = arith.andi %14, %8 : vector<32x32xi1>
    %16 = vector.broadcast %4 : i32 to vector<32x32xi32>
    %17 = arith.addi %6, %16 : vector<32x32xi32>
    %18 = arith.select %15, %17, %6 : vector<32x32xi1>, vector<32x32xi32>
    %19 = tpu.iota {dimensions = array<i32: 1>} : vector<32x32xi32>
    %c2_i32_6 = arith.constant 2 : i32
    %c0_i32_7 = arith.constant 0 : i32
    %20 = arith.cmpi eq, %c2_i32_6, %c0_i32_7 : i32
    %c1_i32_8 = arith.constant 1 : i32
    %21 = arith.select %20, %c1_i32_8, %c2_i32_6 : i32
    %22 = vector.broadcast %21 : i32 to vector<32x32xi32>
    %23 = arith.remsi %19, %22 : vector<32x32xi32>
    %c0_i32_9 = arith.constant 0 : i32
    %24 = vector.broadcast %c0_i32_9 : i32 to vector<32x32xi32>
    %25 = arith.cmpi ne, %23, %24 : vector<32x32xi32>
    %c0_i32_10 = arith.constant 0 : i32
    %26 = vector.broadcast %c0_i32_10 : i32 to vector<32x32xi32>
    %27 = arith.cmpi slt, %23, %26 : vector<32x32xi32>
    %c0_i32_11 = arith.constant 0 : i32
    %28 = arith.cmpi slt, %21, %c0_i32_11 : i32
    %29 = vector.broadcast %28 : i1 to vector<32x32xi1>
    %30 = vector.broadcast %29 : vector<32x32xi1> to vector<32x32xi1>
    %31 = arith.xori %27, %30 : vector<32x32xi1>
    %32 = arith.andi %31, %25 : vector<32x32xi1>
    %33 = vector.broadcast %21 : i32 to vector<32x32xi32>
    %34 = arith.addi %23, %33 : vector<32x32xi32>
    %35 = arith.select %32, %34, %23 : vector<32x32xi1>, vector<32x32xi32>
    %36 = arith.cmpi eq, %18, %35 : vector<32x32xi32>
    %cst = arith.constant 0.000000e+00 : f32
    %cst_12 = arith.constant -1.000000e+30 : f32
    %37 = vector.broadcast %cst : f32 to vector<32x32xf32>
    %38 = vector.broadcast %cst_12 : f32 to vector<32x32xf32>
    %39 = arith.select %36, %37, %38 : vector<32x32xi1>, vector<32x32xf32>
    %c0_13 = arith.constant 0 : index
    %c0_14 = arith.constant 0 : index
    %c0_15 = arith.constant 0 : index
    %40 = vector.load %arg2[%c0_13, %c0_14, %c0_15] : memref<2x64x64xf32, #tpu.memory_space<vmem>>, vector<1x64x64xf32>
    %41 = vector.shape_cast %40 : vector<1x64x64xf32> to vector<64x64xf32>
    %c0_16 = arith.constant 0 : index
    %c0_17 = arith.constant 0 : index
    %c0_18 = arith.constant 0 : index
    %42 = vector.load %arg3[%c0_16, %c0_17, %c0_18] : memref<2x128x32xf32, #tpu.memory_space<vmem>>, vector<1x128x32xf32>
    %43 = vector.shape_cast %42 : vector<1x128x32xf32> to vector<128x32xf32>
    %c0_19 = arith.constant 0 : index
    %c0_20 = arith.constant 0 : index
    %c0_21 = arith.constant 0 : index
    %44 = vector.load %arg4[%c0_19, %c0_20, %c0_21] : memref<2x16x64xf32, #tpu.memory_space<vmem>>, vector<1x16x64xf32>
    %45 = vector.shape_cast %44 : vector<1x16x64xf32> to vector<16x64xf32>
    %46 = vector.extract_strided_slice %41 {offsets = [0, 0], sizes = [32, 64], strides = [1, 1]} : vector<64x64xf32> to vector<32x64xf32>
    %47 = vector.extract_strided_slice %41 {offsets = [32, 0], sizes = [32, 64], strides = [1, 1]} : vector<64x64xf32> to vector<32x64xf32>
    %48 = vector.extract_strided_slice %43 {offsets = [0, 0], sizes = [32, 32], strides = [1, 1]} : vector<128x32xf32> to vector<32x32xf32>
    %49 = vector.extract_strided_slice %43 {offsets = [32, 0], sizes = [32, 32], strides = [1, 1]} : vector<128x32xf32> to vector<32x32xf32>
    %50 = vector.extract_strided_slice %43 {offsets = [64, 0], sizes = [64, 32], strides = [1, 1]} : vector<128x32xf32> to vector<64x32xf32>
    %51 = vector.extract_strided_slice %45 {offsets = [0, 0], sizes = [1, 64], strides = [1, 1]} : vector<16x64xf32> to vector<1x64xf32>
    %52 = vector.extract_strided_slice %45 {offsets = [1, 0], sizes = [1, 64], strides = [1, 1]} : vector<16x64xf32> to vector<1x64xf32>
    %53 = vector.extract_strided_slice %45 {offsets = [2, 0], sizes = [1, 32], strides = [1, 1]} : vector<16x64xf32> to vector<1x32xf32>
    %54 = vector.extract_strided_slice %45 {offsets = [3, 0], sizes = [1, 32], strides = [1, 1]} : vector<16x64xf32> to vector<1x32xf32>
    %55 = vector.extract_strided_slice %45 {offsets = [4, 0], sizes = [1, 32], strides = [1, 1]} : vector<16x64xf32> to vector<1x32xf32>
    %56 = vector.extract_strided_slice %45 {offsets = [5, 0], sizes = [1, 32], strides = [1, 1]} : vector<16x64xf32> to vector<1x32xf32>
    %57 = vector.extract_strided_slice %45 {offsets = [6, 0], sizes = [1, 32], strides = [1, 1]} : vector<16x64xf32> to vector<1x32xf32>
    %58 = vector.extract_strided_slice %45 {offsets = [7, 0], sizes = [1, 32], strides = [1, 1]} : vector<16x64xf32> to vector<1x32xf32>
    %59 = vector.extract_strided_slice %45 {offsets = [8, 0], sizes = [1, 32], strides = [1, 1]} : vector<16x64xf32> to vector<1x32xf32>
    %60 = arith.addf %0, %1 : vector<32x32xf32>
    %cst_22 = arith.constant dense<0.000000e+00> : vector<32x64xf32>
    %61 = tpu.matmul %60, %46, %cst_22 {dimension_numbers = #tpu.dot_dimension_numbers<[1], [0], [0], [1], [0, 0, 1, 1], [], []>} : vector<32x32xf32>, vector<32x64xf32>, vector<32x64xf32> -> vector<32x64xf32>
    %62 = vector.broadcast %51 : vector<1x64xf32> to vector<32x64xf32>
    %63 = arith.addf %61, %62 : vector<32x64xf32>
    %cst_23 = arith.constant dense<0.000000e+00> : vector<32x32xf32>
    %64 = tpu.matmul %0, %48, %cst_23 {dimension_numbers = #tpu.dot_dimension_numbers<[1], [0], [0], [1], [0, 0, 1, 1], [], []>} : vector<32x32xf32>, vector<32x32xf32>, vector<32x32xf32> -> vector<32x32xf32>
    %65 = vector.broadcast %53 : vector<1x32xf32> to vector<32x32xf32>
    %66 = arith.addf %64, %65 : vector<32x32xf32>
    %67 = vector.shape_cast %54 : vector<1x32xf32> to vector<1x32xf32>
    %68 = vector.broadcast %67 : vector<1x32xf32> to vector<32x32xf32>
    %69 = vector.extract_strided_slice %63 {offsets = [0, 0], sizes = [32, 8], strides = [1, 1]} : vector<32x64xf32> to vector<32x8xf32>
    %70 = vector.extract_strided_slice %63 {offsets = [0, 32], sizes = [32, 8], strides = [1, 1]} : vector<32x64xf32> to vector<32x8xf32>
    %71 = vector.extract_strided_slice %66 {offsets = [0, 0], sizes = [32, 8], strides = [1, 1]} : vector<32x32xf32> to vector<32x8xf32>
    %72 = tpu.transpose %70, [1, 0] : vector<32x8xf32> -> vector<8x32xf32>
    %cst_24 = arith.constant dense<0.000000e+00> : vector<32x32xf32>
    %73 = tpu.matmul %69, %72, %cst_24 {dimension_numbers = #tpu.dot_dimension_numbers<[1], [0], [0], [1], [0, 0, 1, 1], [], []>} : vector<32x8xf32>, vector<8x32xf32>, vector<32x32xf32> -> vector<32x32xf32>
    %74 = arith.addf %73, %39 : vector<32x32xf32>
    %cst_25 = arith.constant dense<0xFF800000> : vector<32xf32>
    %75 = vector.multi_reduction <maximumf>, %74, %cst_25 [1] : vector<32x32xf32> to vector<32xf32>
    %76 = vector.shape_cast %75 : vector<32xf32> to vector<32x1xf32>
    %77 = vector.broadcast %76 : vector<32x1xf32> to vector<32x32xf32>
    %78 = arith.subf %74, %77 : vector<32x32xf32>
    %79 = math.exp %78 : vector<32x32xf32>
    %cst_26 = arith.constant dense<0.000000e+00> : vector<32xf32>
    %80 = vector.multi_reduction <add>, %79, %cst_26 [1] : vector<32x32xf32> to vector<32xf32>
    %81 = vector.shape_cast %80 : vector<32xf32> to vector<32x1xf32>
    %82 = tpu.reciprocal %81 {approx = true} : vector<32x1xf32> -> vector<32x1xf32>
    %83 = vector.broadcast %82 : vector<32x1xf32> to vector<32x32xf32>
    %84 = arith.mulf %79, %83 : vector<32x32xf32>
    %cst_27 = arith.constant dense<0.000000e+00> : vector<32x8xf32>
    %85 = tpu.matmul %84, %71, %cst_27 {dimension_numbers = #tpu.dot_dimension_numbers<[1], [0], [0], [1], [0, 0, 1, 1], [], []>} : vector<32x32xf32>, vector<32x8xf32>, vector<32x8xf32> -> vector<32x8xf32>
    %86 = vector.extract_strided_slice %49 {offsets = [0, 0], sizes = [8, 32], strides = [1, 1]} : vector<32x32xf32> to vector<8x32xf32>
    %cst_28 = arith.constant dense<0.000000e+00> : vector<32x32xf32>
    %87 = tpu.matmul %85, %86, %cst_28 {dimension_numbers = #tpu.dot_dimension_numbers<[1], [0], [0], [1], [0, 0, 1, 1], [], []>} : vector<32x8xf32>, vector<8x32xf32>, vector<32x32xf32> -> vector<32x32xf32>
    %88 = arith.addf %68, %87 : vector<32x32xf32>
    %89 = vector.extract_strided_slice %63 {offsets = [0, 8], sizes = [32, 8], strides = [1, 1]} : vector<32x64xf32> to vector<32x8xf32>
    %90 = vector.extract_strided_slice %63 {offsets = [0, 40], sizes = [32, 8], strides = [1, 1]} : vector<32x64xf32> to vector<32x8xf32>
    %91 = vector.extract_strided_slice %66 {offsets = [0, 8], sizes = [32, 8], strides = [1, 1]} : vector<32x32xf32> to vector<32x8xf32>
    %92 = tpu.transpose %90, [1, 0] : vector<32x8xf32> -> vector<8x32xf32>
    %cst_29 = arith.constant dense<0.000000e+00> : vector<32x32xf32>
    %93 = tpu.matmul %89, %92, %cst_29 {dimension_numbers = #tpu.dot_dimension_numbers<[1], [0], [0], [1], [0, 0, 1, 1], [], []>} : vector<32x8xf32>, vector<8x32xf32>, vector<32x32xf32> -> vector<32x32xf32>
    %94 = arith.addf %93, %39 : vector<32x32xf32>
    %cst_30 = arith.constant dense<0xFF800000> : vector<32xf32>
    %95 = vector.multi_reduction <maximumf>, %94, %cst_30 [1] : vector<32x32xf32> to vector<32xf32>
    %96 = vector.shape_cast %95 : vector<32xf32> to vector<32x1xf32>
    %97 = vector.broadcast %96 : vector<32x1xf32> to vector<32x32xf32>
    %98 = arith.subf %94, %97 : vector<32x32xf32>
    %99 = math.exp %98 : vector<32x32xf32>
    %cst_31 = arith.constant dense<0.000000e+00> : vector<32xf32>
    %100 = vector.multi_reduction <add>, %99, %cst_31 [1] : vector<32x32xf32> to vector<32xf32>
    %101 = vector.shape_cast %100 : vector<32xf32> to vector<32x1xf32>
    %102 = tpu.reciprocal %101 {approx = true} : vector<32x1xf32> -> vector<32x1xf32>
    %103 = vector.broadcast %102 : vector<32x1xf32> to vector<32x32xf32>
    %104 = arith.mulf %99, %103 : vector<32x32xf32>
    %cst_32 = arith.constant dense<0.000000e+00> : vector<32x8xf32>
    %105 = tpu.matmul %104, %91, %cst_32 {dimension_numbers = #tpu.dot_dimension_numbers<[1], [0], [0], [1], [0, 0, 1, 1], [], []>} : vector<32x32xf32>, vector<32x8xf32>, vector<32x8xf32> -> vector<32x8xf32>
    %106 = vector.extract_strided_slice %49 {offsets = [8, 0], sizes = [8, 32], strides = [1, 1]} : vector<32x32xf32> to vector<8x32xf32>
    %cst_33 = arith.constant dense<0.000000e+00> : vector<32x32xf32>
    %107 = tpu.matmul %105, %106, %cst_33 {dimension_numbers = #tpu.dot_dimension_numbers<[1], [0], [0], [1], [0, 0, 1, 1], [], []>} : vector<32x8xf32>, vector<8x32xf32>, vector<32x32xf32> -> vector<32x32xf32>
    %108 = arith.addf %88, %107 : vector<32x32xf32>
    %109 = vector.extract_strided_slice %63 {offsets = [0, 16], sizes = [32, 8], strides = [1, 1]} : vector<32x64xf32> to vector<32x8xf32>
    %110 = vector.extract_strided_slice %63 {offsets = [0, 48], sizes = [32, 8], strides = [1, 1]} : vector<32x64xf32> to vector<32x8xf32>
    %111 = vector.extract_strided_slice %66 {offsets = [0, 16], sizes = [32, 8], strides = [1, 1]} : vector<32x32xf32> to vector<32x8xf32>
    %112 = tpu.transpose %110, [1, 0] : vector<32x8xf32> -> vector<8x32xf32>
    %cst_34 = arith.constant dense<0.000000e+00> : vector<32x32xf32>
    %113 = tpu.matmul %109, %112, %cst_34 {dimension_numbers = #tpu.dot_dimension_numbers<[1], [0], [0], [1], [0, 0, 1, 1], [], []>} : vector<32x8xf32>, vector<8x32xf32>, vector<32x32xf32> -> vector<32x32xf32>
    %114 = arith.addf %113, %39 : vector<32x32xf32>
    %cst_35 = arith.constant dense<0xFF800000> : vector<32xf32>
    %115 = vector.multi_reduction <maximumf>, %114, %cst_35 [1] : vector<32x32xf32> to vector<32xf32>
    %116 = vector.shape_cast %115 : vector<32xf32> to vector<32x1xf32>
    %117 = vector.broadcast %116 : vector<32x1xf32> to vector<32x32xf32>
    %118 = arith.subf %114, %117 : vector<32x32xf32>
    %119 = math.exp %118 : vector<32x32xf32>
    %cst_36 = arith.constant dense<0.000000e+00> : vector<32xf32>
    %120 = vector.multi_reduction <add>, %119, %cst_36 [1] : vector<32x32xf32> to vector<32xf32>
    %121 = vector.shape_cast %120 : vector<32xf32> to vector<32x1xf32>
    %122 = tpu.reciprocal %121 {approx = true} : vector<32x1xf32> -> vector<32x1xf32>
    %123 = vector.broadcast %122 : vector<32x1xf32> to vector<32x32xf32>
    %124 = arith.mulf %119, %123 : vector<32x32xf32>
    %cst_37 = arith.constant dense<0.000000e+00> : vector<32x8xf32>
    %125 = tpu.matmul %124, %111, %cst_37 {dimension_numbers = #tpu.dot_dimension_numbers<[1], [0], [0], [1], [0, 0, 1, 1], [], []>} : vector<32x32xf32>, vector<32x8xf32>, vector<32x8xf32> -> vector<32x8xf32>
    %126 = vector.extract_strided_slice %49 {offsets = [16, 0], sizes = [8, 32], strides = [1, 1]} : vector<32x32xf32> to vector<8x32xf32>
    %cst_38 = arith.constant dense<0.000000e+00> : vector<32x32xf32>
    %127 = tpu.matmul %125, %126, %cst_38 {dimension_numbers = #tpu.dot_dimension_numbers<[1], [0], [0], [1], [0, 0, 1, 1], [], []>} : vector<32x8xf32>, vector<8x32xf32>, vector<32x32xf32> -> vector<32x32xf32>
    %128 = arith.addf %108, %127 : vector<32x32xf32>
    %129 = vector.extract_strided_slice %63 {offsets = [0, 24], sizes = [32, 8], strides = [1, 1]} : vector<32x64xf32> to vector<32x8xf32>
    %130 = vector.extract_strided_slice %63 {offsets = [0, 56], sizes = [32, 8], strides = [1, 1]} : vector<32x64xf32> to vector<32x8xf32>
    %131 = vector.extract_strided_slice %66 {offsets = [0, 24], sizes = [32, 8], strides = [1, 1]} : vector<32x32xf32> to vector<32x8xf32>
    %132 = tpu.transpose %130, [1, 0] : vector<32x8xf32> -> vector<8x32xf32>
    %cst_39 = arith.constant dense<0.000000e+00> : vector<32x32xf32>
    %133 = tpu.matmul %129, %132, %cst_39 {dimension_numbers = #tpu.dot_dimension_numbers<[1], [0], [0], [1], [0, 0, 1, 1], [], []>} : vector<32x8xf32>, vector<8x32xf32>, vector<32x32xf32> -> vector<32x32xf32>
    %134 = arith.addf %133, %39 : vector<32x32xf32>
    %cst_40 = arith.constant dense<0xFF800000> : vector<32xf32>
    %135 = vector.multi_reduction <maximumf>, %134, %cst_40 [1] : vector<32x32xf32> to vector<32xf32>
    %136 = vector.shape_cast %135 : vector<32xf32> to vector<32x1xf32>
    %137 = vector.broadcast %136 : vector<32x1xf32> to vector<32x32xf32>
    %138 = arith.subf %134, %137 : vector<32x32xf32>
    %139 = math.exp %138 : vector<32x32xf32>
    %cst_41 = arith.constant dense<0.000000e+00> : vector<32xf32>
    %140 = vector.multi_reduction <add>, %139, %cst_41 [1] : vector<32x32xf32> to vector<32xf32>
    %141 = vector.shape_cast %140 : vector<32xf32> to vector<32x1xf32>
    %142 = tpu.reciprocal %141 {approx = true} : vector<32x1xf32> -> vector<32x1xf32>
    %143 = vector.broadcast %142 : vector<32x1xf32> to vector<32x32xf32>
    %144 = arith.mulf %139, %143 : vector<32x32xf32>
    %cst_42 = arith.constant dense<0.000000e+00> : vector<32x8xf32>
    %145 = tpu.matmul %144, %131, %cst_42 {dimension_numbers = #tpu.dot_dimension_numbers<[1], [0], [0], [1], [0, 0, 1, 1], [], []>} : vector<32x32xf32>, vector<32x8xf32>, vector<32x8xf32> -> vector<32x8xf32>
    %146 = vector.extract_strided_slice %49 {offsets = [24, 0], sizes = [8, 32], strides = [1, 1]} : vector<32x32xf32> to vector<8x32xf32>
    %cst_43 = arith.constant dense<0.000000e+00> : vector<32x32xf32>
    %147 = tpu.matmul %145, %146, %cst_43 {dimension_numbers = #tpu.dot_dimension_numbers<[1], [0], [0], [1], [0, 0, 1, 1], [], []>} : vector<32x8xf32>, vector<8x32xf32>, vector<32x32xf32> -> vector<32x32xf32>
    %148 = arith.addf %128, %147 : vector<32x32xf32>
    %149 = arith.addf %0, %148 : vector<32x32xf32>
    %cst_44 = arith.constant dense<0.000000e+00> : vector<32xf32>
    %150 = vector.multi_reduction <add>, %149, %cst_44 [1] : vector<32x32xf32> to vector<32xf32>
    %151 = vector.shape_cast %150 : vector<32xf32> to vector<32x1xf32>
    %cst_45 = arith.constant 3.200000e+01 : f32
    %152 = vector.broadcast %cst_45 : f32 to vector<32x1xf32>
    %153 = arith.divf %151, %152 : vector<32x1xf32>
    %154 = vector.broadcast %153 : vector<32x1xf32> to vector<32x32xf32>
    %155 = arith.subf %149, %154 : vector<32x32xf32>
    %156 = arith.mulf %155, %155 : vector<32x32xf32>
    %cst_46 = arith.constant dense<0.000000e+00> : vector<32xf32>
    %157 = vector.multi_reduction <add>, %156, %cst_46 [1] : vector<32x32xf32> to vector<32xf32>
    %158 = vector.shape_cast %157 : vector<32xf32> to vector<32x1xf32>
    %cst_47 = arith.constant 3.200000e+01 : f32
    %159 = vector.broadcast %cst_47 : f32 to vector<32x1xf32>
    %160 = arith.divf %158, %159 : vector<32x1xf32>
    %161 = vector.broadcast %153 : vector<32x1xf32> to vector<32x32xf32>
    %162 = arith.subf %149, %161 : vector<32x32xf32>
    %cst_48 = arith.constant 9.99999974E-6 : f32
    %163 = vector.broadcast %cst_48 : f32 to vector<32x1xf32>
    %164 = arith.addf %160, %163 : vector<32x1xf32>
    %165 = math.rsqrt %164 : vector<32x1xf32>
    %166 = vector.broadcast %165 : vector<32x1xf32> to vector<32x32xf32>
    %167 = arith.mulf %162, %166 : vector<32x32xf32>
    %168 = vector.broadcast %55 : vector<1x32xf32> to vector<32x32xf32>
    %169 = arith.mulf %167, %168 : vector<32x32xf32>
    %170 = vector.broadcast %56 : vector<1x32xf32> to vector<32x32xf32>
    %171 = arith.addf %169, %170 : vector<32x32xf32>
    %cst_49 = arith.constant dense<0.000000e+00> : vector<32x64xf32>
    %172 = tpu.matmul %171, %47, %cst_49 {dimension_numbers = #tpu.dot_dimension_numbers<[1], [0], [0], [1], [0, 0, 1, 1], [], []>} : vector<32x32xf32>, vector<32x64xf32>, vector<32x64xf32> -> vector<32x64xf32>
    %173 = vector.broadcast %52 : vector<1x64xf32> to vector<32x64xf32>
    %174 = arith.addf %172, %173 : vector<32x64xf32>
    %cst_50 = arith.constant 0.000000e+00 : f32
    %175 = vector.broadcast %cst_50 : f32 to vector<32x64xf32>
    %176 = arith.maximumf %174, %175 : vector<32x64xf32>
    %cst_51 = arith.constant dense<0.000000e+00> : vector<32x32xf32>
    %177 = tpu.matmul %176, %50, %cst_51 {dimension_numbers = #tpu.dot_dimension_numbers<[1], [0], [0], [1], [0, 0, 1, 1], [], []>} : vector<32x64xf32>, vector<64x32xf32>, vector<32x32xf32> -> vector<32x32xf32>
    %178 = vector.broadcast %57 : vector<1x32xf32> to vector<32x32xf32>
    %179 = arith.addf %177, %178 : vector<32x32xf32>
    %180 = arith.addf %171, %179 : vector<32x32xf32>
    %cst_52 = arith.constant dense<0.000000e+00> : vector<32xf32>
    %181 = vector.multi_reduction <add>, %180, %cst_52 [1] : vector<32x32xf32> to vector<32xf32>
    %182 = vector.shape_cast %181 : vector<32xf32> to vector<32x1xf32>
    %cst_53 = arith.constant 3.200000e+01 : f32
    %183 = vector.broadcast %cst_53 : f32 to vector<32x1xf32>
    %184 = arith.divf %182, %183 : vector<32x1xf32>
    %185 = vector.broadcast %184 : vector<32x1xf32> to vector<32x32xf32>
    %186 = arith.subf %180, %185 : vector<32x32xf32>
    %187 = arith.mulf %186, %186 : vector<32x32xf32>
    %cst_54 = arith.constant dense<0.000000e+00> : vector<32xf32>
    %188 = vector.multi_reduction <add>, %187, %cst_54 [1] : vector<32x32xf32> to vector<32xf32>
    %189 = vector.shape_cast %188 : vector<32xf32> to vector<32x1xf32>
    %cst_55 = arith.constant 3.200000e+01 : f32
    %190 = vector.broadcast %cst_55 : f32 to vector<32x1xf32>
    %191 = arith.divf %189, %190 : vector<32x1xf32>
    %192 = vector.broadcast %184 : vector<32x1xf32> to vector<32x32xf32>
    %193 = arith.subf %180, %192 : vector<32x32xf32>
    %cst_56 = arith.constant 9.99999974E-6 : f32
    %194 = vector.broadcast %cst_56 : f32 to vector<32x1xf32>
    %195 = arith.addf %191, %194 : vector<32x1xf32>
    %196 = math.rsqrt %195 : vector<32x1xf32>
    %197 = vector.broadcast %196 : vector<32x1xf32> to vector<32x32xf32>
    %198 = arith.mulf %193, %197 : vector<32x32xf32>
    %199 = vector.broadcast %58 : vector<1x32xf32> to vector<32x32xf32>
    %200 = arith.mulf %198, %199 : vector<32x32xf32>
    %201 = vector.broadcast %59 : vector<1x32xf32> to vector<32x32xf32>
    %202 = arith.addf %200, %201 : vector<32x32xf32>
    %c1 = arith.constant 1 : index
    %c0_57 = arith.constant 0 : index
    %c0_58 = arith.constant 0 : index
    %203 = vector.load %arg2[%c1, %c0_57, %c0_58] : memref<2x64x64xf32, #tpu.memory_space<vmem>>, vector<1x64x64xf32>
    %204 = vector.shape_cast %203 : vector<1x64x64xf32> to vector<64x64xf32>
    %c1_59 = arith.constant 1 : index
    %c0_60 = arith.constant 0 : index
    %c0_61 = arith.constant 0 : index
    %205 = vector.load %arg3[%c1_59, %c0_60, %c0_61] : memref<2x128x32xf32, #tpu.memory_space<vmem>>, vector<1x128x32xf32>
    %206 = vector.shape_cast %205 : vector<1x128x32xf32> to vector<128x32xf32>
    %c1_62 = arith.constant 1 : index
    %c0_63 = arith.constant 0 : index
    %c0_64 = arith.constant 0 : index
    %207 = vector.load %arg4[%c1_62, %c0_63, %c0_64] : memref<2x16x64xf32, #tpu.memory_space<vmem>>, vector<1x16x64xf32>
    %208 = vector.shape_cast %207 : vector<1x16x64xf32> to vector<16x64xf32>
    %209 = vector.extract_strided_slice %204 {offsets = [0, 0], sizes = [32, 64], strides = [1, 1]} : vector<64x64xf32> to vector<32x64xf32>
    %210 = vector.extract_strided_slice %204 {offsets = [32, 0], sizes = [32, 64], strides = [1, 1]} : vector<64x64xf32> to vector<32x64xf32>
    %211 = vector.extract_strided_slice %206 {offsets = [0, 0], sizes = [32, 32], strides = [1, 1]} : vector<128x32xf32> to vector<32x32xf32>
    %212 = vector.extract_strided_slice %206 {offsets = [32, 0], sizes = [32, 32], strides = [1, 1]} : vector<128x32xf32> to vector<32x32xf32>
    %213 = vector.extract_strided_slice %206 {offsets = [64, 0], sizes = [64, 32], strides = [1, 1]} : vector<128x32xf32> to vector<64x32xf32>
    %214 = vector.extract_strided_slice %208 {offsets = [0, 0], sizes = [1, 64], strides = [1, 1]} : vector<16x64xf32> to vector<1x64xf32>
    %215 = vector.extract_strided_slice %208 {offsets = [1, 0], sizes = [1, 64], strides = [1, 1]} : vector<16x64xf32> to vector<1x64xf32>
    %216 = vector.extract_strided_slice %208 {offsets = [2, 0], sizes = [1, 32], strides = [1, 1]} : vector<16x64xf32> to vector<1x32xf32>
    %217 = vector.extract_strided_slice %208 {offsets = [3, 0], sizes = [1, 32], strides = [1, 1]} : vector<16x64xf32> to vector<1x32xf32>
    %218 = vector.extract_strided_slice %208 {offsets = [4, 0], sizes = [1, 32], strides = [1, 1]} : vector<16x64xf32> to vector<1x32xf32>
    %219 = vector.extract_strided_slice %208 {offsets = [5, 0], sizes = [1, 32], strides = [1, 1]} : vector<16x64xf32> to vector<1x32xf32>
    %220 = vector.extract_strided_slice %208 {offsets = [6, 0], sizes = [1, 32], strides = [1, 1]} : vector<16x64xf32> to vector<1x32xf32>
    %221 = vector.extract_strided_slice %208 {offsets = [7, 0], sizes = [1, 32], strides = [1, 1]} : vector<16x64xf32> to vector<1x32xf32>
    %222 = vector.extract_strided_slice %208 {offsets = [8, 0], sizes = [1, 32], strides = [1, 1]} : vector<16x64xf32> to vector<1x32xf32>
    %223 = arith.addf %202, %1 : vector<32x32xf32>
    %cst_65 = arith.constant dense<0.000000e+00> : vector<32x64xf32>
    %224 = tpu.matmul %223, %209, %cst_65 {dimension_numbers = #tpu.dot_dimension_numbers<[1], [0], [0], [1], [0, 0, 1, 1], [], []>} : vector<32x32xf32>, vector<32x64xf32>, vector<32x64xf32> -> vector<32x64xf32>
    %225 = vector.broadcast %214 : vector<1x64xf32> to vector<32x64xf32>
    %226 = arith.addf %224, %225 : vector<32x64xf32>
    %cst_66 = arith.constant dense<0.000000e+00> : vector<32x32xf32>
    %227 = tpu.matmul %202, %211, %cst_66 {dimension_numbers = #tpu.dot_dimension_numbers<[1], [0], [0], [1], [0, 0, 1, 1], [], []>} : vector<32x32xf32>, vector<32x32xf32>, vector<32x32xf32> -> vector<32x32xf32>
    %228 = vector.broadcast %216 : vector<1x32xf32> to vector<32x32xf32>
    %229 = arith.addf %227, %228 : vector<32x32xf32>
    %230 = vector.shape_cast %217 : vector<1x32xf32> to vector<1x32xf32>
    %231 = vector.broadcast %230 : vector<1x32xf32> to vector<32x32xf32>
    %232 = vector.extract_strided_slice %226 {offsets = [0, 0], sizes = [32, 8], strides = [1, 1]} : vector<32x64xf32> to vector<32x8xf32>
    %233 = vector.extract_strided_slice %226 {offsets = [0, 32], sizes = [32, 8], strides = [1, 1]} : vector<32x64xf32> to vector<32x8xf32>
    %234 = vector.extract_strided_slice %229 {offsets = [0, 0], sizes = [32, 8], strides = [1, 1]} : vector<32x32xf32> to vector<32x8xf32>
    %235 = tpu.transpose %233, [1, 0] : vector<32x8xf32> -> vector<8x32xf32>
    %cst_67 = arith.constant dense<0.000000e+00> : vector<32x32xf32>
    %236 = tpu.matmul %232, %235, %cst_67 {dimension_numbers = #tpu.dot_dimension_numbers<[1], [0], [0], [1], [0, 0, 1, 1], [], []>} : vector<32x8xf32>, vector<8x32xf32>, vector<32x32xf32> -> vector<32x32xf32>
    %237 = arith.addf %236, %39 : vector<32x32xf32>
    %cst_68 = arith.constant dense<0xFF800000> : vector<32xf32>
    %238 = vector.multi_reduction <maximumf>, %237, %cst_68 [1] : vector<32x32xf32> to vector<32xf32>
    %239 = vector.shape_cast %238 : vector<32xf32> to vector<32x1xf32>
    %240 = vector.broadcast %239 : vector<32x1xf32> to vector<32x32xf32>
    %241 = arith.subf %237, %240 : vector<32x32xf32>
    %242 = math.exp %241 : vector<32x32xf32>
    %cst_69 = arith.constant dense<0.000000e+00> : vector<32xf32>
    %243 = vector.multi_reduction <add>, %242, %cst_69 [1] : vector<32x32xf32> to vector<32xf32>
    %244 = vector.shape_cast %243 : vector<32xf32> to vector<32x1xf32>
    %245 = tpu.reciprocal %244 {approx = true} : vector<32x1xf32> -> vector<32x1xf32>
    %246 = vector.broadcast %245 : vector<32x1xf32> to vector<32x32xf32>
    %247 = arith.mulf %242, %246 : vector<32x32xf32>
    %cst_70 = arith.constant dense<0.000000e+00> : vector<32x8xf32>
    %248 = tpu.matmul %247, %234, %cst_70 {dimension_numbers = #tpu.dot_dimension_numbers<[1], [0], [0], [1], [0, 0, 1, 1], [], []>} : vector<32x32xf32>, vector<32x8xf32>, vector<32x8xf32> -> vector<32x8xf32>
    %249 = vector.extract_strided_slice %212 {offsets = [0, 0], sizes = [8, 32], strides = [1, 1]} : vector<32x32xf32> to vector<8x32xf32>
    %cst_71 = arith.constant dense<0.000000e+00> : vector<32x32xf32>
    %250 = tpu.matmul %248, %249, %cst_71 {dimension_numbers = #tpu.dot_dimension_numbers<[1], [0], [0], [1], [0, 0, 1, 1], [], []>} : vector<32x8xf32>, vector<8x32xf32>, vector<32x32xf32> -> vector<32x32xf32>
    %251 = arith.addf %231, %250 : vector<32x32xf32>
    %252 = vector.extract_strided_slice %226 {offsets = [0, 8], sizes = [32, 8], strides = [1, 1]} : vector<32x64xf32> to vector<32x8xf32>
    %253 = vector.extract_strided_slice %226 {offsets = [0, 40], sizes = [32, 8], strides = [1, 1]} : vector<32x64xf32> to vector<32x8xf32>
    %254 = vector.extract_strided_slice %229 {offsets = [0, 8], sizes = [32, 8], strides = [1, 1]} : vector<32x32xf32> to vector<32x8xf32>
    %255 = tpu.transpose %253, [1, 0] : vector<32x8xf32> -> vector<8x32xf32>
    %cst_72 = arith.constant dense<0.000000e+00> : vector<32x32xf32>
    %256 = tpu.matmul %252, %255, %cst_72 {dimension_numbers = #tpu.dot_dimension_numbers<[1], [0], [0], [1], [0, 0, 1, 1], [], []>} : vector<32x8xf32>, vector<8x32xf32>, vector<32x32xf32> -> vector<32x32xf32>
    %257 = arith.addf %256, %39 : vector<32x32xf32>
    %cst_73 = arith.constant dense<0xFF800000> : vector<32xf32>
    %258 = vector.multi_reduction <maximumf>, %257, %cst_73 [1] : vector<32x32xf32> to vector<32xf32>
    %259 = vector.shape_cast %258 : vector<32xf32> to vector<32x1xf32>
    %260 = vector.broadcast %259 : vector<32x1xf32> to vector<32x32xf32>
    %261 = arith.subf %257, %260 : vector<32x32xf32>
    %262 = math.exp %261 : vector<32x32xf32>
    %cst_74 = arith.constant dense<0.000000e+00> : vector<32xf32>
    %263 = vector.multi_reduction <add>, %262, %cst_74 [1] : vector<32x32xf32> to vector<32xf32>
    %264 = vector.shape_cast %263 : vector<32xf32> to vector<32x1xf32>
    %265 = tpu.reciprocal %264 {approx = true} : vector<32x1xf32> -> vector<32x1xf32>
    %266 = vector.broadcast %265 : vector<32x1xf32> to vector<32x32xf32>
    %267 = arith.mulf %262, %266 : vector<32x32xf32>
    %cst_75 = arith.constant dense<0.000000e+00> : vector<32x8xf32>
    %268 = tpu.matmul %267, %254, %cst_75 {dimension_numbers = #tpu.dot_dimension_numbers<[1], [0], [0], [1], [0, 0, 1, 1], [], []>} : vector<32x32xf32>, vector<32x8xf32>, vector<32x8xf32> -> vector<32x8xf32>
    %269 = vector.extract_strided_slice %212 {offsets = [8, 0], sizes = [8, 32], strides = [1, 1]} : vector<32x32xf32> to vector<8x32xf32>
    %cst_76 = arith.constant dense<0.000000e+00> : vector<32x32xf32>
    %270 = tpu.matmul %268, %269, %cst_76 {dimension_numbers = #tpu.dot_dimension_numbers<[1], [0], [0], [1], [0, 0, 1, 1], [], []>} : vector<32x8xf32>, vector<8x32xf32>, vector<32x32xf32> -> vector<32x32xf32>
    %271 = arith.addf %251, %270 : vector<32x32xf32>
    %272 = vector.extract_strided_slice %226 {offsets = [0, 16], sizes = [32, 8], strides = [1, 1]} : vector<32x64xf32> to vector<32x8xf32>
    %273 = vector.extract_strided_slice %226 {offsets = [0, 48], sizes = [32, 8], strides = [1, 1]} : vector<32x64xf32> to vector<32x8xf32>
    %274 = vector.extract_strided_slice %229 {offsets = [0, 16], sizes = [32, 8], strides = [1, 1]} : vector<32x32xf32> to vector<32x8xf32>
    %275 = tpu.transpose %273, [1, 0] : vector<32x8xf32> -> vector<8x32xf32>
    %cst_77 = arith.constant dense<0.000000e+00> : vector<32x32xf32>
    %276 = tpu.matmul %272, %275, %cst_77 {dimension_numbers = #tpu.dot_dimension_numbers<[1], [0], [0], [1], [0, 0, 1, 1], [], []>} : vector<32x8xf32>, vector<8x32xf32>, vector<32x32xf32> -> vector<32x32xf32>
    %277 = arith.addf %276, %39 : vector<32x32xf32>
    %cst_78 = arith.constant dense<0xFF800000> : vector<32xf32>
    %278 = vector.multi_reduction <maximumf>, %277, %cst_78 [1] : vector<32x32xf32> to vector<32xf32>
    %279 = vector.shape_cast %278 : vector<32xf32> to vector<32x1xf32>
    %280 = vector.broadcast %279 : vector<32x1xf32> to vector<32x32xf32>
    %281 = arith.subf %277, %280 : vector<32x32xf32>
    %282 = math.exp %281 : vector<32x32xf32>
    %cst_79 = arith.constant dense<0.000000e+00> : vector<32xf32>
    %283 = vector.multi_reduction <add>, %282, %cst_79 [1] : vector<32x32xf32> to vector<32xf32>
    %284 = vector.shape_cast %283 : vector<32xf32> to vector<32x1xf32>
    %285 = tpu.reciprocal %284 {approx = true} : vector<32x1xf32> -> vector<32x1xf32>
    %286 = vector.broadcast %285 : vector<32x1xf32> to vector<32x32xf32>
    %287 = arith.mulf %282, %286 : vector<32x32xf32>
    %cst_80 = arith.constant dense<0.000000e+00> : vector<32x8xf32>
    %288 = tpu.matmul %287, %274, %cst_80 {dimension_numbers = #tpu.dot_dimension_numbers<[1], [0], [0], [1], [0, 0, 1, 1], [], []>} : vector<32x32xf32>, vector<32x8xf32>, vector<32x8xf32> -> vector<32x8xf32>
    %289 = vector.extract_strided_slice %212 {offsets = [16, 0], sizes = [8, 32], strides = [1, 1]} : vector<32x32xf32> to vector<8x32xf32>
    %cst_81 = arith.constant dense<0.000000e+00> : vector<32x32xf32>
    %290 = tpu.matmul %288, %289, %cst_81 {dimension_numbers = #tpu.dot_dimension_numbers<[1], [0], [0], [1], [0, 0, 1, 1], [], []>} : vector<32x8xf32>, vector<8x32xf32>, vector<32x32xf32> -> vector<32x32xf32>
    %291 = arith.addf %271, %290 : vector<32x32xf32>
    %292 = vector.extract_strided_slice %226 {offsets = [0, 24], sizes = [32, 8], strides = [1, 1]} : vector<32x64xf32> to vector<32x8xf32>
    %293 = vector.extract_strided_slice %226 {offsets = [0, 56], sizes = [32, 8], strides = [1, 1]} : vector<32x64xf32> to vector<32x8xf32>
    %294 = vector.extract_strided_slice %229 {offsets = [0, 24], sizes = [32, 8], strides = [1, 1]} : vector<32x32xf32> to vector<32x8xf32>
    %295 = tpu.transpose %293, [1, 0] : vector<32x8xf32> -> vector<8x32xf32>
    %cst_82 = arith.constant dense<0.000000e+00> : vector<32x32xf32>
    %296 = tpu.matmul %292, %295, %cst_82 {dimension_numbers = #tpu.dot_dimension_numbers<[1], [0], [0], [1], [0, 0, 1, 1], [], []>} : vector<32x8xf32>, vector<8x32xf32>, vector<32x32xf32> -> vector<32x32xf32>
    %297 = arith.addf %296, %39 : vector<32x32xf32>
    %cst_83 = arith.constant dense<0xFF800000> : vector<32xf32>
    %298 = vector.multi_reduction <maximumf>, %297, %cst_83 [1] : vector<32x32xf32> to vector<32xf32>
    %299 = vector.shape_cast %298 : vector<32xf32> to vector<32x1xf32>
    %300 = vector.broadcast %299 : vector<32x1xf32> to vector<32x32xf32>
    %301 = arith.subf %297, %300 : vector<32x32xf32>
    %302 = math.exp %301 : vector<32x32xf32>
    %cst_84 = arith.constant dense<0.000000e+00> : vector<32xf32>
    %303 = vector.multi_reduction <add>, %302, %cst_84 [1] : vector<32x32xf32> to vector<32xf32>
    %304 = vector.shape_cast %303 : vector<32xf32> to vector<32x1xf32>
    %305 = tpu.reciprocal %304 {approx = true} : vector<32x1xf32> -> vector<32x1xf32>
    %306 = vector.broadcast %305 : vector<32x1xf32> to vector<32x32xf32>
    %307 = arith.mulf %302, %306 : vector<32x32xf32>
    %cst_85 = arith.constant dense<0.000000e+00> : vector<32x8xf32>
    %308 = tpu.matmul %307, %294, %cst_85 {dimension_numbers = #tpu.dot_dimension_numbers<[1], [0], [0], [1], [0, 0, 1, 1], [], []>} : vector<32x32xf32>, vector<32x8xf32>, vector<32x8xf32> -> vector<32x8xf32>
    %309 = vector.extract_strided_slice %212 {offsets = [24, 0], sizes = [8, 32], strides = [1, 1]} : vector<32x32xf32> to vector<8x32xf32>
    %cst_86 = arith.constant dense<0.000000e+00> : vector<32x32xf32>
    %310 = tpu.matmul %308, %309, %cst_86 {dimension_numbers = #tpu.dot_dimension_numbers<[1], [0], [0], [1], [0, 0, 1, 1], [], []>} : vector<32x8xf32>, vector<8x32xf32>, vector<32x32xf32> -> vector<32x32xf32>
    %311 = arith.addf %291, %310 : vector<32x32xf32>
    %312 = arith.addf %202, %311 : vector<32x32xf32>
    %cst_87 = arith.constant dense<0.000000e+00> : vector<32xf32>
    %313 = vector.multi_reduction <add>, %312, %cst_87 [1] : vector<32x32xf32> to vector<32xf32>
    %314 = vector.shape_cast %313 : vector<32xf32> to vector<32x1xf32>
    %cst_88 = arith.constant 3.200000e+01 : f32
    %315 = vector.broadcast %cst_88 : f32 to vector<32x1xf32>
    %316 = arith.divf %314, %315 : vector<32x1xf32>
    %317 = vector.broadcast %316 : vector<32x1xf32> to vector<32x32xf32>
    %318 = arith.subf %312, %317 : vector<32x32xf32>
    %319 = arith.mulf %318, %318 : vector<32x32xf32>
    %cst_89 = arith.constant dense<0.000000e+00> : vector<32xf32>
    %320 = vector.multi_reduction <add>, %319, %cst_89 [1] : vector<32x32xf32> to vector<32xf32>
    %321 = vector.shape_cast %320 : vector<32xf32> to vector<32x1xf32>
    %cst_90 = arith.constant 3.200000e+01 : f32
    %322 = vector.broadcast %cst_90 : f32 to vector<32x1xf32>
    %323 = arith.divf %321, %322 : vector<32x1xf32>
    %324 = vector.broadcast %316 : vector<32x1xf32> to vector<32x32xf32>
    %325 = arith.subf %312, %324 : vector<32x32xf32>
    %cst_91 = arith.constant 9.99999974E-6 : f32
    %326 = vector.broadcast %cst_91 : f32 to vector<32x1xf32>
    %327 = arith.addf %323, %326 : vector<32x1xf32>
    %328 = math.rsqrt %327 : vector<32x1xf32>
    %329 = vector.broadcast %328 : vector<32x1xf32> to vector<32x32xf32>
    %330 = arith.mulf %325, %329 : vector<32x32xf32>
    %331 = vector.broadcast %218 : vector<1x32xf32> to vector<32x32xf32>
    %332 = arith.mulf %330, %331 : vector<32x32xf32>
    %333 = vector.broadcast %219 : vector<1x32xf32> to vector<32x32xf32>
    %334 = arith.addf %332, %333 : vector<32x32xf32>
    %cst_92 = arith.constant dense<0.000000e+00> : vector<32x64xf32>
    %335 = tpu.matmul %334, %210, %cst_92 {dimension_numbers = #tpu.dot_dimension_numbers<[1], [0], [0], [1], [0, 0, 1, 1], [], []>} : vector<32x32xf32>, vector<32x64xf32>, vector<32x64xf32> -> vector<32x64xf32>
    %336 = vector.broadcast %215 : vector<1x64xf32> to vector<32x64xf32>
    %337 = arith.addf %335, %336 : vector<32x64xf32>
    %cst_93 = arith.constant 0.000000e+00 : f32
    %338 = vector.broadcast %cst_93 : f32 to vector<32x64xf32>
    %339 = arith.maximumf %337, %338 : vector<32x64xf32>
    %cst_94 = arith.constant dense<0.000000e+00> : vector<32x32xf32>
    %340 = tpu.matmul %339, %213, %cst_94 {dimension_numbers = #tpu.dot_dimension_numbers<[1], [0], [0], [1], [0, 0, 1, 1], [], []>} : vector<32x64xf32>, vector<64x32xf32>, vector<32x32xf32> -> vector<32x32xf32>
    %341 = vector.broadcast %220 : vector<1x32xf32> to vector<32x32xf32>
    %342 = arith.addf %340, %341 : vector<32x32xf32>
    %343 = arith.addf %334, %342 : vector<32x32xf32>
    %cst_95 = arith.constant dense<0.000000e+00> : vector<32xf32>
    %344 = vector.multi_reduction <add>, %343, %cst_95 [1] : vector<32x32xf32> to vector<32xf32>
    %345 = vector.shape_cast %344 : vector<32xf32> to vector<32x1xf32>
    %cst_96 = arith.constant 3.200000e+01 : f32
    %346 = vector.broadcast %cst_96 : f32 to vector<32x1xf32>
    %347 = arith.divf %345, %346 : vector<32x1xf32>
    %348 = vector.broadcast %347 : vector<32x1xf32> to vector<32x32xf32>
    %349 = arith.subf %343, %348 : vector<32x32xf32>
    %350 = arith.mulf %349, %349 : vector<32x32xf32>
    %cst_97 = arith.constant dense<0.000000e+00> : vector<32xf32>
    %351 = vector.multi_reduction <add>, %350, %cst_97 [1] : vector<32x32xf32> to vector<32xf32>
    %352 = vector.shape_cast %351 : vector<32xf32> to vector<32x1xf32>
    %cst_98 = arith.constant 3.200000e+01 : f32
    %353 = vector.broadcast %cst_98 : f32 to vector<32x1xf32>
    %354 = arith.divf %352, %353 : vector<32x1xf32>
    %355 = vector.broadcast %347 : vector<32x1xf32> to vector<32x32xf32>
    %356 = arith.subf %343, %355 : vector<32x32xf32>
    %cst_99 = arith.constant 9.99999974E-6 : f32
    %357 = vector.broadcast %cst_99 : f32 to vector<32x1xf32>
    %358 = arith.addf %354, %357 : vector<32x1xf32>
    %359 = math.rsqrt %358 : vector<32x1xf32>
    %360 = vector.broadcast %359 : vector<32x1xf32> to vector<32x32xf32>
    %361 = arith.mulf %356, %360 : vector<32x32xf32>
    %362 = vector.broadcast %221 : vector<1x32xf32> to vector<32x32xf32>
    %363 = arith.mulf %361, %362 : vector<32x32xf32>
    %364 = vector.broadcast %222 : vector<1x32xf32> to vector<32x32xf32>
    %365 = arith.addf %363, %364 : vector<32x32xf32>
    %c0_100 = arith.constant 0 : index
    %c0_101 = arith.constant 0 : index
    %366 = vector.load %arg5[%c0_100, %c0_101] : memref<2x32xf32, #tpu.memory_space<vmem>>, vector<1x32xf32>
    %c1_102 = arith.constant 1 : index
    %c0_103 = arith.constant 0 : index
    %367 = vector.load %arg5[%c1_102, %c0_103] : memref<2x32xf32, #tpu.memory_space<vmem>>, vector<1x32xf32>
    %cst_104 = arith.constant dense<0.000000e+00> : vector<32xf32>
    %368 = vector.multi_reduction <add>, %365, %cst_104 [1] : vector<32x32xf32> to vector<32xf32>
    %369 = vector.shape_cast %368 : vector<32xf32> to vector<32x1xf32>
    %cst_105 = arith.constant 3.200000e+01 : f32
    %370 = vector.broadcast %cst_105 : f32 to vector<32x1xf32>
    %371 = arith.divf %369, %370 : vector<32x1xf32>
    %372 = vector.broadcast %371 : vector<32x1xf32> to vector<32x32xf32>
    %373 = arith.subf %365, %372 : vector<32x32xf32>
    %374 = arith.mulf %373, %373 : vector<32x32xf32>
    %cst_106 = arith.constant dense<0.000000e+00> : vector<32xf32>
    %375 = vector.multi_reduction <add>, %374, %cst_106 [1] : vector<32x32xf32> to vector<32xf32>
    %376 = vector.shape_cast %375 : vector<32xf32> to vector<32x1xf32>
    %cst_107 = arith.constant 3.200000e+01 : f32
    %377 = vector.broadcast %cst_107 : f32 to vector<32x1xf32>
    %378 = arith.divf %376, %377 : vector<32x1xf32>
    %379 = vector.broadcast %371 : vector<32x1xf32> to vector<32x32xf32>
    %380 = arith.subf %365, %379 : vector<32x32xf32>
    %cst_108 = arith.constant 9.99999974E-6 : f32
    %381 = vector.broadcast %cst_108 : f32 to vector<32x1xf32>
    %382 = arith.addf %378, %381 : vector<32x1xf32>
    %383 = math.rsqrt %382 : vector<32x1xf32>
    %384 = vector.broadcast %383 : vector<32x1xf32> to vector<32x32xf32>
    %385 = arith.mulf %380, %384 : vector<32x32xf32>
    %386 = vector.broadcast %366 : vector<1x32xf32> to vector<32x32xf32>
    %387 = arith.mulf %385, %386 : vector<32x32xf32>
    %388 = vector.broadcast %367 : vector<1x32xf32> to vector<32x32xf32>
    %389 = arith.addf %387, %388 : vector<32x32xf32>
    %c0_109 = arith.constant 0 : index
    %c0_110 = arith.constant 0 : index
    %390 = vector.load %arg6[%c0_109, %c0_110] : memref<32x32xf32, #tpu.memory_space<vmem>>, vector<32x32xf32>
    tpu.vector_store %arg6[%c0_109, %c0_110], %389 {strides = array<i32>} : memref<32x32xf32, #tpu.memory_space<vmem>>, vector<32x32xf32>,
    %391 = tpu.iota {dimensions = array<i32: 0>} : vector<2x32xi32>
    %392 = tpu.iota {dimensions = array<i32: 1>} : vector<2x32xi32>
    %c2_i32_111 = arith.constant 2 : i32
    %c0_i32_112 = arith.constant 0 : i32
    %393 = arith.cmpi eq, %c2_i32_111, %c0_i32_112 : i32
    %c1_i32_113 = arith.constant 1 : i32
    %394 = arith.select %393, %c1_i32_113, %c2_i32_111 : i32
    %395 = vector.broadcast %394 : i32 to vector<2x32xi32>
    %396 = arith.remsi %392, %395 : vector<2x32xi32>
    %c0_i32_114 = arith.constant 0 : i32
    %397 = vector.broadcast %c0_i32_114 : i32 to vector<2x32xi32>
    %398 = arith.cmpi ne, %396, %397 : vector<2x32xi32>
    %c0_i32_115 = arith.constant 0 : i32
    %399 = vector.broadcast %c0_i32_115 : i32 to vector<2x32xi32>
    %400 = arith.cmpi slt, %396, %399 : vector<2x32xi32>
    %c0_i32_116 = arith.constant 0 : i32
    %401 = arith.cmpi slt, %394, %c0_i32_116 : i32
    %402 = vector.broadcast %401 : i1 to vector<2x32xi1>
    %403 = vector.broadcast %402 : vector<2x32xi1> to vector<2x32xi1>
    %404 = arith.xori %400, %403 : vector<2x32xi1>
    %405 = arith.andi %404, %398 : vector<2x32xi1>
    %406 = vector.broadcast %394 : i32 to vector<2x32xi32>
    %407 = arith.addi %396, %406 : vector<2x32xi32>
    %408 = arith.select %405, %407, %396 : vector<2x32xi1>, vector<2x32xi32>
    %409 = arith.cmpi eq, %408, %391 : vector<2x32xi32>
    %cst_117 = arith.constant 6.250000e-02 : f32
    %cst_118 = arith.constant 0.000000e+00 : f32
    %410 = vector.broadcast %cst_117 : f32 to vector<2x32xf32>
    %411 = vector.broadcast %cst_118 : f32 to vector<2x32xf32>
    %412 = arith.select %409, %410, %411 : vector<2x32xi1>, vector<2x32xf32>
    %cst_119 = arith.constant dense<0.000000e+00> : vector<2x32xf32>
    %413 = tpu.matmul %412, %389, %cst_119 {dimension_numbers = #tpu.dot_dimension_numbers<[1], [0], [0], [1], [0, 0, 1, 1], [], []>} : vector<2x32xf32>, vector<32x32xf32>, vector<2x32xf32> -> vector<2x32xf32>
    %c0_120 = arith.constant 0 : index
    %c0_121 = arith.constant 0 : index
    %414 = vector.load %arg7[%c0_120, %c0_121] : memref<2x32xf32, #tpu.memory_space<vmem>>, vector<2x32xf32>
    tpu.vector_store %arg7[%c0_120, %c0_121], %413 {strides = array<i32>} : memref<2x32xf32, #tpu.memory_space<vmem>>, vector<2x32xf32>,
    %cst_122 = arith.constant dense<0.000000e+00> : vector<32xf32>
    %415 = vector.multi_reduction <add>, %413, %cst_122 [0] : vector<2x32xf32> to vector<32xf32>
    %416 = vector.shape_cast %415 : vector<32xf32> to vector<1x32xf32>
    %cst_123 = arith.constant 2.000000e+00 : f32
    %417 = vector.broadcast %cst_123 : f32 to vector<1x32xf32>
    %418 = arith.divf %416, %417 : vector<1x32xf32>
    %c0_124 = arith.constant 0 : index
    %c0_125 = arith.constant 0 : index
    %419 = vector.load %arg8[%c0_124, %c0_125] : memref<1x32xf32, #tpu.memory_space<vmem>>, vector<1x32xf32>
    tpu.vector_store %arg8[%c0_124, %c0_125], %418 {strides = array<i32>} : memref<1x32xf32, #tpu.memory_space<vmem>>, vector<1x32xf32>,
    return
  }
}

</mosaic_0001>

<llo_original>
// kernel: spatial_temporal_encoder_forward.1
$region0: #{spatial_temporal_encoder_forward.1}
  #allocation0 [shape = 'u32[]', space=smem, size = 0x4, offset = 0x4, fixed_abs, tag = 'smem constant byte address 0x4 - core index']
  #allocation1 [shape = 'u32[144,128]{1,0:T(1,128)}', space=vmem, size = 0x12000, scoped, tag = 'internal scratch']
  %s0 = inlined_call_operand.vmem [shape: f32[32,32], index: 0, kind: input, shape index: {}]
  %s1 = inlined_call_operand.vmem [shape: f32[32,32], index: 1, kind: input, shape index: {}]
  %s2 = inlined_call_operand.vmem [shape: f32[2,64,64], index: 2, kind: input, shape index: {}]
  %s3 = inlined_call_operand.vmem [shape: f32[2,128,32], index: 3, kind: input, shape index: {}]
  %s4 = inlined_call_operand.vmem [shape: f32[2,16,64], index: 4, kind: input, shape index: {}]
  %s5 = inlined_call_operand.vmem [shape: f32[2,32], index: 5, kind: input, shape index: {}]
  %s6 = inlined_call_operand.hbm [shape: f32[32,32], index: 6, kind: output, shape index: {0}]
  %s7 = inlined_call_operand.hbm [shape: f32[2,32], index: 7, kind: output, shape index: {1}]
  %s8 = inlined_call_operand.hbm [shape: f32[1,32], index: 8, kind: output, shape index: {2}]
  %9 = xla_tuple %s6, %s7, %s8
  %s10 = sld [smem:[#allocation0]]
  $region50: #{spatial_temporal_encoder_forward.1} parent=0
    _
  %s12 = ssub.s32 1, %s10
  %s13 = scalar_select 0, %s12, %s10
  $region1: #{spatial_temporal_encoder_forward.1} parent=0
    #allocation2 [shape = 'u8[16384]{0}', space=vmem, size = 0x4000, scoped, tag = 'output window, operand 0, single buffered']
    #allocation3 [shape = 's32[1]{0}', space=sflag, size = 0x4, scoped, tag = 'scoped memory for spatial_temporal_encoder_forward.1']
    #allocation4 [shape = 'u8[1024]{0}', space=vmem, size = 0x400, scoped, tag = 'output window, operand 1, single buffered']
    #allocation5 [shape = 's32[1]{0}', space=sflag, size = 0x4, scoped, tag = 'scoped memory for spatial_temporal_encoder_forward.1']
    #allocation6 [shape = 'u8[512]{0}', space=vmem, size = 0x400, scoped, tag = 'output window, operand 2, single buffered']
    %14 = vsyncpa [#allocation3], 0
    %15 = vsyncpa [#allocation5], 0
    // Predicated region
    $region2: #{spatial_temporal_encoder_forward.1} parent=1 // pred_check
      _
    $region3: #{spatial_temporal_encoder_forward.1} parent=1 // pred_check_branch
      %17 = sbr.rel (0) target = $region5
    $region4: #{spatial_temporal_encoder_forward.1} parent=1 // pred_region
      _
    $region5: #{spatial_temporal_encoder_forward.1} parent=1 // pred_fallthru
      _
    // Predicated region
    $region6: #{spatial_temporal_encoder_forward.1} parent=1 // pred_check
      _
    $region7: #{spatial_temporal_encoder_forward.1} parent=1 // pred_check_branch
      %19 = sbr.rel (0) target = $region9
    $region8: #{spatial_temporal_encoder_forward.1} parent=1 // pred_region
      _
    $region9: #{spatial_temporal_encoder_forward.1} parent=1 // pred_fallthru
      _
    // Predicated region
    $region10: #{spatial_temporal_encoder_forward.1} parent=1 // pred_check
      _
    $region11: #{spatial_temporal_encoder_forward.1} parent=1 // pred_check_branch
      %21 = sbr.rel (0) target = $region13
    $region12: #{spatial_temporal_encoder_forward.1} parent=1 // pred_region
      _
    $region13: #{spatial_temporal_encoder_forward.1} parent=1 // pred_fallthru
      _
    // Predicated region
    $region14: #{spatial_temporal_encoder_forward.1} parent=1 // pred_check
      _
    $region15: #{spatial_temporal_encoder_forward.1} parent=1 // pred_check_branch
      %23 = sbr.rel (0) target = $region17
    $region16: #{spatial_temporal_encoder_forward.1} parent=1 // pred_region
      _
    $region17: #{spatial_temporal_encoder_forward.1} parent=1 // pred_fallthru
      _
    // Predicated region
    $region18: #{spatial_temporal_encoder_forward.1} parent=1 // pred_check
      _
    $region19: #{spatial_temporal_encoder_forward.1} parent=1 // pred_check_branch
      %25 = sbr.rel (0) target = $region21
    $region20: #{spatial_temporal_encoder_forward.1} parent=1 // pred_region
      _
    $region21: #{spatial_temporal_encoder_forward.1} parent=1 // pred_fallthru
      _
    // Predicated region
    $region22: #{spatial_temporal_encoder_forward.1} parent=1 // pred_check
      _
    $region23: #{spatial_temporal_encoder_forward.1} parent=1 // pred_check_branch
      %27 = sbr.rel (0) target = $region25
    $region24: #{spatial_temporal_encoder_forward.1} parent=1 // pred_region
      _
    $region25: #{spatial_temporal_encoder_forward.1} parent=1 // pred_fallthru
      _
    %v28 = vld [vmem:[%s0] sm:$0xff]
    %v29 = vld [vmem:[%s0 + $0x8] sm:$0xff]
    %v30 = vld [vmem:[%s0 + $0x10] sm:$0xff]
    %v31 = vld [vmem:[%s0 + $0x18] sm:$0xff]
    %v32 = vld [vmem:[%s1] sm:$0xff]
    %v33 = vld [vmem:[%s1 + $0x8] sm:$0xff]
    %v34 = vld [vmem:[%s1 + $0x10] sm:$0xff]
    %v35 = vld [vmem:[%s1 + $0x18] sm:$0xff]
    %v36 = vlaneseq
    %v37 = vshrl.u32 %v36, 7
    %v38 = vadd.s32 %v37, 8
    %v39 = vadd.s32 %v37, 16
    %v40 = vadd.s32 %v37, 24
    %vm41 = vcmp.lt.s32.totalorder %v37, 0
    %v42 = vsub.s32 0, %v37
    %v43 = vsel %vm41, %v42, %v37
    %v44 = vshrl.u32 %v43, 1
    %v45 = vand.u32 %v43, 1
    %v46 = vsub.s32 0, %v45
    %v47 = vsel %vm41, %v46, %v45
    %vm48 = vcmp.lt.s32.totalorder %v38, 0
    %v49 = vsub.s32 0, %v38
    %v50 = vsel %vm48, %v49, %v38
    %v51 = vshrl.u32 %v50, 1
    %v52 = vand.u32 %v50, 1
    %v53 = vsub.s32 0, %v52
    %v54 = vsel %vm48, %v53, %v52
    %vm55 = vcmp.lt.s32.totalorder %v39, 0
    %v56 = vsub.s32 0, %v39
    %v57 = vsel %vm55, %v56, %v39
    %v58 = vshrl.u32 %v57, 1
    %v59 = vand.u32 %v57, 1
    %v60 = vsub.s32 0, %v59
    %v61 = vsel %vm55, %v60, %v59
    %vm62 = vcmp.lt.s32.totalorder %v40, 0
    %v63 = vsub.s32 0, %v40
    %v64 = vsel %vm62, %v63, %v40
    %v65 = vshrl.u32 %v64, 1
    %v66 = vand.u32 %v64, 1
    %v67 = vsub.s32 0, %v66
    %v68 = vsel %vm62, %v67, %v66
    %vm69 = vcmp.ne.s32.totalorder %v47, 0
    %vm70 = vcmp.ne.s32.totalorder %v54, 0
    %vm71 = vcmp.ne.s32.totalorder %v61, 0
    %vm72 = vcmp.ne.s32.totalorder %v68, 0
    %vm73 = vcmp.lt.s32.totalorder %v47, 0
    %vm74 = vcmp.lt.s32.totalorder %v54, 0
    %vm75 = vcmp.lt.s32.totalorder %v61, 0
    %vm76 = vcmp.lt.s32.totalorder %v68, 0
    %vm77 = vmand %vm73, %vm69
    %vm78 = vmand %vm74, %vm70
    %vm79 = vmand %vm75, %vm71
    %vm80 = vmand %vm76, %vm72
    %v81 = vadd.s32 %v47, 2
    %v82 = vadd.s32 %v54, 2
    %v83 = vadd.s32 %v61, 2
    %v84 = vadd.s32 %v68, 2
    %v85 = vsel %vm77, %v81, %v47
    %v86 = vsel %vm78, %v82, %v54
    %v87 = vsel %vm79, %v83, %v61
    %v88 = vsel %vm80, %v84, %v68
    %v89 = vlaneseq
    %v90 = vand.u32 %v89, 127
    %vm91 = vcmp.lt.s32.totalorder %v90, 0
    %v92 = vsub.s32 0, %v90
    %v93 = vsel %vm91, %v92, %v90
    %v94 = vshrl.u32 %v93, 1
    %v95 = vand.u32 %v93, 1
    %v96 = vsub.s32 0, %v95
    %v97 = vsel %vm91, %v96, %v95
    %vm98 = vcmp.ne.s32.totalorder %v97, 0
    %vm99 = vcmp.lt.s32.totalorder %v97, 0
    %vm100 = vmand %vm99, %vm98
    %v101 = vadd.s32 %v97, 2
    %v102 = vsel %vm100, %v101, %v97
    %vm103 = vcmp.eq.s32.totalorder %v85, %v102
    %vm104 = vcmp.eq.s32.totalorder %v86, %v102
    %vm105 = vcmp.eq.s32.totalorder %v87, %v102
    %vm106 = vcmp.eq.s32.totalorder %v88, %v102
    %v107 = vsel %vm103, 0.0, -1e+30
    %v108 = vsel %vm104, 0.0, -1e+30
    %v109 = vsel %vm105, 0.0, -1e+30
    %v110 = vsel %vm106, 0.0, -1e+30
    %v111 = vld [vmem:[%s2] sm:$0xff]
    %v112 = vld [vmem:[%s2 + $0x8] sm:$0xff]
    %v113 = vld [vmem:[%s2 + $0x10] sm:$0xff]
    %v114 = vld [vmem:[%s2 + $0x18] sm:$0xff]
    %v115 = vld [vmem:[%s2 + $0x20] sm:$0xff]
    %v116 = vld [vmem:[%s2 + $0x28] sm:$0xff]
    %v117 = vld [vmem:[%s2 + $0x30] sm:$0xff]
    %v118 = vld [vmem:[%s2 + $0x38] sm:$0xff]
    %v119 = vld [vmem:[%s3] sm:$0xff]
    %v120 = vld [vmem:[%s3 + $0x8] sm:$0xff]
    %v121 = vld [vmem:[%s3 + $0x10] sm:$0xff]
    %v122 = vld [vmem:[%s3 + $0x18] sm:$0xff]
    %v123 = vld [vmem:[%s3 + $0x20] sm:$0xff]
    %v124 = vld [vmem:[%s3 + $0x28] sm:$0xff]
    %v125 = vld [vmem:[%s3 + $0x30] sm:$0xff]
    %v126 = vld [vmem:[%s3 + $0x38] sm:$0xff]
    %v127 = vld [vmem:[%s3 + $0x40] sm:$0xff]
    %v128 = vld [vmem:[%s3 + $0x48] sm:$0xff]
    %v129 = vld [vmem:[%s3 + $0x50] sm:$0xff]
    %v130 = vld [vmem:[%s3 + $0x58] sm:$0xff]
    %v131 = vld [vmem:[%s3 + $0x60] sm:$0xff]
    %v132 = vld [vmem:[%s3 + $0x68] sm:$0xff]
    %v133 = vld [vmem:[%s3 + $0x70] sm:$0xff]
    %v134 = vld [vmem:[%s3 + $0x78] sm:$0xff]
    %v135 = vld [vmem:[%s4] sm:$0xff]
    %v136 = vld [vmem:[%s4 + $0x8] sm:$0xff]
    %v137 = vadd.f32 %v28, %v32
    %v138 = vadd.f32 %v29, %v33
    %v139 = vadd.f32 %v30, %v34
    %v140 = vadd.f32 %v31, %v35
    %v141 = vlaneseq
    %v142 = vshrl.u32 %v141, 7
    %v143 = vsub.s32 0, %v142
    %v144 = vrot.slane %v135, %v143
    %vm145 = vcmask 261120
    %v147 = vsel %vm145, %v137, 0
    %v150 = vsel %vm145, %v138, 0
    %v153 = vsel %vm145, %v139, 0
    %v156 = vsel %vm145, %v140, 0
    %158 = vmatprep.subr.mxu0 0.0
    %159 = vmatpush1.msra.mxu0 %v111
    %160 = vmatprep.subr.mxu0 0.0
    %161 = vmatpush1.msra.mxu0 %v112
    %162 = vmatprep.subr.mxu0 0.0
    %163 = vmatpush1.msra.mxu0 %v113
    %164 = vmatprep.subr.mxu0 0.0
    %165 = vmatpush1.msra.mxu0 %v114
    %166 = vmatprep.subr.mxu0 0.0
    %167 = vmatpush1.msra.mxu0 0.0
    %168 = vmatprep.subr.mxu0 0.0
    %169 = vmatpush1.msra.mxu0 0.0
    %170 = vmatprep.subr.mxu0 0.0
    %171 = vmatpush1.msra.mxu0 0.0
    %172 = vmatprep.subr.mxu0 0.0
    %173 = vmatpush1.msra.mxu0 0.0
    %174 = vmatprep.subr.mxu0 0.0
    %175 = vmatpush1.msra.mxu0 0.0
    %176 = vmatprep.subr.mxu0 0.0
    %177 = vmatpush1.msra.mxu0 0.0
    %178 = vmatprep.subr.mxu0 0.0
    %179 = vmatpush1.msra.mxu0 0.0
    %180 = vmatprep.subr.mxu0 0.0
    %181 = vmatpush1.msra.mxu0 0.0
    %182 = vmatprep.subr.mxu0 0.0
    %183 = vmatpush1.msra.mxu0 0.0
    %184 = vmatprep.subr.mxu0 0.0
    %185 = vmatpush1.msra.mxu0 0.0
    %186 = vmatprep.subr.mxu0 0.0
    %187 = vmatpush1.msra.mxu0 0.0
    %188 = vmatprep.subr.mxu0 0.0
    %189 = vmatpush1.msra.mxu0 0.0
    %190 = vmatprep.subr.mxu0 0.0
    %191 = vmatpush1.msra.mxu0 0.0
    %192 = vmatprep.subr.mxu0 0.0
    %193 = vmatpush1.msra.mxu0 0.0
    %194 = vmatprep.subr.mxu0 0.0
    %195 = vmatpush1.msra.mxu0 0.0
    %196 = vmatprep.subr.mxu0 0.0
    %197 = vmatpush1.msra.mxu0 0.0
    %198 = vmatprep.subr.mxu0 0.0
    %199 = vmatpush1.msra.mxu0 0.0
    %200 = vmatprep.subr.mxu0 0.0
    %201 = vmatpush1.msra.mxu0 0.0
    %202 = vmatprep.subr.mxu0 0.0
    %203 = vmatpush1.msra.mxu0 0.0
    %204 = vmatprep.subr.mxu0 0.0
    %205 = vmatpush1.msra.mxu0 0.0
    %206 = vmatprep.subr.mxu0 0.0
    %207 = vmatpush1.msra.mxu0 0.0
    %208 = vmatprep.subr.mxu0 0.0
    %209 = vmatpush1.msra.mxu0 0.0
    %210 = vmatprep.subr.mxu0 0.0
    %211 = vmatpush1.msra.mxu0 0.0
    %212 = vmatprep.subr.mxu0 0.0
    %213 = vmatpush1.msra.mxu0 0.0
    %214 = vmatprep.subr.mxu0 0.0
    %215 = vmatpush1.msra.mxu0 0.0
    %216 = vmatprep.subr.mxu0 0.0
    %217 = vmatpush1.msra.mxu0 0.0
    %218 = vmatprep.subr.mxu0 0.0
    %219 = vmatpush1.msra.mxu0 0.0
    %220 = vmatprep.subr.mxu0 0.0
    %221 = vmatpush1.msra.mxu0 0.0
    %222 = vmatprep.mubr.f32.mxu0 0.0
    %223 = vmatmul.mubr.f32.gmra.mrb[0].mxu0 %v147
    %v224 = vpop.f32.mrb[0].mxu0
    %v225 = vadd.f32 %v144, %v224
    %v226 = vpop.f32.mrb[0].mxu0
    %227 = vmatprep.mubr.f32.mxu0 0.0
    %228 = vmatmul.mubr.f32.gmra.mrb[0].mxu0 %v150
    %v229 = vpop.f32.mrb[0].mxu0
    %v230 = vadd.f32 %v144, %v229
    %v231 = vpop.f32.mrb[0].mxu0
    %232 = vmatprep.mubr.f32.mxu0 0.0
    %233 = vmatmul.mubr.f32.gmra.mrb[0].mxu0 %v153
    %v234 = vpop.f32.mrb[0].mxu0
    %v235 = vadd.f32 %v144, %v234
    %v236 = vpop.f32.mrb[0].mxu0
    %237 = vmatprep.mubr.f32.mxu0 0.0
    %238 = vmatmul.mubr.f32.gmra.mrb[0].mxu0 %v156
    %v239 = vpop.f32.mrb[0].mxu0
    %v240 = vadd.f32 %v144, %v239
    %v241 = vpop.f32.mrb[0].mxu0
    %242 = vdwg.mxu0
    %v243 = vlaneseq
    %v244 = vshrl.u32 %v243, 7
    %v245 = vsub.s32 2, %v244
    %v246 = vrot.slane %v135, %v245
    %v248 = vsel %vm145, %v28, 0
    %v251 = vsel %vm145, %v29, 0
    %v254 = vsel %vm145, %v30, 0
    %v257 = vsel %vm145, %v31, 0
    %259 = vmatprep.subr.mxu0 0.0
    %260 = vmatpush1.msra.mxu0 %v119
    %261 = vmatprep.subr.mxu0 0.0
    %262 = vmatpush1.msra.mxu0 %v120
    %263 = vmatprep.subr.mxu0 0.0
    %264 = vmatpush1.msra.mxu0 %v121
    %265 = vmatprep.subr.mxu0 0.0
    %266 = vmatpush1.msra.mxu0 %v122
    %267 = vmatprep.subr.mxu0 0.0
    %268 = vmatpush1.msra.mxu0 0.0
    %269 = vmatprep.subr.mxu0 0.0
    %270 = vmatpush1.msra.mxu0 0.0
    %271 = vmatprep.subr.mxu0 0.0
    %272 = vmatpush1.msra.mxu0 0.0
    %273 = vmatprep.subr.mxu0 0.0
    %274 = vmatpush1.msra.mxu0 0.0
    %275 = vmatprep.subr.mxu0 0.0
    %276 = vmatpush1.msra.mxu0 0.0
    %277 = vmatprep.subr.mxu0 0.0
    %278 = vmatpush1.msra.mxu0 0.0
    %279 = vmatprep.subr.mxu0 0.0
    %280 = vmatpush1.msra.mxu0 0.0
    %281 = vmatprep.subr.mxu0 0.0
    %282 = vmatpush1.msra.mxu0 0.0
    %283 = vmatprep.subr.mxu0 0.0
    %284 = vmatpush1.msra.mxu0 0.0
    %285 = vmatprep.subr.mxu0 0.0
    %286 = vmatpush1.msra.mxu0 0.0
    %287 = vmatprep.subr.mxu0 0.0
    %288 = vmatpush1.msra.mxu0 0.0
    %289 = vmatprep.subr.mxu0 0.0
    %290 = vmatpush1.msra.mxu0 0.0
    %291 = vmatprep.subr.mxu0 0.0
    %292 = vmatpush1.msra.mxu0 0.0
    %293 = vmatprep.subr.mxu0 0.0
    %294 = vmatpush1.msra.mxu0 0.0
    %295 = vmatprep.subr.mxu0 0.0
    %296 = vmatpush1.msra.mxu0 0.0
    %297 = vmatprep.subr.mxu0 0.0
    %298 = vmatpush1.msra.mxu0 0.0
    %299 = vmatprep.subr.mxu0 0.0
    %300 = vmatpush1.msra.mxu0 0.0
    %301 = vmatprep.subr.mxu0 0.0
    %302 = vmatpush1.msra.mxu0 0.0
    %303 = vmatprep.subr.mxu0 0.0
    %304 = vmatpush1.msra.mxu0 0.0
    %305 = vmatprep.subr.mxu0 0.0
    %306 = vmatpush1.msra.mxu0 0.0
    %307 = vmatprep.subr.mxu0 0.0
    %308 = vmatpush1.msra.mxu0 0.0
    %309 = vmatprep.subr.mxu0 0.0
    %310 = vmatpush1.msra.mxu0 0.0
    %311 = vmatprep.subr.mxu0 0.0
    %312 = vmatpush1.msra.mxu0 0.0
    %313 = vmatprep.subr.mxu0 0.0
    %314 = vmatpush1.msra.mxu0 0.0
    %315 = vmatprep.subr.mxu0 0.0
    %316 = vmatpush1.msra.mxu0 0.0
    %317 = vmatprep.subr.mxu0 0.0
    %318 = vmatpush1.msra.mxu0 0.0
    %319 = vmatprep.subr.mxu0 0.0
    %320 = vmatpush1.msra.mxu0 0.0
    %321 = vmatprep.subr.mxu0 0.0
    %322 = vmatpush1.msra.mxu0 0.0
    %323 = vmatprep.mubr.f32.mxu0 0.0
    %324 = vmatmul.mubr.f32.gmra.mrb[0].mxu0 %v248
    %v325 = vpop.f32.mrb[0].mxu0
    %v326 = vadd.f32 %v246, %v325
    %v327 = vpop.f32.mrb[0].mxu0
    %328 = vmatprep.mubr.f32.mxu0 0.0
    %329 = vmatmul.mubr.f32.gmra.mrb[0].mxu0 %v251
    %v330 = vpop.f32.mrb[0].mxu0
    %v331 = vadd.f32 %v246, %v330
    %v332 = vpop.f32.mrb[0].mxu0
    %333 = vmatprep.mubr.f32.mxu0 0.0
    %334 = vmatmul.mubr.f32.gmra.mrb[0].mxu0 %v254
    %v335 = vpop.f32.mrb[0].mxu0
    %v336 = vadd.f32 %v246, %v335
    %v337 = vpop.f32.mrb[0].mxu0
    %338 = vmatprep.mubr.f32.mxu0 0.0
    %339 = vmatmul.mubr.f32.gmra.mrb[0].mxu0 %v257
    %v340 = vpop.f32.mrb[0].mxu0
    %v341 = vadd.f32 %v246, %v340
    %v342 = vpop.f32.mrb[0].mxu0
    %343 = vdwg.mxu0
    %v344 = vlaneseq
    %v345 = vshrl.u32 %v344, 7
    %v346 = vsub.s32 3, %v345
    %v347 = vrot.slane %v135, %v346
    %352 = vrot.lane.b32.xlu0 %v225, 96
    %v353 = vpop.permute.xlu0 %352
    %354 = vrot.lane.b32.xlu0 %v230, 96
    %v355 = vpop.permute.xlu0 %354
    %356 = vrot.lane.b32.xlu0 %v235, 96
    %v357 = vpop.permute.xlu0 %356
    %358 = vrot.lane.b32.xlu0 %v240, 96
    %v359 = vpop.permute.xlu0 %358
    %vm360 = vcmask 64512
    %v361 = vsel %vm360, %v225, 0
    %v363 = vsel %vm360, %v230, 0
    %v365 = vsel %vm360, %v235, 0
    %v367 = vsel %vm360, %v240, 0
    %v369 = vsel %vm360, %v353, 0
    %v371 = vsel %vm360, %v355, 0
    %v373 = vsel %vm360, %v357, 0
    %v375 = vsel %vm360, %v359, 0
    %377 = vmatprep.subr.mxu0 0.0
    %378 = vmatpush1.xpose.msra.mxu0 %v369
    %379 = vmatprep.subr.mxu0 0.0
    %380 = vmatpush1.xpose.msra.mxu0 %v371
    %381 = vmatprep.subr.mxu0 0.0
    %382 = vmatpush1.xpose.msra.mxu0 %v373
    %383 = vmatprep.subr.mxu0 0.0
    %384 = vmatpush1.xpose.msra.mxu0 %v375
    %385 = vmatprep.subr.mxu0 0.0
    %386 = vmatpush1.xpose.msra.mxu0 0.0
    %387 = vmatprep.subr.mxu0 0.0
    %388 = vmatpush1.xpose.msra.mxu0 0.0
    %389 = vmatprep.subr.mxu0 0.0
    %390 = vmatpush1.xpose.msra.mxu0 0.0
    %391 = vmatprep.subr.mxu0 0.0
    %392 = vmatpush1.xpose.msra.mxu0 0.0
    %393 = vmatprep.subr.mxu0 0.0
    %394 = vmatpush1.xpose.msra.mxu0 0.0
    %395 = vmatprep.subr.mxu0 0.0
    %396 = vmatpush1.xpose.msra.mxu0 0.0
    %397 = vmatprep.subr.mxu0 0.0
    %398 = vmatpush1.xpose.msra.mxu0 0.0
    %399 = vmatprep.subr.mxu0 0.0
    %400 = vmatpush1.xpose.msra.mxu0 0.0
    %401 = vmatprep.subr.mxu0 0.0
    %402 = vmatpush1.xpose.msra.mxu0 0.0
    %403 = vmatprep.subr.mxu0 0.0
    %404 = vmatpush1.xpose.msra.mxu0 0.0
    %405 = vmatprep.subr.mxu0 0.0
    %406 = vmatpush1.xpose.msra.mxu0 0.0
    %407 = vmatprep.subr.mxu0 0.0
    %408 = vmatpush1.xpose.msra.mxu0 0.0
    %409 = vmatprep.subr.mxu0 0.0
    %410 = vmatpush1.xpose.msra.mxu0 0.0
    %411 = vmatprep.subr.mxu0 0.0
    %412 = vmatpush1.xpose.msra.mxu0 0.0
    %413 = vmatprep.subr.mxu0 0.0
    %414 = vmatpush1.xpose.msra.mxu0 0.0
    %415 = vmatprep.subr.mxu0 0.0
    %416 = vmatpush1.xpose.msra.mxu0 0.0
    %417 = vmatprep.subr.mxu0 0.0
    %418 = vmatpush1.xpose.msra.mxu0 0.0
    %419 = vmatprep.subr.mxu0 0.0
    %420 = vmatpush1.xpose.msra.mxu0 0.0
    %421 = vmatprep.subr.mxu0 0.0
    %422 = vmatpush1.xpose.msra.mxu0 0.0
    %423 = vmatprep.subr.mxu0 0.0
    %424 = vmatpush1.xpose.msra.mxu0 0.0
    %425 = vmatprep.subr.mxu0 0.0
    %426 = vmatpush1.xpose.msra.mxu0 0.0
    %427 = vmatprep.subr.mxu0 0.0
    %428 = vmatpush1.xpose.msra.mxu0 0.0
    %429 = vmatprep.subr.mxu0 0.0
    %430 = vmatpush1.xpose.msra.mxu0 0.0
    %431 = vmatprep.subr.mxu0 0.0
    %432 = vmatpush1.xpose.msra.mxu0 0.0
    %433 = vmatprep.subr.mxu0 0.0
    %434 = vmatpush1.xpose.msra.mxu0 0.0
    %435 = vmatprep.subr.mxu0 0.0
    %436 = vmatpush1.xpose.msra.mxu0 0.0
    %437 = vmatprep.subr.mxu0 0.0
    %438 = vmatpush1.xpose.msra.mxu0 0.0
    %439 = vmatprep.subr.mxu0 0.0
    %440 = vmatpush1.xpose.msra.mxu0 0.0
    %441 = vmatprep.mubr.f32.mxu0 0.0
    %442 = vmatmul.mubr.f32.gmra.mrb[0].mxu0 %v361
    %v443 = vpop.f32.mrb[0].mxu0
    %v444 = vadd.f32 %v107, %v443
    %v445 = vpop.f32.mrb[0].mxu0
    %446 = vmatprep.mubr.f32.mxu0 0.0
    %447 = vmatmul.mubr.f32.gmra.mrb[0].mxu0 %v363
    %v448 = vpop.f32.mrb[0].mxu0
    %v449 = vadd.f32 %v108, %v448
    %v450 = vpop.f32.mrb[0].mxu0
    %451 = vmatprep.mubr.f32.mxu0 0.0
    %452 = vmatmul.mubr.f32.gmra.mrb[0].mxu0 %v365
    %v453 = vpop.f32.mrb[0].mxu0
    %v454 = vadd.f32 %v109, %v453
    %v455 = vpop.f32.mrb[0].mxu0
    %456 = vmatprep.mubr.f32.mxu0 0.0
    %457 = vmatmul.mubr.f32.gmra.mrb[0].mxu0 %v367
    %v458 = vpop.f32.mrb[0].mxu0
    %v459 = vadd.f32 %v110, %v458
    %v460 = vpop.f32.mrb[0].mxu0
    %461 = vdwg.mxu0
    %v462 = vsel %vm145, %v444, -inf
    %463 = vmax.xlane.f32.xlu0 %v462
    %v464 = vpop.xlane.xlu0 %463
    %v465 = vsel %vm145, %v449, -inf
    %466 = vmax.xlane.f32.xlu0 %v465
    %v467 = vpop.xlane.xlu0 %466
    %v468 = vsel %vm145, %v454, -inf
    %469 = vmax.xlane.f32.xlu0 %v468
    %v470 = vpop.xlane.xlu0 %469
    %v471 = vsel %vm145, %v459, -inf
    %472 = vmax.xlane.f32.xlu0 %v471
    %v473 = vpop.xlane.xlu0 %472
    %v474 = vsub.f32 %v444, %v464
    %v475 = vsub.f32 %v449, %v467
    %v476 = vsub.f32 %v454, %v470
    %v477 = vsub.f32 %v459, %v473
    %v478 = vmul.f32 %v474, 1.442695
    %v479 = vpow.pop %v478
    %v480 = vmul.f32 %v475, 1.442695
    %v481 = vpow.pop %v480
    %v482 = vmul.f32 %v476, 1.442695
    %v483 = vpow.pop %v482
    %v484 = vmul.f32 %v477, 1.442695
    %v485 = vpow.pop %v484
    %v486 = vsel %vm145, %v479, 0.0
    %487 = vadd.xlane.f32.xlu0 %v486
    %v488 = vpop.xlane.xlu0 %487
    %v489 = vsel %vm145, %v481, 0.0
    %490 = vadd.xlane.f32.xlu0 %v489
    %v491 = vpop.xlane.xlu0 %490
    %v492 = vsel %vm145, %v483, 0.0
    %493 = vadd.xlane.f32.xlu0 %v492
    %v494 = vpop.xlane.xlu0 %493
    %v495 = vsel %vm145, %v485, 0.0
    %496 = vadd.xlane.f32.xlu0 %v495
    %v497 = vpop.xlane.xlu0 %496
    %v498 = vrcp.pop %v488
    %v499 = vrcp.pop %v491
    %v500 = vrcp.pop %v494
    %v501 = vrcp.pop %v497
    %v502 = vmul.f32 %v479, %v498
    %v503 = vmul.f32 %v481, %v499
    %v504 = vmul.f32 %v483, %v500
    %v505 = vmul.f32 %v485, %v501
    %v507 = vsel %vm145, %v502, 0
    %v510 = vsel %vm145, %v503, 0
    %v513 = vsel %vm145, %v504, 0
    %v516 = vsel %vm145, %v505, 0
    %518 = vmatprep.subr.mxu0 0.0
    %519 = vmatpush1.msra.mxu0 %v326
    %520 = vmatprep.subr.mxu0 0.0
    %521 = vmatpush1.msra.mxu0 %v331
    %522 = vmatprep.subr.mxu0 0.0
    %523 = vmatpush1.msra.mxu0 %v336
    %524 = vmatprep.subr.mxu0 0.0
    %525 = vmatpush1.msra.mxu0 %v341
    %526 = vmatprep.subr.mxu0 0.0
    %527 = vmatpush1.msra.mxu0 0.0
    %528 = vmatprep.subr.mxu0 0.0
    %529 = vmatpush1.msra.mxu0 0.0
    %530 = vmatprep.subr.mxu0 0.0
    %531 = vmatpush1.msra.mxu0 0.0
    %532 = vmatprep.subr.mxu0 0.0
    %533 = vmatpush1.msra.mxu0 0.0
    %534 = vmatprep.subr.mxu0 0.0
    %535 = vmatpush1.msra.mxu0 0.0
    %536 = vmatprep.subr.mxu0 0.0
    %537 = vmatpush1.msra.mxu0 0.0
    %538 = vmatprep.subr.mxu0 0.0
    %539 = vmatpush1.msra.mxu0 0.0
    %540 = vmatprep.subr.mxu0 0.0
    %541 = vmatpush1.msra.mxu0 0.0
    %542 = vmatprep.subr.mxu0 0.0
    %543 = vmatpush1.msra.mxu0 0.0
    %544 = vmatprep.subr.mxu0 0.0
    %545 = vmatpush1.msra.mxu0 0.0
    %546 = vmatprep.subr.mxu0 0.0
    %547 = vmatpush1.msra.mxu0 0.0
    %548 = vmatprep.subr.mxu0 0.0
    %549 = vmatpush1.msra.mxu0 0.0
    %550 = vmatprep.subr.mxu0 0.0
    %551 = vmatpush1.msra.mxu0 0.0
    %552 = vmatprep.subr.mxu0 0.0
    %553 = vmatpush1.msra.mxu0 0.0
    %554 = vmatprep.subr.mxu0 0.0
    %555 = vmatpush1.msra.mxu0 0.0
    %556 = vmatprep.subr.mxu0 0.0
    %557 = vmatpush1.msra.mxu0 0.0
    %558 = vmatprep.subr.mxu0 0.0
    %559 = vmatpush1.msra.mxu0 0.0
    %560 = vmatprep.subr.mxu0 0.0
    %561 = vmatpush1.msra.mxu0 0.0
    %562 = vmatprep.subr.mxu0 0.0
    %563 = vmatpush1.msra.mxu0 0.0
    %564 = vmatprep.subr.mxu0 0.0
    %565 = vmatpush1.msra.mxu0 0.0
    %566 = vmatprep.subr.mxu0 0.0
    %567 = vmatpush1.msra.mxu0 0.0
    %568 = vmatprep.subr.mxu0 0.0
    %569 = vmatpush1.msra.mxu0 0.0
    %570 = vmatprep.subr.mxu0 0.0
    %571 = vmatpush1.msra.mxu0 0.0
    %572 = vmatprep.subr.mxu0 0.0
    %573 = vmatpush1.msra.mxu0 0.0
    %574 = vmatprep.subr.mxu0 0.0
    %575 = vmatpush1.msra.mxu0 0.0
    %576 = vmatprep.subr.mxu0 0.0
    %577 = vmatpush1.msra.mxu0 0.0
    %578 = vmatprep.subr.mxu0 0.0
    %579 = vmatpush1.msra.mxu0 0.0
    %580 = vmatprep.subr.mxu0 0.0
    %581 = vmatpush1.msra.mxu0 0.0
    %582 = vmatprep.mubr.f32.mxu0 0.0
    %583 = vmatmul.mubr.f32.gmra.mrb[0].mxu0 %v507
    %v584 = vpop.f32.mrb[0].mxu0
    %v585 = vadd.f32 0.0, %v584
    %v586 = vpop.f32.mrb[0].mxu0
    %587 = vmatprep.mubr.f32.mxu0 0.0
    %588 = vmatmul.mubr.f32.gmra.mrb[0].mxu0 %v510
    %v589 = vpop.f32.mrb[0].mxu0
    %v590 = vadd.f32 0.0, %v589
    %v591 = vpop.f32.mrb[0].mxu0
    %592 = vmatprep.mubr.f32.mxu0 0.0
    %593 = vmatmul.mubr.f32.gmra.mrb[0].mxu0 %v513
    %v594 = vpop.f32.mrb[0].mxu0
    %v595 = vadd.f32 0.0, %v594
    %v596 = vpop.f32.mrb[0].mxu0
    %597 = vmatprep.mubr.f32.mxu0 0.0
    %598 = vmatmul.mubr.f32.gmra.mrb[0].mxu0 %v516
    %v599 = vpop.f32.mrb[0].mxu0
    %v600 = vadd.f32 0.0, %v599
    %v601 = vpop.f32.mrb[0].mxu0
    %602 = vdwg.mxu0
    %v604 = vsel %vm360, %v585, 0
    %v607 = vsel %vm360, %v590, 0
    %v610 = vsel %vm360, %v595, 0
    %v613 = vsel %vm360, %v600, 0
    %615 = vmatprep.subr.mxu0 0.0
    %616 = vmatpush1.msra.mxu0 %v123
    %617 = vmatprep.subr.mxu0 0.0
    %618 = vmatpush1.msra.mxu0 0.0
    %619 = vmatprep.subr.mxu0 0.0
    %620 = vmatpush1.msra.mxu0 0.0
    %621 = vmatprep.subr.mxu0 0.0
    %622 = vmatpush1.msra.mxu0 0.0
    %623 = vmatprep.subr.mxu0 0.0
    %624 = vmatpush1.msra.mxu0 0.0
    %625 = vmatprep.subr.mxu0 0.0
    %626 = vmatpush1.msra.mxu0 0.0
    %627 = vmatprep.subr.mxu0 0.0
    %628 = vmatpush1.msra.mxu0 0.0
    %629 = vmatprep.subr.mxu0 0.0
    %630 = vmatpush1.msra.mxu0 0.0
    %631 = vmatprep.subr.mxu0 0.0
    %632 = vmatpush1.msra.mxu0 0.0
    %633 = vmatprep.subr.mxu0 0.0
    %634 = vmatpush1.msra.mxu0 0.0
    %635 = vmatprep.subr.mxu0 0.0
    %636 = vmatpush1.msra.mxu0 0.0
    %637 = vmatprep.subr.mxu0 0.0
    %638 = vmatpush1.msra.mxu0 0.0
    %639 = vmatprep.subr.mxu0 0.0
    %640 = vmatpush1.msra.mxu0 0.0
    %641 = vmatprep.subr.mxu0 0.0
    %642 = vmatpush1.msra.mxu0 0.0
    %643 = vmatprep.subr.mxu0 0.0
    %644 = vmatpush1.msra.mxu0 0.0
    %645 = vmatprep.subr.mxu0 0.0
    %646 = vmatpush1.msra.mxu0 0.0
    %647 = vmatprep.subr.mxu0 0.0
    %648 = vmatpush1.msra.mxu0 0.0
    %649 = vmatprep.subr.mxu0 0.0
    %650 = vmatpush1.msra.mxu0 0.0
    %651 = vmatprep.subr.mxu0 0.0
    %652 = vmatpush1.msra.mxu0 0.0
    %653 = vmatprep.subr.mxu0 0.0
    %654 = vmatpush1.msra.mxu0 0.0
    %655 = vmatprep.subr.mxu0 0.0
    %656 = vmatpush1.msra.mxu0 0.0
    %657 = vmatprep.subr.mxu0 0.0
    %658 = vmatpush1.msra.mxu0 0.0
    %659 = vmatprep.subr.mxu0 0.0
    %660 = vmatpush1.msra.mxu0 0.0
    %661 = vmatprep.subr.mxu0 0.0
    %662 = vmatpush1.msra.mxu0 0.0
    %663 = vmatprep.subr.mxu0 0.0
    %664 = vmatpush1.msra.mxu0 0.0
    %665 = vmatprep.subr.mxu0 0.0
    %666 = vmatpush1.msra.mxu0 0.0
    %667 = vmatprep.subr.mxu0 0.0
    %668 = vmatpush1.msra.mxu0 0.0
    %669 = vmatprep.subr.mxu0 0.0
    %670 = vmatpush1.msra.mxu0 0.0
    %671 = vmatprep.subr.mxu0 0.0
    %672 = vmatpush1.msra.mxu0 0.0
    %673 = vmatprep.subr.mxu0 0.0
    %674 = vmatpush1.msra.mxu0 0.0
    %675 = vmatprep.subr.mxu0 0.0
    %676 = vmatpush1.msra.mxu0 0.0
    %677 = vmatprep.subr.mxu0 0.0
    %678 = vmatpush1.msra.mxu0 0.0
    %679 = vmatprep.mubr.f32.mxu0 0.0
    %680 = vmatmul.mubr.f32.gmra.mrb[0].mxu0 %v604
    %v681 = vpop.f32.mrb[0].mxu0
    %v682 = vadd.f32 0.0, %v681
    %v683 = vpop.f32.mrb[0].mxu0
    %684 = vmatprep.mubr.f32.mxu0 0.0
    %685 = vmatmul.mubr.f32.gmra.mrb[0].mxu0 %v607
    %v686 = vpop.f32.mrb[0].mxu0
    %v687 = vadd.f32 0.0, %v686
    %v688 = vpop.f32.mrb[0].mxu0
    %689 = vmatprep.mubr.f32.mxu0 0.0
    %690 = vmatmul.mubr.f32.gmra.mrb[0].mxu0 %v610
    %v691 = vpop.f32.mrb[0].mxu0
    %v692 = vadd.f32 0.0, %v691
    %v693 = vpop.f32.mrb[0].mxu0
    %694 = vmatprep.mubr.f32.mxu0 0.0
    %695 = vmatmul.mubr.f32.gmra.mrb[0].mxu0 %v613
    %v696 = vpop.f32.mrb[0].mxu0
    %v697 = vadd.f32 0.0, %v696
    %v698 = vpop.f32.mrb[0].mxu0
    %699 = vdwg.mxu0
    %v700 = vadd.f32 %v347, %v682
    %v701 = vadd.f32 %v347, %v687
    %v702 = vadd.f32 %v347, %v692
    %v703 = vadd.f32 %v347, %v697
    %704 = vrot.lane.b32.xlu0 %v225, 120
    %v705 = vpop.permute.xlu0 %704
    %706 = vrot.lane.b32.xlu0 %v230, 120
    %v707 = vpop.permute.xlu0 %706
    %708 = vrot.lane.b32.xlu0 %v235, 120
    %v709 = vpop.permute.xlu0 %708
    %710 = vrot.lane.b32.xlu0 %v240, 120
    %v711 = vpop.permute.xlu0 %710
    %712 = vrot.lane.b32.xlu0 %v225, 88
    %v713 = vpop.permute.xlu0 %712
    %714 = vrot.lane.b32.xlu0 %v230, 88
    %v715 = vpop.permute.xlu0 %714
    %716 = vrot.lane.b32.xlu0 %v235, 88
    %v717 = vpop.permute.xlu0 %716
    %718 = vrot.lane.b32.xlu0 %v240, 88
    %v719 = vpop.permute.xlu0 %718
    %v720 = vsel %vm360, %v705, 0
    %v722 = vsel %vm360, %v707, 0
    %v724 = vsel %vm360, %v709, 0
    %v726 = vsel %vm360, %v711, 0
    %v728 = vsel %vm360, %v713, 0
    %v730 = vsel %vm360, %v715, 0
    %v732 = vsel %vm360, %v717, 0
    %v734 = vsel %vm360, %v719, 0
    %736 = vmatprep.subr.mxu0 0.0
    %737 = vmatpush1.xpose.msra.mxu0 %v728
    %738 = vmatprep.subr.mxu0 0.0
    %739 = vmatpush1.xpose.msra.mxu0 %v730
    %740 = vmatprep.subr.mxu0 0.0
    %741 = vmatpush1.xpose.msra.mxu0 %v732
    %742 = vmatprep.subr.mxu0 0.0
    %743 = vmatpush1.xpose.msra.mxu0 %v734
    %744 = vmatprep.subr.mxu0 0.0
    %745 = vmatpush1.xpose.msra.mxu0 0.0
    %746 = vmatprep.subr.mxu0 0.0
    %747 = vmatpush1.xpose.msra.mxu0 0.0
    %748 = vmatprep.subr.mxu0 0.0
    %749 = vmatpush1.xpose.msra.mxu0 0.0
    %750 = vmatprep.subr.mxu0 0.0
    %751 = vmatpush1.xpose.msra.mxu0 0.0
    %752 = vmatprep.subr.mxu0 0.0
    %753 = vmatpush1.xpose.msra.mxu0 0.0
    %754 = vmatprep.subr.mxu0 0.0
    %755 = vmatpush1.xpose.msra.mxu0 0.0
    %756 = vmatprep.subr.mxu0 0.0
    %757 = vmatpush1.xpose.msra.mxu0 0.0
    %758 = vmatprep.subr.mxu0 0.0
    %759 = vmatpush1.xpose.msra.mxu0 0.0
    %760 = vmatprep.subr.mxu0 0.0
    %761 = vmatpush1.xpose.msra.mxu0 0.0
    %762 = vmatprep.subr.mxu0 0.0
    %763 = vmatpush1.xpose.msra.mxu0 0.0
    %764 = vmatprep.subr.mxu0 0.0
    %765 = vmatpush1.xpose.msra.mxu0 0.0
    %766 = vmatprep.subr.mxu0 0.0
    %767 = vmatpush1.xpose.msra.mxu0 0.0
    %768 = vmatprep.subr.mxu0 0.0
    %769 = vmatpush1.xpose.msra.mxu0 0.0
    %770 = vmatprep.subr.mxu0 0.0
    %771 = vmatpush1.xpose.msra.mxu0 0.0
    %772 = vmatprep.subr.mxu0 0.0
    %773 = vmatpush1.xpose.msra.mxu0 0.0
    %774 = vmatprep.subr.mxu0 0.0
    %775 = vmatpush1.xpose.msra.mxu0 0.0
    %776 = vmatprep.subr.mxu0 0.0
    %777 = vmatpush1.xpose.msra.mxu0 0.0
    %778 = vmatprep.subr.mxu0 0.0
    %779 = vmatpush1.xpose.msra.mxu0 0.0
    %780 = vmatprep.subr.mxu0 0.0
    %781 = vmatpush1.xpose.msra.mxu0 0.0
    %782 = vmatprep.subr.mxu0 0.0
    %783 = vmatpush1.xpose.msra.mxu0 0.0
    %784 = vmatprep.subr.mxu0 0.0
    %785 = vmatpush1.xpose.msra.mxu0 0.0
    %786 = vmatprep.subr.mxu0 0.0
    %787 = vmatpush1.xpose.msra.mxu0 0.0
    %788 = vmatprep.subr.mxu0 0.0
    %789 = vmatpush1.xpose.msra.mxu0 0.0
    %790 = vmatprep.subr.mxu0 0.0
    %791 = vmatpush1.xpose.msra.mxu0 0.0
    %792 = vmatprep.subr.mxu0 0.0
    %793 = vmatpush1.xpose.msra.mxu0 0.0
    %794 = vmatprep.subr.mxu0 0.0
    %795 = vmatpush1.xpose.msra.mxu0 0.0
    %796 = vmatprep.subr.mxu0 0.0
    %797 = vmatpush1.xpose.msra.mxu0 0.0
    %798 = vmatprep.subr.mxu0 0.0
    %799 = vmatpush1.xpose.msra.mxu0 0.0
    %800 = vmatprep.mubr.f32.mxu0 0.0
    %801 = vmatmul.mubr.f32.gmra.mrb[0].mxu0 %v720
    %v802 = vpop.f32.mrb[0].mxu0
    %v803 = vadd.f32 %v107, %v802
    %v804 = vpop.f32.mrb[0].mxu0
    %805 = vmatprep.mubr.f32.mxu0 0.0
    %806 = vmatmul.mubr.f32.gmra.mrb[0].mxu0 %v722
    %v807 = vpop.f32.mrb[0].mxu0
    %v808 = vadd.f32 %v108, %v807
    %v809 = vpop.f32.mrb[0].mxu0
    %810 = vmatprep.mubr.f32.mxu0 0.0
    %811 = vmatmul.mubr.f32.gmra.mrb[0].mxu0 %v724
    %v812 = vpop.f32.mrb[0].mxu0
    %v813 = vadd.f32 %v109, %v812
    %v814 = vpop.f32.mrb[0].mxu0
    %815 = vmatprep.mubr.f32.mxu0 0.0
    %816 = vmatmul.mubr.f32.gmra.mrb[0].mxu0 %v726
    %v817 = vpop.f32.mrb[0].mxu0
    %v818 = vadd.f32 %v110, %v817
    %v819 = vpop.f32.mrb[0].mxu0
    %820 = vdwg.mxu0
    %v821 = vsel %vm145, %v803, -inf
    %822 = vmax.xlane.f32.xlu0 %v821
    %v823 = vpop.xlane.xlu0 %822
    %v824 = vsel %vm145, %v808, -inf
    %825 = vmax.xlane.f32.xlu0 %v824
    %v826 = vpop.xlane.xlu0 %825
    %v827 = vsel %vm145, %v813, -inf
    %828 = vmax.xlane.f32.xlu0 %v827
    %v829 = vpop.xlane.xlu0 %828
    %v830 = vsel %vm145, %v818, -inf
    %831 = vmax.xlane.f32.xlu0 %v830
    %v832 = vpop.xlane.xlu0 %831
    %v833 = vsub.f32 %v803, %v823
    %v834 = vsub.f32 %v808, %v826
    %v835 = vsub.f32 %v813, %v829
    %v836 = vsub.f32 %v818, %v832
    %v837 = vmul.f32 %v833, 1.442695
    %v838 = vpow.pop %v837
    %v839 = vmul.f32 %v834, 1.442695
    %v840 = vpow.pop %v839
    %v841 = vmul.f32 %v835, 1.442695
    %v842 = vpow.pop %v841
    %v843 = vmul.f32 %v836, 1.442695
    %v844 = vpow.pop %v843
    %v845 = vsel %vm145, %v838, 0.0
    %846 = vadd.xlane.f32.xlu0 %v845
    %v847 = vpop.xlane.xlu0 %846
    %v848 = vsel %vm145, %v840, 0.0
    %849 = vadd.xlane.f32.xlu0 %v848
    %v850 = vpop.xlane.xlu0 %849
    %v851 = vsel %vm145, %v842, 0.0
    %852 = vadd.xlane.f32.xlu0 %v851
    %v853 = vpop.xlane.xlu0 %852
    %v854 = vsel %vm145, %v844, 0.0
    %855 = vadd.xlane.f32.xlu0 %v854
    %v856 = vpop.xlane.xlu0 %855
    %v857 = vrcp.pop %v847
    %v858 = vrcp.pop %v850
    %v859 = vrcp.pop %v853
    %v860 = vrcp.pop %v856
    %v861 = vmul.f32 %v838, %v857
    %v862 = vmul.f32 %v840, %v858
    %v863 = vmul.f32 %v842, %v859
    %v864 = vmul.f32 %v844, %v860
    %869 = vrot.lane.b32.xlu0 %v326, 120
    %v870 = vpop.permute.xlu0 %869
    %871 = vrot.lane.b32.xlu0 %v331, 120
    %v872 = vpop.permute.xlu0 %871
    %873 = vrot.lane.b32.xlu0 %v336, 120
    %v874 = vpop.permute.xlu0 %873
    %875 = vrot.lane.b32.xlu0 %v341, 120
    %v876 = vpop.permute.xlu0 %875
    %v882 = vsel %vm145, %v861, 0
    %v885 = vsel %vm145, %v862, 0
    %v888 = vsel %vm145, %v863, 0
    %v891 = vsel %vm145, %v864, 0
    %893 = vmatprep.subr.mxu0 0.0
    %894 = vmatpush1.msra.mxu0 %v870
    %895 = vmatprep.subr.mxu0 0.0
    %896 = vmatpush1.msra.mxu0 %v872
    %897 = vmatprep.subr.mxu0 0.0
    %898 = vmatpush1.msra.mxu0 %v874
    %899 = vmatprep.subr.mxu0 0.0
    %900 = vmatpush1.msra.mxu0 %v876
    %901 = vmatprep.subr.mxu0 0.0
    %902 = vmatpush1.msra.mxu0 0.0
    %903 = vmatprep.subr.mxu0 0.0
    %904 = vmatpush1.msra.mxu0 0.0
    %905 = vmatprep.subr.mxu0 0.0
    %906 = vmatpush1.msra.mxu0 0.0
    %907 = vmatprep.subr.mxu0 0.0
    %908 = vmatpush1.msra.mxu0 0.0
    %909 = vmatprep.subr.mxu0 0.0
    %910 = vmatpush1.msra.mxu0 0.0
    %911 = vmatprep.subr.mxu0 0.0
    %912 = vmatpush1.msra.mxu0 0.0
    %913 = vmatprep.subr.mxu0 0.0
    %914 = vmatpush1.msra.mxu0 0.0
    %915 = vmatprep.subr.mxu0 0.0
    %916 = vmatpush1.msra.mxu0 0.0
    %917 = vmatprep.subr.mxu0 0.0
    %918 = vmatpush1.msra.mxu0 0.0
    %919 = vmatprep.subr.mxu0 0.0
    %920 = vmatpush1.msra.mxu0 0.0
    %921 = vmatprep.subr.mxu0 0.0
    %922 = vmatpush1.msra.mxu0 0.0
    %923 = vmatprep.subr.mxu0 0.0
    %924 = vmatpush1.msra.mxu0 0.0
    %925 = vmatprep.subr.mxu0 0.0
    %926 = vmatpush1.msra.mxu0 0.0
    %927 = vmatprep.subr.mxu0 0.0
    %928 = vmatpush1.msra.mxu0 0.0
    %929 = vmatprep.subr.mxu0 0.0
    %930 = vmatpush1.msra.mxu0 0.0
    %931 = vmatprep.subr.mxu0 0.0
    %932 = vmatpush1.msra.mxu0 0.0
    %933 = vmatprep.subr.mxu0 0.0
    %934 = vmatpush1.msra.mxu0 0.0
    %935 = vmatprep.subr.mxu0 0.0
    %936 = vmatpush1.msra.mxu0 0.0
    %937 = vmatprep.subr.mxu0 0.0
    %938 = vmatpush1.msra.mxu0 0.0
    %939 = vmatprep.subr.mxu0 0.0
    %940 = vmatpush1.msra.mxu0 0.0
    %941 = vmatprep.subr.mxu0 0.0
    %942 = vmatpush1.msra.mxu0 0.0
    %943 = vmatprep.subr.mxu0 0.0
    %944 = vmatpush1.msra.mxu0 0.0
    %945 = vmatprep.subr.mxu0 0.0
    %946 = vmatpush1.msra.mxu0 0.0
    %947 = vmatprep.subr.mxu0 0.0
    %948 = vmatpush1.msra.mxu0 0.0
    %949 = vmatprep.subr.mxu0 0.0
    %950 = vmatpush1.msra.mxu0 0.0
    %951 = vmatprep.subr.mxu0 0.0
    %952 = vmatpush1.msra.mxu0 0.0
    %953 = vmatprep.subr.mxu0 0.0
    %954 = vmatpush1.msra.mxu0 0.0
    %955 = vmatprep.subr.mxu0 0.0
    %956 = vmatpush1.msra.mxu0 0.0
    %957 = vmatprep.mubr.f32.mxu0 0.0
    %958 = vmatmul.mubr.f32.gmra.mrb[0].mxu0 %v882
    %v959 = vpop.f32.mrb[0].mxu0
    %v960 = vadd.f32 0.0, %v959
    %v961 = vpop.f32.mrb[0].mxu0
    %962 = vmatprep.mubr.f32.mxu0 0.0
    %963 = vmatmul.mubr.f32.gmra.mrb[0].mxu0 %v885
    %v964 = vpop.f32.mrb[0].mxu0
    %v965 = vadd.f32 0.0, %v964
    %v966 = vpop.f32.mrb[0].mxu0
    %967 = vmatprep.mubr.f32.mxu0 0.0
    %968 = vmatmul.mubr.f32.gmra.mrb[0].mxu0 %v888
    %v969 = vpop.f32.mrb[0].mxu0
    %v970 = vadd.f32 0.0, %v969
    %v971 = vpop.f32.mrb[0].mxu0
    %972 = vmatprep.mubr.f32.mxu0 0.0
    %973 = vmatmul.mubr.f32.gmra.mrb[0].mxu0 %v891
    %v974 = vpop.f32.mrb[0].mxu0
    %v975 = vadd.f32 0.0, %v974
    %v976 = vpop.f32.mrb[0].mxu0
    %977 = vdwg.mxu0
    %v979 = vsel %vm360, %v960, 0
    %v982 = vsel %vm360, %v965, 0
    %v985 = vsel %vm360, %v970, 0
    %v988 = vsel %vm360, %v975, 0
    %990 = vmatprep.subr.mxu0 0.0
    %991 = vmatpush1.msra.mxu0 %v124
    %992 = vmatprep.subr.mxu0 0.0
    %993 = vmatpush1.msra.mxu0 0.0
    %994 = vmatprep.subr.mxu0 0.0
    %995 = vmatpush1.msra.mxu0 0.0
    %996 = vmatprep.subr.mxu0 0.0
    %997 = vmatpush1.msra.mxu0 0.0
    %998 = vmatprep.subr.mxu0 0.0
    %999 = vmatpush1.msra.mxu0 0.0
    %1000 = vmatprep.subr.mxu0 0.0
    %1001 = vmatpush1.msra.mxu0 0.0
    %1002 = vmatprep.subr.mxu0 0.0
    %1003 = vmatpush1.msra.mxu0 0.0
    %1004 = vmatprep.subr.mxu0 0.0
    %1005 = vmatpush1.msra.mxu0 0.0
    %1006 = vmatprep.subr.mxu0 0.0
    %1007 = vmatpush1.msra.mxu0 0.0
    %1008 = vmatprep.subr.mxu0 0.0
    %1009 = vmatpush1.msra.mxu0 0.0
    %1010 = vmatprep.subr.mxu0 0.0
    %1011 = vmatpush1.msra.mxu0 0.0
    %1012 = vmatprep.subr.mxu0 0.0
    %1013 = vmatpush1.msra.mxu0 0.0
    %1014 = vmatprep.subr.mxu0 0.0
    %1015 = vmatpush1.msra.mxu0 0.0
    %1016 = vmatprep.subr.mxu0 0.0
    %1017 = vmatpush1.msra.mxu0 0.0
    %1018 = vmatprep.subr.mxu0 0.0
    %1019 = vmatpush1.msra.mxu0 0.0
    %1020 = vmatprep.subr.mxu0 0.0
    %1021 = vmatpush1.msra.mxu0 0.0
    %1022 = vmatprep.subr.mxu0 0.0
    %1023 = vmatpush1.msra.mxu0 0.0
    %1024 = vmatprep.subr.mxu0 0.0
    %1025 = vmatpush1.msra.mxu0 0.0
    %1026 = vmatprep.subr.mxu0 0.0
    %1027 = vmatpush1.msra.mxu0 0.0
    %1028 = vmatprep.subr.mxu0 0.0
    %1029 = vmatpush1.msra.mxu0 0.0
    %1030 = vmatprep.subr.mxu0 0.0
    %1031 = vmatpush1.msra.mxu0 0.0
    %1032 = vmatprep.subr.mxu0 0.0
    %1033 = vmatpush1.msra.mxu0 0.0
    %1034 = vmatprep.subr.mxu0 0.0
    %1035 = vmatpush1.msra.mxu0 0.0
    %1036 = vmatprep.subr.mxu0 0.0
    %1037 = vmatpush1.msra.mxu0 0.0
    %1038 = vmatprep.subr.mxu0 0.0
    %1039 = vmatpush1.msra.mxu0 0.0
    %1040 = vmatprep.subr.mxu0 0.0
    %1041 = vmatpush1.msra.mxu0 0.0
    %1042 = vmatprep.subr.mxu0 0.0
    %1043 = vmatpush1.msra.mxu0 0.0
    %1044 = vmatprep.subr.mxu0 0.0
    %1045 = vmatpush1.msra.mxu0 0.0
    %1046 = vmatprep.subr.mxu0 0.0
    %1047 = vmatpush1.msra.mxu0 0.0
    %1048 = vmatprep.subr.mxu0 0.0
    %1049 = vmatpush1.msra.mxu0 0.0
    %1050 = vmatprep.subr.mxu0 0.0
    %1051 = vmatpush1.msra.mxu0 0.0
    %1052 = vmatprep.subr.mxu0 0.0
    %1053 = vmatpush1.msra.mxu0 0.0
    %1054 = vmatprep.mubr.f32.mxu0 0.0
    %1055 = vmatmul.mubr.f32.gmra.mrb[0].mxu0 %v979
    %v1056 = vpop.f32.mrb[0].mxu0
    %v1057 = vadd.f32 0.0, %v1056
    %v1058 = vpop.f32.mrb[0].mxu0
    %1059 = vmatprep.mubr.f32.mxu0 0.0
    %1060 = vmatmul.mubr.f32.gmra.mrb[0].mxu0 %v982
    %v1061 = vpop.f32.mrb[0].mxu0
    %v1062 = vadd.f32 0.0, %v1061
    %v1063 = vpop.f32.mrb[0].mxu0
    %1064 = vmatprep.mubr.f32.mxu0 0.0
    %1065 = vmatmul.mubr.f32.gmra.mrb[0].mxu0 %v985
    %v1066 = vpop.f32.mrb[0].mxu0
    %v1067 = vadd.f32 0.0, %v1066
    %v1068 = vpop.f32.mrb[0].mxu0
    %1069 = vmatprep.mubr.f32.mxu0 0.0
    %1070 = vmatmul.mubr.f32.gmra.mrb[0].mxu0 %v988
    %v1071 = vpop.f32.mrb[0].mxu0
    %v1072 = vadd.f32 0.0, %v1071
    %v1073 = vpop.f32.mrb[0].mxu0
    %1074 = vdwg.mxu0
    %v1075 = vadd.f32 %v700, %v1057
    %v1076 = vadd.f32 %v701, %v1062
    %v1077 = vadd.f32 %v702, %v1067
    %v1078 = vadd.f32 %v703, %v1072
    %1079 = vrot.lane.b32.xlu0 %v225, 112
    %v1080 = vpop.permute.xlu0 %1079
    %1081 = vrot.lane.b32.xlu0 %v230, 112
    %v1082 = vpop.permute.xlu0 %1081
    %1083 = vrot.lane.b32.xlu0 %v235, 112
    %v1084 = vpop.permute.xlu0 %1083
    %1085 = vrot.lane.b32.xlu0 %v240, 112
    %v1086 = vpop.permute.xlu0 %1085
    %1087 = vrot.lane.b32.xlu0 %v225, 80
    %v1088 = vpop.permute.xlu0 %1087
    %1089 = vrot.lane.b32.xlu0 %v230, 80
    %v1090 = vpop.permute.xlu0 %1089
    %1091 = vrot.lane.b32.xlu0 %v235, 80
    %v1092 = vpop.permute.xlu0 %1091
    %1093 = vrot.lane.b32.xlu0 %v240, 80
    %v1094 = vpop.permute.xlu0 %1093
    %v1095 = vsel %vm360, %v1080, 0
    %v1097 = vsel %vm360, %v1082, 0
    %v1099 = vsel %vm360, %v1084, 0
    %v1101 = vsel %vm360, %v1086, 0
    %v1103 = vsel %vm360, %v1088, 0
    %v1105 = vsel %vm360, %v1090, 0
    %v1107 = vsel %vm360, %v1092, 0
    %v1109 = vsel %vm360, %v1094, 0
    %1111 = vmatprep.subr.mxu0 0.0
    %1112 = vmatpush1.xpose.msra.mxu0 %v1103
    %1113 = vmatprep.subr.mxu0 0.0
    %1114 = vmatpush1.xpose.msra.mxu0 %v1105
    %1115 = vmatprep.subr.mxu0 0.0
    %1116 = vmatpush1.xpose.msra.mxu0 %v1107
    %1117 = vmatprep.subr.mxu0 0.0
    %1118 = vmatpush1.xpose.msra.mxu0 %v1109
    %1119 = vmatprep.subr.mxu0 0.0
    %1120 = vmatpush1.xpose.msra.mxu0 0.0
    %1121 = vmatprep.subr.mxu0 0.0
    %1122 = vmatpush1.xpose.msra.mxu0 0.0
    %1123 = vmatprep.subr.mxu0 0.0
    %1124 = vmatpush1.xpose.msra.mxu0 0.0
    %1125 = vmatprep.subr.mxu0 0.0
    %1126 = vmatpush1.xpose.msra.mxu0 0.0
    %1127 = vmatprep.subr.mxu0 0.0
    %1128 = vmatpush1.xpose.msra.mxu0 0.0
    %1129 = vmatprep.subr.mxu0 0.0
    %1130 = vmatpush1.xpose.msra.mxu0 0.0
    %1131 = vmatprep.subr.mxu0 0.0
    %1132 = vmatpush1.xpose.msra.mxu0 0.0
    %1133 = vmatprep.subr.mxu0 0.0
    %1134 = vmatpush1.xpose.msra.mxu0 0.0
    %1135 = vmatprep.subr.mxu0 0.0
    %1136 = vmatpush1.xpose.msra.mxu0 0.0
    %1137 = vmatprep.subr.mxu0 0.0
    %1138 = vmatpush1.xpose.msra.mxu0 0.0
    %1139 = vmatprep.subr.mxu0 0.0
    %1140 = vmatpush1.xpose.msra.mxu0 0.0
    %1141 = vmatprep.subr.mxu0 0.0
    %1142 = vmatpush1.xpose.msra.mxu0 0.0
    %1143 = vmatprep.subr.mxu0 0.0
    %1144 = vmatpush1.xpose.msra.mxu0 0.0
    %1145 = vmatprep.subr.mxu0 0.0
    %1146 = vmatpush1.xpose.msra.mxu0 0.0
    %1147 = vmatprep.subr.mxu0 0.0
    %1148 = vmatpush1.xpose.msra.mxu0 0.0
    %1149 = vmatprep.subr.mxu0 0.0
    %1150 = vmatpush1.xpose.msra.mxu0 0.0
    %1151 = vmatprep.subr.mxu0 0.0
    %1152 = vmatpush1.xpose.msra.mxu0 0.0
    %1153 = vmatprep.subr.mxu0 0.0
    %1154 = vmatpush1.xpose.msra.mxu0 0.0
    %1155 = vmatprep.subr.mxu0 0.0
    %1156 = vmatpush1.xpose.msra.mxu0 0.0
    %1157 = vmatprep.subr.mxu0 0.0
    %1158 = vmatpush1.xpose.msra.mxu0 0.0
    %1159 = vmatprep.subr.mxu0 0.0
    %1160 = vmatpush1.xpose.msra.mxu0 0.0
    %1161 = vmatprep.subr.mxu0 0.0
    %1162 = vmatpush1.xpose.msra.mxu0 0.0
    %1163 = vmatprep.subr.mxu0 0.0
    %1164 = vmatpush1.xpose.msra.mxu0 0.0
    %1165 = vmatprep.subr.mxu0 0.0
    %1166 = vmatpush1.xpose.msra.mxu0 0.0
    %1167 = vmatprep.subr.mxu0 0.0
    %1168 = vmatpush1.xpose.msra.mxu0 0.0
    %1169 = vmatprep.subr.mxu0 0.0
    %1170 = vmatpush1.xpose.msra.mxu0 0.0
    %1171 = vmatprep.subr.mxu0 0.0
    %1172 = vmatpush1.xpose.msra.mxu0 0.0
    %1173 = vmatprep.subr.mxu0 0.0
    %1174 = vmatpush1.xpose.msra.mxu0 0.0
    %1175 = vmatprep.mubr.f32.mxu0 0.0
    %1176 = vmatmul.mubr.f32.gmra.mrb[0].mxu0 %v1095
    %v1177 = vpop.f32.mrb[0].mxu0
    %v1178 = vadd.f32 %v107, %v1177
    %v1179 = vpop.f32.mrb[0].mxu0
    %1180 = vmatprep.mubr.f32.mxu0 0.0
    %1181 = vmatmul.mubr.f32.gmra.mrb[0].mxu0 %v1097
    %v1182 = vpop.f32.mrb[0].mxu0
    %v1183 = vadd.f32 %v108, %v1182
    %v1184 = vpop.f32.mrb[0].mxu0
    %1185 = vmatprep.mubr.f32.mxu0 0.0
    %1186 = vmatmul.mubr.f32.gmra.mrb[0].mxu0 %v1099
    %v1187 = vpop.f32.mrb[0].mxu0
    %v1188 = vadd.f32 %v109, %v1187
    %v1189 = vpop.f32.mrb[0].mxu0
    %1190 = vmatprep.mubr.f32.mxu0 0.0
    %1191 = vmatmul.mubr.f32.gmra.mrb[0].mxu0 %v1101
    %v1192 = vpop.f32.mrb[0].mxu0
    %v1193 = vadd.f32 %v110, %v1192
    %v1194 = vpop.f32.mrb[0].mxu0
    %1195 = vdwg.mxu0
    %v1196 = vsel %vm145, %v1178, -inf
    %1197 = vmax.xlane.f32.xlu0 %v1196
    %v1198 = vpop.xlane.xlu0 %1197
    %v1199 = vsel %vm145, %v1183, -inf
    %1200 = vmax.xlane.f32.xlu0 %v1199
    %v1201 = vpop.xlane.xlu0 %1200
    %v1202 = vsel %vm145, %v1188, -inf
    %1203 = vmax.xlane.f32.xlu0 %v1202
    %v1204 = vpop.xlane.xlu0 %1203
    %v1205 = vsel %vm145, %v1193, -inf
    %1206 = vmax.xlane.f32.xlu0 %v1205
    %v1207 = vpop.xlane.xlu0 %1206
    %v1208 = vsub.f32 %v1178, %v1198
    %v1209 = vsub.f32 %v1183, %v1201
    %v1210 = vsub.f32 %v1188, %v1204
    %v1211 = vsub.f32 %v1193, %v1207
    %v1212 = vmul.f32 %v1208, 1.442695
    %v1213 = vpow.pop %v1212
    %v1214 = vmul.f32 %v1209, 1.442695
    %v1215 = vpow.pop %v1214
    %v1216 = vmul.f32 %v1210, 1.442695
    %v1217 = vpow.pop %v1216
    %v1218 = vmul.f32 %v1211, 1.442695
    %v1219 = vpow.pop %v1218
    %v1220 = vsel %vm145, %v1213, 0.0
    %1221 = vadd.xlane.f32.xlu0 %v1220
    %v1222 = vpop.xlane.xlu0 %1221
    %v1223 = vsel %vm145, %v1215, 0.0
    %1224 = vadd.xlane.f32.xlu0 %v1223
    %v1225 = vpop.xlane.xlu0 %1224
    %v1226 = vsel %vm145, %v1217, 0.0
    %1227 = vadd.xlane.f32.xlu0 %v1226
    %v1228 = vpop.xlane.xlu0 %1227
    %v1229 = vsel %vm145, %v1219, 0.0
    %1230 = vadd.xlane.f32.xlu0 %v1229
    %v1231 = vpop.xlane.xlu0 %1230
    %v1232 = vrcp.pop %v1222
    %v1233 = vrcp.pop %v1225
    %v1234 = vrcp.pop %v1228
    %v1235 = vrcp.pop %v1231
    %v1236 = vmul.f32 %v1213, %v1232
    %v1237 = vmul.f32 %v1215, %v1233
    %v1238 = vmul.f32 %v1217, %v1234
    %v1239 = vmul.f32 %v1219, %v1235
    %1240 = vrot.lane.b32.xlu0 %v326, 112
    %v1241 = vpop.permute.xlu0 %1240
    %1242 = vrot.lane.b32.xlu0 %v331, 112
    %v1243 = vpop.permute.xlu0 %1242
    %1244 = vrot.lane.b32.xlu0 %v336, 112
    %v1245 = vpop.permute.xlu0 %1244
    %1246 = vrot.lane.b32.xlu0 %v341, 112
    %v1247 = vpop.permute.xlu0 %1246
    %v1253 = vsel %vm145, %v1236, 0
    %v1256 = vsel %vm145, %v1237, 0
    %v1259 = vsel %vm145, %v1238, 0
    %v1262 = vsel %vm145, %v1239, 0
    %1264 = vmatprep.subr.mxu0 0.0
    %1265 = vmatpush1.msra.mxu0 %v1241
    %1266 = vmatprep.subr.mxu0 0.0
    %1267 = vmatpush1.msra.mxu0 %v1243
    %1268 = vmatprep.subr.mxu0 0.0
    %1269 = vmatpush1.msra.mxu0 %v1245
    %1270 = vmatprep.subr.mxu0 0.0
    %1271 = vmatpush1.msra.mxu0 %v1247
    %1272 = vmatprep.subr.mxu0 0.0
    %1273 = vmatpush1.msra.mxu0 0.0
    %1274 = vmatprep.subr.mxu0 0.0
    %1275 = vmatpush1.msra.mxu0 0.0
    %1276 = vmatprep.subr.mxu0 0.0
    %1277 = vmatpush1.msra.mxu0 0.0
    %1278 = vmatprep.subr.mxu0 0.0
    %1279 = vmatpush1.msra.mxu0 0.0
    %1280 = vmatprep.subr.mxu0 0.0
    %1281 = vmatpush1.msra.mxu0 0.0
    %1282 = vmatprep.subr.mxu0 0.0
    %1283 = vmatpush1.msra.mxu0 0.0
    %1284 = vmatprep.subr.mxu0 0.0
    %1285 = vmatpush1.msra.mxu0 0.0
    %1286 = vmatprep.subr.mxu0 0.0
    %1287 = vmatpush1.msra.mxu0 0.0
    %1288 = vmatprep.subr.mxu0 0.0
    %1289 = vmatpush1.msra.mxu0 0.0
    %1290 = vmatprep.subr.mxu0 0.0
    %1291 = vmatpush1.msra.mxu0 0.0
    %1292 = vmatprep.subr.mxu0 0.0
    %1293 = vmatpush1.msra.mxu0 0.0
    %1294 = vmatprep.subr.mxu0 0.0
    %1295 = vmatpush1.msra.mxu0 0.0
    %1296 = vmatprep.subr.mxu0 0.0
    %1297 = vmatpush1.msra.mxu0 0.0
    %1298 = vmatprep.subr.mxu0 0.0
    %1299 = vmatpush1.msra.mxu0 0.0
    %1300 = vmatprep.subr.mxu0 0.0
    %1301 = vmatpush1.msra.mxu0 0.0
    %1302 = vmatprep.subr.mxu0 0.0
    %1303 = vmatpush1.msra.mxu0 0.0
    %1304 = vmatprep.subr.mxu0 0.0
    %1305 = vmatpush1.msra.mxu0 0.0
    %1306 = vmatprep.subr.mxu0 0.0
    %1307 = vmatpush1.msra.mxu0 0.0
    %1308 = vmatprep.subr.mxu0 0.0
    %1309 = vmatpush1.msra.mxu0 0.0
    %1310 = vmatprep.subr.mxu0 0.0
    %1311 = vmatpush1.msra.mxu0 0.0
    %1312 = vmatprep.subr.mxu0 0.0
    %1313 = vmatpush1.msra.mxu0 0.0
    %1314 = vmatprep.subr.mxu0 0.0
    %1315 = vmatpush1.msra.mxu0 0.0
    %1316 = vmatprep.subr.mxu0 0.0
    %1317 = vmatpush1.msra.mxu0 0.0
    %1318 = vmatprep.subr.mxu0 0.0
    %1319 = vmatpush1.msra.mxu0 0.0
    %1320 = vmatprep.subr.mxu0 0.0
    %1321 = vmatpush1.msra.mxu0 0.0
    %1322 = vmatprep.subr.mxu0 0.0
    %1323 = vmatpush1.msra.mxu0 0.0
    %1324 = vmatprep.subr.mxu0 0.0
    %1325 = vmatpush1.msra.mxu0 0.0
    %1326 = vmatprep.subr.mxu0 0.0
    %1327 = vmatpush1.msra.mxu0 0.0
    %1328 = vmatprep.mubr.f32.mxu0 0.0
    %1329 = vmatmul.mubr.f32.gmra.mrb[0].mxu0 %v1253
    %v1330 = vpop.f32.mrb[0].mxu0
    %v1331 = vadd.f32 0.0, %v1330
    %v1332 = vpop.f32.mrb[0].mxu0
    %1333 = vmatprep.mubr.f32.mxu0 0.0
    %1334 = vmatmul.mubr.f32.gmra.mrb[0].mxu0 %v1256
    %v1335 = vpop.f32.mrb[0].mxu0
    %v1336 = vadd.f32 0.0, %v1335
    %v1337 = vpop.f32.mrb[0].mxu0
    %1338 = vmatprep.mubr.f32.mxu0 0.0
    %1339 = vmatmul.mubr.f32.gmra.mrb[0].mxu0 %v1259
    %v1340 = vpop.f32.mrb[0].mxu0
    %v1341 = vadd.f32 0.0, %v1340
    %v1342 = vpop.f32.mrb[0].mxu0
    %1343 = vmatprep.mubr.f32.mxu0 0.0
    %1344 = vmatmul.mubr.f32.gmra.mrb[0].mxu0 %v1262
    %v1345 = vpop.f32.mrb[0].mxu0
    %v1346 = vadd.f32 0.0, %v1345
    %v1347 = vpop.f32.mrb[0].mxu0
    %1348 = vdwg.mxu0
    %v1350 = vsel %vm360, %v1331, 0
    %v1353 = vsel %vm360, %v1336, 0
    %v1356 = vsel %vm360, %v1341, 0
    %v1359 = vsel %vm360, %v1346, 0
    %1361 = vmatprep.subr.mxu0 0.0
    %1362 = vmatpush1.msra.mxu0 %v125
    %1363 = vmatprep.subr.mxu0 0.0
    %1364 = vmatpush1.msra.mxu0 0.0
    %1365 = vmatprep.subr.mxu0 0.0
    %1366 = vmatpush1.msra.mxu0 0.0
    %1367 = vmatprep.subr.mxu0 0.0
    %1368 = vmatpush1.msra.mxu0 0.0
    %1369 = vmatprep.subr.mxu0 0.0
    %1370 = vmatpush1.msra.mxu0 0.0
    %1371 = vmatprep.subr.mxu0 0.0
    %1372 = vmatpush1.msra.mxu0 0.0
    %1373 = vmatprep.subr.mxu0 0.0
    %1374 = vmatpush1.msra.mxu0 0.0
    %1375 = vmatprep.subr.mxu0 0.0
    %1376 = vmatpush1.msra.mxu0 0.0
    %1377 = vmatprep.subr.mxu0 0.0
    %1378 = vmatpush1.msra.mxu0 0.0
    %1379 = vmatprep.subr.mxu0 0.0
    %1380 = vmatpush1.msra.mxu0 0.0
    %1381 = vmatprep.subr.mxu0 0.0
    %1382 = vmatpush1.msra.mxu0 0.0
    %1383 = vmatprep.subr.mxu0 0.0
    %1384 = vmatpush1.msra.mxu0 0.0
    %1385 = vmatprep.subr.mxu0 0.0
    %1386 = vmatpush1.msra.mxu0 0.0
    %1387 = vmatprep.subr.mxu0 0.0
    %1388 = vmatpush1.msra.mxu0 0.0
    %1389 = vmatprep.subr.mxu0 0.0
    %1390 = vmatpush1.msra.mxu0 0.0
    %1391 = vmatprep.subr.mxu0 0.0
    %1392 = vmatpush1.msra.mxu0 0.0
    %1393 = vmatprep.subr.mxu0 0.0
    %1394 = vmatpush1.msra.mxu0 0.0
    %1395 = vmatprep.subr.mxu0 0.0
    %1396 = vmatpush1.msra.mxu0 0.0
    %1397 = vmatprep.subr.mxu0 0.0
    %1398 = vmatpush1.msra.mxu0 0.0
    %1399 = vmatprep.subr.mxu0 0.0
    %1400 = vmatpush1.msra.mxu0 0.0
    %1401 = vmatprep.subr.mxu0 0.0
    %1402 = vmatpush1.msra.mxu0 0.0
    %1403 = vmatprep.subr.mxu0 0.0
    %1404 = vmatpush1.msra.mxu0 0.0
    %1405 = vmatprep.subr.mxu0 0.0
    %1406 = vmatpush1.msra.mxu0 0.0
    %1407 = vmatprep.subr.mxu0 0.0
    %1408 = vmatpush1.msra.mxu0 0.0
    %1409 = vmatprep.subr.mxu0 0.0
    %1410 = vmatpush1.msra.mxu0 0.0
    %1411 = vmatprep.subr.mxu0 0.0
    %1412 = vmatpush1.msra.mxu0 0.0
    %1413 = vmatprep.subr.mxu0 0.0
    %1414 = vmatpush1.msra.mxu0 0.0
    %1415 = vmatprep.subr.mxu0 0.0
    %1416 = vmatpush1.msra.mxu0 0.0
    %1417 = vmatprep.subr.mxu0 0.0
    %1418 = vmatpush1.msra.mxu0 0.0
    %1419 = vmatprep.subr.mxu0 0.0
    %1420 = vmatpush1.msra.mxu0 0.0
    %1421 = vmatprep.subr.mxu0 0.0
    %1422 = vmatpush1.msra.mxu0 0.0
    %1423 = vmatprep.subr.mxu0 0.0
    %1424 = vmatpush1.msra.mxu0 0.0
    %1425 = vmatprep.mubr.f32.mxu0 0.0
    %1426 = vmatmul.mubr.f32.gmra.mrb[0].mxu0 %v1350
    %v1427 = vpop.f32.mrb[0].mxu0
    %v1428 = vadd.f32 0.0, %v1427
    %v1429 = vpop.f32.mrb[0].mxu0
    %1430 = vmatprep.mubr.f32.mxu0 0.0
    %1431 = vmatmul.mubr.f32.gmra.mrb[0].mxu0 %v1353
    %v1432 = vpop.f32.mrb[0].mxu0
    %v1433 = vadd.f32 0.0, %v1432
    %v1434 = vpop.f32.mrb[0].mxu0
    %1435 = vmatprep.mubr.f32.mxu0 0.0
    %1436 = vmatmul.mubr.f32.gmra.mrb[0].mxu0 %v1356
    %v1437 = vpop.f32.mrb[0].mxu0
    %v1438 = vadd.f32 0.0, %v1437
    %v1439 = vpop.f32.mrb[0].mxu0
    %1440 = vmatprep.mubr.f32.mxu0 0.0
    %1441 = vmatmul.mubr.f32.gmra.mrb[0].mxu0 %v1359
    %v1442 = vpop.f32.mrb[0].mxu0
    %v1443 = vadd.f32 0.0, %v1442
    %v1444 = vpop.f32.mrb[0].mxu0
    %1445 = vdwg.mxu0
    %v1446 = vadd.f32 %v1075, %v1428
    %v1447 = vadd.f32 %v1076, %v1433
    %v1448 = vadd.f32 %v1077, %v1438
    %v1449 = vadd.f32 %v1078, %v1443
    %1450 = vrot.lane.b32.xlu0 %v225, 104
    %v1451 = vpop.permute.xlu0 %1450
    %1452 = vrot.lane.b32.xlu0 %v230, 104
    %v1453 = vpop.permute.xlu0 %1452
    %1454 = vrot.lane.b32.xlu0 %v235, 104
    %v1455 = vpop.permute.xlu0 %1454
    %1456 = vrot.lane.b32.xlu0 %v240, 104
    %v1457 = vpop.permute.xlu0 %1456
    %1458 = vrot.lane.b32.xlu0 %v225, 72
    %v1459 = vpop.permute.xlu0 %1458
    %1460 = vrot.lane.b32.xlu0 %v230, 72
    %v1461 = vpop.permute.xlu0 %1460
    %1462 = vrot.lane.b32.xlu0 %v235, 72
    %v1463 = vpop.permute.xlu0 %1462
    %1464 = vrot.lane.b32.xlu0 %v240, 72
    %v1465 = vpop.permute.xlu0 %1464
    %v1466 = vsel %vm360, %v1451, 0
    %v1468 = vsel %vm360, %v1453, 0
    %v1470 = vsel %vm360, %v1455, 0
    %v1472 = vsel %vm360, %v1457, 0
    %v1474 = vsel %vm360, %v1459, 0
    %v1476 = vsel %vm360, %v1461, 0
    %v1478 = vsel %vm360, %v1463, 0
    %v1480 = vsel %vm360, %v1465, 0
    %1482 = vmatprep.subr.mxu0 0.0
    %1483 = vmatpush1.xpose.msra.mxu0 %v1474
    %1484 = vmatprep.subr.mxu0 0.0
    %1485 = vmatpush1.xpose.msra.mxu0 %v1476
    %1486 = vmatprep.subr.mxu0 0.0
    %1487 = vmatpush1.xpose.msra.mxu0 %v1478
    %1488 = vmatprep.subr.mxu0 0.0
    %1489 = vmatpush1.xpose.msra.mxu0 %v1480
    %1490 = vmatprep.subr.mxu0 0.0
    %1491 = vmatpush1.xpose.msra.mxu0 0.0
    %1492 = vmatprep.subr.mxu0 0.0
    %1493 = vmatpush1.xpose.msra.mxu0 0.0
    %1494 = vmatprep.subr.mxu0 0.0
    %1495 = vmatpush1.xpose.msra.mxu0 0.0
    %1496 = vmatprep.subr.mxu0 0.0
    %1497 = vmatpush1.xpose.msra.mxu0 0.0
    %1498 = vmatprep.subr.mxu0 0.0
    %1499 = vmatpush1.xpose.msra.mxu0 0.0
    %1500 = vmatprep.subr.mxu0 0.0
    %1501 = vmatpush1.xpose.msra.mxu0 0.0
    %1502 = vmatprep.subr.mxu0 0.0
    %1503 = vmatpush1.xpose.msra.mxu0 0.0
    %1504 = vmatprep.subr.mxu0 0.0
    %1505 = vmatpush1.xpose.msra.mxu0 0.0
    %1506 = vmatprep.subr.mxu0 0.0
    %1507 = vmatpush1.xpose.msra.mxu0 0.0
    %1508 = vmatprep.subr.mxu0 0.0
    %1509 = vmatpush1.xpose.msra.mxu0 0.0
    %1510 = vmatprep.subr.mxu0 0.0
    %1511 = vmatpush1.xpose.msra.mxu0 0.0
    %1512 = vmatprep.subr.mxu0 0.0
    %1513 = vmatpush1.xpose.msra.mxu0 0.0
    %1514 = vmatprep.subr.mxu0 0.0
    %1515 = vmatpush1.xpose.msra.mxu0 0.0
    %1516 = vmatprep.subr.mxu0 0.0
    %1517 = vmatpush1.xpose.msra.mxu0 0.0
    %1518 = vmatprep.subr.mxu0 0.0
    %1519 = vmatpush1.xpose.msra.mxu0 0.0
    %1520 = vmatprep.subr.mxu0 0.0
    %1521 = vmatpush1.xpose.msra.mxu0 0.0
    %1522 = vmatprep.subr.mxu0 0.0
    %1523 = vmatpush1.xpose.msra.mxu0 0.0
    %1524 = vmatprep.subr.mxu0 0.0
    %1525 = vmatpush1.xpose.msra.mxu0 0.0
    %1526 = vmatprep.subr.mxu0 0.0
    %1527 = vmatpush1.xpose.msra.mxu0 0.0
    %1528 = vmatprep.subr.mxu0 0.0
    %1529 = vmatpush1.xpose.msra.mxu0 0.0
    %1530 = vmatprep.subr.mxu0 0.0
    %1531 = vmatpush1.xpose.msra.mxu0 0.0
    %1532 = vmatprep.subr.mxu0 0.0
    %1533 = vmatpush1.xpose.msra.mxu0 0.0
    %1534 = vmatprep.subr.mxu0 0.0
    %1535 = vmatpush1.xpose.msra.mxu0 0.0
    %1536 = vmatprep.subr.mxu0 0.0
    %1537 = vmatpush1.xpose.msra.mxu0 0.0
    %1538 = vmatprep.subr.mxu0 0.0
    %1539 = vmatpush1.xpose.msra.mxu0 0.0
    %1540 = vmatprep.subr.mxu0 0.0
    %1541 = vmatpush1.xpose.msra.mxu0 0.0
    %1542 = vmatprep.subr.mxu0 0.0
    %1543 = vmatpush1.xpose.msra.mxu0 0.0
    %1544 = vmatprep.subr.mxu0 0.0
    %1545 = vmatpush1.xpose.msra.mxu0 0.0
    %1546 = vmatprep.mubr.f32.mxu0 0.0
    %1547 = vmatmul.mubr.f32.gmra.mrb[0].mxu0 %v1466
    %v1548 = vpop.f32.mrb[0].mxu0
    %v1549 = vadd.f32 %v107, %v1548
    %v1550 = vpop.f32.mrb[0].mxu0
    %1551 = vmatprep.mubr.f32.mxu0 0.0
    %1552 = vmatmul.mubr.f32.gmra.mrb[0].mxu0 %v1468
    %v1553 = vpop.f32.mrb[0].mxu0
    %v1554 = vadd.f32 %v108, %v1553
    %v1555 = vpop.f32.mrb[0].mxu0
    %1556 = vmatprep.mubr.f32.mxu0 0.0
    %1557 = vmatmul.mubr.f32.gmra.mrb[0].mxu0 %v1470
    %v1558 = vpop.f32.mrb[0].mxu0
    %v1559 = vadd.f32 %v109, %v1558
    %v1560 = vpop.f32.mrb[0].mxu0
    %1561 = vmatprep.mubr.f32.mxu0 0.0
    %1562 = vmatmul.mubr.f32.gmra.mrb[0].mxu0 %v1472
    %v1563 = vpop.f32.mrb[0].mxu0
    %v1564 = vadd.f32 %v110, %v1563
    %v1565 = vpop.f32.mrb[0].mxu0
    %1566 = vdwg.mxu0
    %v1567 = vsel %vm145, %v1549, -inf
    %1568 = vmax.xlane.f32.xlu0 %v1567
    %v1569 = vpop.xlane.xlu0 %1568
    %v1570 = vsel %vm145, %v1554, -inf
    %1571 = vmax.xlane.f32.xlu0 %v1570
    %v1572 = vpop.xlane.xlu0 %1571
    %v1573 = vsel %vm145, %v1559, -inf
    %1574 = vmax.xlane.f32.xlu0 %v1573
    %v1575 = vpop.xlane.xlu0 %1574
    %v1576 = vsel %vm145, %v1564, -inf
    %1577 = vmax.xlane.f32.xlu0 %v1576
    %v1578 = vpop.xlane.xlu0 %1577
    %v1579 = vsub.f32 %v1549, %v1569
    %v1580 = vsub.f32 %v1554, %v1572
    %v1581 = vsub.f32 %v1559, %v1575
    %v1582 = vsub.f32 %v1564, %v1578
    %v1583 = vmul.f32 %v1579, 1.442695
    %v1584 = vpow.pop %v1583
    %v1585 = vmul.f32 %v1580, 1.442695
    %v1586 = vpow.pop %v1585
    %v1587 = vmul.f32 %v1581, 1.442695
    %v1588 = vpow.pop %v1587
    %v1589 = vmul.f32 %v1582, 1.442695
    %v1590 = vpow.pop %v1589
    %v1591 = vsel %vm145, %v1584, 0.0
    %1592 = vadd.xlane.f32.xlu0 %v1591
    %v1593 = vpop.xlane.xlu0 %1592
    %v1594 = vsel %vm145, %v1586, 0.0
    %1595 = vadd.xlane.f32.xlu0 %v1594
    %v1596 = vpop.xlane.xlu0 %1595
    %v1597 = vsel %vm145, %v1588, 0.0
    %1598 = vadd.xlane.f32.xlu0 %v1597
    %v1599 = vpop.xlane.xlu0 %1598
    %v1600 = vsel %vm145, %v1590, 0.0
    %1601 = vadd.xlane.f32.xlu0 %v1600
    %v1602 = vpop.xlane.xlu0 %1601
    %v1603 = vrcp.pop %v1593
    %v1604 = vrcp.pop %v1596
    %v1605 = vrcp.pop %v1599
    %v1606 = vrcp.pop %v1602
    %v1607 = vmul.f32 %v1584, %v1603
    %v1608 = vmul.f32 %v1586, %v1604
    %v1609 = vmul.f32 %v1588, %v1605
    %v1610 = vmul.f32 %v1590, %v1606
    %1611 = vrot.lane.b32.xlu0 %v326, 104
    %v1612 = vpop.permute.xlu0 %1611
    %1613 = vrot.lane.b32.xlu0 %v331, 104
    %v1614 = vpop.permute.xlu0 %1613
    %1615 = vrot.lane.b32.xlu0 %v336, 104
    %v1616 = vpop.permute.xlu0 %1615
    %1617 = vrot.lane.b32.xlu0 %v341, 104
    %v1618 = vpop.permute.xlu0 %1617
    %v1624 = vsel %vm145, %v1607, 0
    %v1627 = vsel %vm145, %v1608, 0
    %v1630 = vsel %vm145, %v1609, 0
    %v1633 = vsel %vm145, %v1610, 0
    %1635 = vmatprep.subr.mxu0 0.0
    %1636 = vmatpush1.msra.mxu0 %v1612
    %1637 = vmatprep.subr.mxu0 0.0
    %1638 = vmatpush1.msra.mxu0 %v1614
    %1639 = vmatprep.subr.mxu0 0.0
    %1640 = vmatpush1.msra.mxu0 %v1616
    %1641 = vmatprep.subr.mxu0 0.0
    %1642 = vmatpush1.msra.mxu0 %v1618
    %1643 = vmatprep.subr.mxu0 0.0
    %1644 = vmatpush1.msra.mxu0 0.0
    %1645 = vmatprep.subr.mxu0 0.0
    %1646 = vmatpush1.msra.mxu0 0.0
    %1647 = vmatprep.subr.mxu0 0.0
    %1648 = vmatpush1.msra.mxu0 0.0
    %1649 = vmatprep.subr.mxu0 0.0
    %1650 = vmatpush1.msra.mxu0 0.0
    %1651 = vmatprep.subr.mxu0 0.0
    %1652 = vmatpush1.msra.mxu0 0.0
    %1653 = vmatprep.subr.mxu0 0.0
    %1654 = vmatpush1.msra.mxu0 0.0
    %1655 = vmatprep.subr.mxu0 0.0
    %1656 = vmatpush1.msra.mxu0 0.0
    %1657 = vmatprep.subr.mxu0 0.0
    %1658 = vmatpush1.msra.mxu0 0.0
    %1659 = vmatprep.subr.mxu0 0.0
    %1660 = vmatpush1.msra.mxu0 0.0
    %1661 = vmatprep.subr.mxu0 0.0
    %1662 = vmatpush1.msra.mxu0 0.0
    %1663 = vmatprep.subr.mxu0 0.0
    %1664 = vmatpush1.msra.mxu0 0.0
    %1665 = vmatprep.subr.mxu0 0.0
    %1666 = vmatpush1.msra.mxu0 0.0
    %1667 = vmatprep.subr.mxu0 0.0
    %1668 = vmatpush1.msra.mxu0 0.0
    %1669 = vmatprep.subr.mxu0 0.0
    %1670 = vmatpush1.msra.mxu0 0.0
    %1671 = vmatprep.subr.mxu0 0.0
    %1672 = vmatpush1.msra.mxu0 0.0
    %1673 = vmatprep.subr.mxu0 0.0
    %1674 = vmatpush1.msra.mxu0 0.0
    %1675 = vmatprep.subr.mxu0 0.0
    %1676 = vmatpush1.msra.mxu0 0.0
    %1677 = vmatprep.subr.mxu0 0.0
    %1678 = vmatpush1.msra.mxu0 0.0
    %1679 = vmatprep.subr.mxu0 0.0
    %1680 = vmatpush1.msra.mxu0 0.0
    %1681 = vmatprep.subr.mxu0 0.0
    %1682 = vmatpush1.msra.mxu0 0.0
    %1683 = vmatprep.subr.mxu0 0.0
    %1684 = vmatpush1.msra.mxu0 0.0
    %1685 = vmatprep.subr.mxu0 0.0
    %1686 = vmatpush1.msra.mxu0 0.0
    %1687 = vmatprep.subr.mxu0 0.0
    %1688 = vmatpush1.msra.mxu0 0.0
    %1689 = vmatprep.subr.mxu0 0.0
    %1690 = vmatpush1.msra.mxu0 0.0
    %1691 = vmatprep.subr.mxu0 0.0
    %1692 = vmatpush1.msra.mxu0 0.0
    %1693 = vmatprep.subr.mxu0 0.0
    %1694 = vmatpush1.msra.mxu0 0.0
    %1695 = vmatprep.subr.mxu0 0.0
    %1696 = vmatpush1.msra.mxu0 0.0
    %1697 = vmatprep.subr.mxu0 0.0
    %1698 = vmatpush1.msra.mxu0 0.0
    %1699 = vmatprep.mubr.f32.mxu0 0.0
    %1700 = vmatmul.mubr.f32.gmra.mrb[0].mxu0 %v1624
    %v1701 = vpop.f32.mrb[0].mxu0
    %v1702 = vadd.f32 0.0, %v1701
    %v1703 = vpop.f32.mrb[0].mxu0
    %1704 = vmatprep.mubr.f32.mxu0 0.0
    %1705 = vmatmul.mubr.f32.gmra.mrb[0].mxu0 %v1627
    %v1706 = vpop.f32.mrb[0].mxu0
    %v1707 = vadd.f32 0.0, %v1706
    %v1708 = vpop.f32.mrb[0].mxu0
    %1709 = vmatprep.mubr.f32.mxu0 0.0
    %1710 = vmatmul.mubr.f32.gmra.mrb[0].mxu0 %v1630
    %v1711 = vpop.f32.mrb[0].mxu0
    %v1712 = vadd.f32 0.0, %v1711
    %v1713 = vpop.f32.mrb[0].mxu0
    %1714 = vmatprep.mubr.f32.mxu0 0.0
    %1715 = vmatmul.mubr.f32.gmra.mrb[0].mxu0 %v1633
    %v1716 = vpop.f32.mrb[0].mxu0
    %v1717 = vadd.f32 0.0, %v1716
    %v1718 = vpop.f32.mrb[0].mxu0
    %1719 = vdwg.mxu0
    %v1721 = vsel %vm360, %v1702, 0
    %v1724 = vsel %vm360, %v1707, 0
    %v1727 = vsel %vm360, %v1712, 0
    %v1730 = vsel %vm360, %v1717, 0
    %1732 = vmatprep.subr.mxu0 0.0
    %1733 = vmatpush1.msra.mxu0 %v126
    %1734 = vmatprep.subr.mxu0 0.0
    %1735 = vmatpush1.msra.mxu0 0.0
    %1736 = vmatprep.subr.mxu0 0.0
    %1737 = vmatpush1.msra.mxu0 0.0
    %1738 = vmatprep.subr.mxu0 0.0
    %1739 = vmatpush1.msra.mxu0 0.0
    %1740 = vmatprep.subr.mxu0 0.0
    %1741 = vmatpush1.msra.mxu0 0.0
    %1742 = vmatprep.subr.mxu0 0.0
    %1743 = vmatpush1.msra.mxu0 0.0
    %1744 = vmatprep.subr.mxu0 0.0
    %1745 = vmatpush1.msra.mxu0 0.0
    %1746 = vmatprep.subr.mxu0 0.0
    %1747 = vmatpush1.msra.mxu0 0.0
    %1748 = vmatprep.subr.mxu0 0.0
    %1749 = vmatpush1.msra.mxu0 0.0
    %1750 = vmatprep.subr.mxu0 0.0
    %1751 = vmatpush1.msra.mxu0 0.0
    %1752 = vmatprep.subr.mxu0 0.0
    %1753 = vmatpush1.msra.mxu0 0.0
    %1754 = vmatprep.subr.mxu0 0.0
    %1755 = vmatpush1.msra.mxu0 0.0
    %1756 = vmatprep.subr.mxu0 0.0
    %1757 = vmatpush1.msra.mxu0 0.0
    %1758 = vmatprep.subr.mxu0 0.0
    %1759 = vmatpush1.msra.mxu0 0.0
    %1760 = vmatprep.subr.mxu0 0.0
    %1761 = vmatpush1.msra.mxu0 0.0
    %1762 = vmatprep.subr.mxu0 0.0
    %1763 = vmatpush1.msra.mxu0 0.0
    %1764 = vmatprep.subr.mxu0 0.0
    %1765 = vmatpush1.msra.mxu0 0.0
    %1766 = vmatprep.subr.mxu0 0.0
    %1767 = vmatpush1.msra.mxu0 0.0
    %1768 = vmatprep.subr.mxu0 0.0
    %1769 = vmatpush1.msra.mxu0 0.0
    %1770 = vmatprep.subr.mxu0 0.0
    %1771 = vmatpush1.msra.mxu0 0.0
    %1772 = vmatprep.subr.mxu0 0.0
    %1773 = vmatpush1.msra.mxu0 0.0
    %1774 = vmatprep.subr.mxu0 0.0
    %1775 = vmatpush1.msra.mxu0 0.0
    %1776 = vmatprep.subr.mxu0 0.0
    %1777 = vmatpush1.msra.mxu0 0.0
    %1778 = vmatprep.subr.mxu0 0.0
    %1779 = vmatpush1.msra.mxu0 0.0
    %1780 = vmatprep.subr.mxu0 0.0
    %1781 = vmatpush1.msra.mxu0 0.0
    %1782 = vmatprep.subr.mxu0 0.0
    %1783 = vmatpush1.msra.mxu0 0.0
    %1784 = vmatprep.subr.mxu0 0.0
    %1785 = vmatpush1.msra.mxu0 0.0
    %1786 = vmatprep.subr.mxu0 0.0
    %1787 = vmatpush1.msra.mxu0 0.0
    %1788 = vmatprep.subr.mxu0 0.0
    %1789 = vmatpush1.msra.mxu0 0.0
    %1790 = vmatprep.subr.mxu0 0.0
    %1791 = vmatpush1.msra.mxu0 0.0
    %1792 = vmatprep.subr.mxu0 0.0
    %1793 = vmatpush1.msra.mxu0 0.0
    %1794 = vmatprep.subr.mxu0 0.0
    %1795 = vmatpush1.msra.mxu0 0.0
    %1796 = vmatprep.mubr.f32.mxu0 0.0
    %1797 = vmatmul.mubr.f32.gmra.mrb[0].mxu0 %v1721
    %v1798 = vpop.f32.mrb[0].mxu0
    %v1799 = vadd.f32 0.0, %v1798
    %v1800 = vpop.f32.mrb[0].mxu0
    %1801 = vmatprep.mubr.f32.mxu0 0.0
    %1802 = vmatmul.mubr.f32.gmra.mrb[0].mxu0 %v1724
    %v1803 = vpop.f32.mrb[0].mxu0
    %v1804 = vadd.f32 0.0, %v1803
    %v1805 = vpop.f32.mrb[0].mxu0
    %1806 = vmatprep.mubr.f32.mxu0 0.0
    %1807 = vmatmul.mubr.f32.gmra.mrb[0].mxu0 %v1727
    %v1808 = vpop.f32.mrb[0].mxu0
    %v1809 = vadd.f32 0.0, %v1808
    %v1810 = vpop.f32.mrb[0].mxu0
    %1811 = vmatprep.mubr.f32.mxu0 0.0
    %1812 = vmatmul.mubr.f32.gmra.mrb[0].mxu0 %v1730
    %v1813 = vpop.f32.mrb[0].mxu0
    %v1814 = vadd.f32 0.0, %v1813
    %v1815 = vpop.f32.mrb[0].mxu0
    %1816 = vdwg.mxu0
    %v1817 = vadd.f32 %v1446, %v1799
    %v1818 = vadd.f32 %v1447, %v1804
    %v1819 = vadd.f32 %v1448, %v1809
    %v1820 = vadd.f32 %v1449, %v1814
    %v1821 = vadd.f32 %v28, %v1817
    %v1822 = vadd.f32 %v29, %v1818
    %v1823 = vadd.f32 %v30, %v1819
    %v1824 = vadd.f32 %v31, %v1820
    %v1825 = vsel %vm145, %v1821, 0.0
    %1826 = vadd.xlane.f32.xlu0 %v1825
    %v1827 = vpop.xlane.xlu0 %1826
    %v1828 = vsel %vm145, %v1822, 0.0
    %1829 = vadd.xlane.f32.xlu0 %v1828
    %v1830 = vpop.xlane.xlu0 %1829
    %v1831 = vsel %vm145, %v1823, 0.0
    %1832 = vadd.xlane.f32.xlu0 %v1831
    %v1833 = vpop.xlane.xlu0 %1832
    %v1834 = vsel %vm145, %v1824, 0.0
    %1835 = vadd.xlane.f32.xlu0 %v1834
    %v1836 = vpop.xlane.xlu0 %1835
    %v1837 = vrcp.pop 32.0
    %v1838 = vmul.f32 %v1827, %v1837
    %v1839 = vmul.f32 %v1830, %v1837
    %v1840 = vmul.f32 %v1833, %v1837
    %v1841 = vmul.f32 %v1836, %v1837
    %v1842 = vsub.f32 %v1821, %v1838
    %v1843 = vsub.f32 %v1822, %v1839
    %v1844 = vsub.f32 %v1823, %v1840
    %v1845 = vsub.f32 %v1824, %v1841
    %v1846 = vmul.f32 %v1842, %v1842
    %v1847 = vmul.f32 %v1843, %v1843
    %v1848 = vmul.f32 %v1844, %v1844
    %v1849 = vmul.f32 %v1845, %v1845
    %v1850 = vsel %vm145, %v1846, 0.0
    %1851 = vadd.xlane.f32.xlu0 %v1850
    %v1852 = vpop.xlane.xlu0 %1851
    %v1853 = vsel %vm145, %v1847, 0.0
    %1854 = vadd.xlane.f32.xlu0 %v1853
    %v1855 = vpop.xlane.xlu0 %1854
    %v1856 = vsel %vm145, %v1848, 0.0
    %1857 = vadd.xlane.f32.xlu0 %v1856
    %v1858 = vpop.xlane.xlu0 %1857
    %v1859 = vsel %vm145, %v1849, 0.0
    %1860 = vadd.xlane.f32.xlu0 %v1859
    %v1861 = vpop.xlane.xlu0 %1860
    %v1862 = vmul.f32 %v1852, %v1837
    %v1863 = vmul.f32 %v1855, %v1837
    %v1864 = vmul.f32 %v1858, %v1837
    %v1865 = vmul.f32 %v1861, %v1837
    %v1866 = vadd.f32 %v1862, 1e-05
    %v1867 = vadd.f32 %v1863, 1e-05
    %v1868 = vadd.f32 %v1864, 1e-05
    %v1869 = vadd.f32 %v1865, 1e-05
    %v1870 = vrsqrt.pop %v1866
    %v1871 = vrsqrt.pop %v1867
    %v1872 = vrsqrt.pop %v1868
    %v1873 = vrsqrt.pop %v1869
    %v1874 = vmul.f32 %v1842, %v1870
    %v1875 = vmul.f32 %v1843, %v1871
    %v1876 = vmul.f32 %v1844, %v1872
    %v1877 = vmul.f32 %v1845, %v1873
    %v1878 = vlaneseq
    %v1879 = vshrl.u32 %v1878, 7
    %v1880 = vsub.s32 4, %v1879
    %v1881 = vrot.slane %v135, %v1880
    %v1882 = vmul.f32 %v1874, %v1881
    %v1883 = vmul.f32 %v1875, %v1881
    %v1884 = vmul.f32 %v1876, %v1881
    %v1885 = vmul.f32 %v1877, %v1881
    %v1886 = vlaneseq
    %v1887 = vshrl.u32 %v1886, 7
    %v1888 = vsub.s32 5, %v1887
    %v1889 = vrot.slane %v135, %v1888
    %v1890 = vadd.f32 %v1882, %v1889
    %v1891 = vadd.f32 %v1883, %v1889
    %v1892 = vadd.f32 %v1884, %v1889
    %v1893 = vadd.f32 %v1885, %v1889
    %v1894 = vlaneseq
    %v1895 = vshrl.u32 %v1894, 7
    %v1896 = vsub.s32 1, %v1895
    %v1897 = vrot.slane %v135, %v1896
    %v1899 = vsel %vm145, %v1890, 0
    %v1902 = vsel %vm145, %v1891, 0
    %v1905 = vsel %vm145, %v1892, 0
    %v1908 = vsel %vm145, %v1893, 0
    %1910 = vmatprep.subr.mxu0 0.0
    %1911 = vmatpush1.msra.mxu0 %v115
    %1912 = vmatprep.subr.mxu0 0.0
    %1913 = vmatpush1.msra.mxu0 %v116
    %1914 = vmatprep.subr.mxu0 0.0
    %1915 = vmatpush1.msra.mxu0 %v117
    %1916 = vmatprep.subr.mxu0 0.0
    %1917 = vmatpush1.msra.mxu0 %v118
    %1918 = vmatprep.subr.mxu0 0.0
    %1919 = vmatpush1.msra.mxu0 0.0
    %1920 = vmatprep.subr.mxu0 0.0
    %1921 = vmatpush1.msra.mxu0 0.0
    %1922 = vmatprep.subr.mxu0 0.0
    %1923 = vmatpush1.msra.mxu0 0.0
    %1924 = vmatprep.subr.mxu0 0.0
    %1925 = vmatpush1.msra.mxu0 0.0
    %1926 = vmatprep.subr.mxu0 0.0
    %1927 = vmatpush1.msra.mxu0 0.0
    %1928 = vmatprep.subr.mxu0 0.0
    %1929 = vmatpush1.msra.mxu0 0.0
    %1930 = vmatprep.subr.mxu0 0.0
    %1931 = vmatpush1.msra.mxu0 0.0
    %1932 = vmatprep.subr.mxu0 0.0
    %1933 = vmatpush1.msra.mxu0 0.0
    %1934 = vmatprep.subr.mxu0 0.0
    %1935 = vmatpush1.msra.mxu0 0.0
    %1936 = vmatprep.subr.mxu0 0.0
    %1937 = vmatpush1.msra.mxu0 0.0
    %1938 = vmatprep.subr.mxu0 0.0
    %1939 = vmatpush1.msra.mxu0 0.0
    %1940 = vmatprep.subr.mxu0 0.0
    %1941 = vmatpush1.msra.mxu0 0.0
    %1942 = vmatprep.subr.mxu0 0.0
    %1943 = vmatpush1.msra.mxu0 0.0
    %1944 = vmatprep.subr.mxu0 0.0
    %1945 = vmatpush1.msra.mxu0 0.0
    %1946 = vmatprep.subr.mxu0 0.0
    %1947 = vmatpush1.msra.mxu0 0.0
    %1948 = vmatprep.subr.mxu0 0.0
    %1949 = vmatpush1.msra.mxu0 0.0
    %1950 = vmatprep.subr.mxu0 0.0
    %1951 = vmatpush1.msra.mxu0 0.0
    %1952 = vmatprep.subr.mxu0 0.0
    %1953 = vmatpush1.msra.mxu0 0.0
    %1954 = vmatprep.subr.mxu0 0.0
    %1955 = vmatpush1.msra.mxu0 0.0
    %1956 = vmatprep.subr.mxu0 0.0
    %1957 = vmatpush1.msra.mxu0 0.0
    %1958 = vmatprep.subr.mxu0 0.0
    %1959 = vmatpush1.msra.mxu0 0.0
    %1960 = vmatprep.subr.mxu0 0.0
    %1961 = vmatpush1.msra.mxu0 0.0
    %1962 = vmatprep.subr.mxu0 0.0
    %1963 = vmatpush1.msra.mxu0 0.0
    %1964 = vmatprep.subr.mxu0 0.0
    %1965 = vmatpush1.msra.mxu0 0.0
    %1966 = vmatprep.subr.mxu0 0.0
    %1967 = vmatpush1.msra.mxu0 0.0
    %1968 = vmatprep.subr.mxu0 0.0
    %1969 = vmatpush1.msra.mxu0 0.0
    %1970 = vmatprep.subr.mxu0 0.0
    %1971 = vmatpush1.msra.mxu0 0.0
    %1972 = vmatprep.subr.mxu0 0.0
    %1973 = vmatpush1.msra.mxu0 0.0
    %1974 = vmatprep.mubr.f32.mxu0 0.0
    %1975 = vmatmul.mubr.f32.gmra.mrb[0].mxu0 %v1899
    %v1976 = vpop.f32.mrb[0].mxu0
    %v1977 = vadd.f32 %v1897, %v1976
    %v1978 = vpop.f32.mrb[0].mxu0
    %1979 = vmatprep.mubr.f32.mxu0 0.0
    %1980 = vmatmul.mubr.f32.gmra.mrb[0].mxu0 %v1902
    %v1981 = vpop.f32.mrb[0].mxu0
    %v1982 = vadd.f32 %v1897, %v1981
    %v1983 = vpop.f32.mrb[0].mxu0
    %1984 = vmatprep.mubr.f32.mxu0 0.0
    %1985 = vmatmul.mubr.f32.gmra.mrb[0].mxu0 %v1905
    %v1986 = vpop.f32.mrb[0].mxu0
    %v1987 = vadd.f32 %v1897, %v1986
    %v1988 = vpop.f32.mrb[0].mxu0
    %1989 = vmatprep.mubr.f32.mxu0 0.0
    %1990 = vmatmul.mubr.f32.gmra.mrb[0].mxu0 %v1908
    %v1991 = vpop.f32.mrb[0].mxu0
    %v1992 = vadd.f32 %v1897, %v1991
    %v1993 = vpop.f32.mrb[0].mxu0
    %1994 = vdwg.mxu0
    %v1995 = vmax.f32 %v1977, 0.0
    %v1996 = vmax.f32 %v1982, 0.0
    %v1997 = vmax.f32 %v1987, 0.0
    %v1998 = vmax.f32 %v1992, 0.0
    %v1999 = vlaneseq
    %v2000 = vshrl.u32 %v1999, 7
    %v2001 = vsub.s32 6, %v2000
    %v2002 = vrot.slane %v135, %v2001
    %vm2003 = vcmask 523264
    %v2005 = vsel %vm2003, %v1995, 0
    %v2008 = vsel %vm2003, %v1996, 0
    %v2011 = vsel %vm2003, %v1997, 0
    %v2014 = vsel %vm2003, %v1998, 0
    %2016 = vmatprep.subr.mxu0 0.0
    %2017 = vmatpush1.msra.mxu0 %v127
    %2018 = vmatprep.subr.mxu0 0.0
    %2019 = vmatpush1.msra.mxu0 %v128
    %2020 = vmatprep.subr.mxu0 0.0
    %2021 = vmatpush1.msra.mxu0 %v129
    %2022 = vmatprep.subr.mxu0 0.0
    %2023 = vmatpush1.msra.mxu0 %v130
    %2024 = vmatprep.subr.mxu0 0.0
    %2025 = vmatpush1.msra.mxu0 %v131
    %2026 = vmatprep.subr.mxu0 0.0
    %2027 = vmatpush1.msra.mxu0 %v132
    %2028 = vmatprep.subr.mxu0 0.0
    %2029 = vmatpush1.msra.mxu0 %v133
    %2030 = vmatprep.subr.mxu0 0.0
    %2031 = vmatpush1.msra.mxu0 %v134
    %2032 = vmatprep.subr.mxu0 0.0
    %2033 = vmatpush1.msra.mxu0 0.0
    %2034 = vmatprep.subr.mxu0 0.0
    %2035 = vmatpush1.msra.mxu0 0.0
    %2036 = vmatprep.subr.mxu0 0.0
    %2037 = vmatpush1.msra.mxu0 0.0
    %2038 = vmatprep.subr.mxu0 0.0
    %2039 = vmatpush1.msra.mxu0 0.0
    %2040 = vmatprep.subr.mxu0 0.0
    %2041 = vmatpush1.msra.mxu0 0.0
    %2042 = vmatprep.subr.mxu0 0.0
    %2043 = vmatpush1.msra.mxu0 0.0
    %2044 = vmatprep.subr.mxu0 0.0
    %2045 = vmatpush1.msra.mxu0 0.0
    %2046 = vmatprep.subr.mxu0 0.0
    %2047 = vmatpush1.msra.mxu0 0.0
    %2048 = vmatprep.subr.mxu0 0.0
    %2049 = vmatpush1.msra.mxu0 0.0
    %2050 = vmatprep.subr.mxu0 0.0
    %2051 = vmatpush1.msra.mxu0 0.0
    %2052 = vmatprep.subr.mxu0 0.0
    %2053 = vmatpush1.msra.mxu0 0.0
    %2054 = vmatprep.subr.mxu0 0.0
    %2055 = vmatpush1.msra.mxu0 0.0
    %2056 = vmatprep.subr.mxu0 0.0
    %2057 = vmatpush1.msra.mxu0 0.0
    %2058 = vmatprep.subr.mxu0 0.0
    %2059 = vmatpush1.msra.mxu0 0.0
    %2060 = vmatprep.subr.mxu0 0.0
    %2061 = vmatpush1.msra.mxu0 0.0
    %2062 = vmatprep.subr.mxu0 0.0
    %2063 = vmatpush1.msra.mxu0 0.0
    %2064 = vmatprep.subr.mxu0 0.0
    %2065 = vmatpush1.msra.mxu0 0.0
    %2066 = vmatprep.subr.mxu0 0.0
    %2067 = vmatpush1.msra.mxu0 0.0
    %2068 = vmatprep.subr.mxu0 0.0
    %2069 = vmatpush1.msra.mxu0 0.0
    %2070 = vmatprep.subr.mxu0 0.0
    %2071 = vmatpush1.msra.mxu0 0.0
    %2072 = vmatprep.subr.mxu0 0.0
    %2073 = vmatpush1.msra.mxu0 0.0
    %2074 = vmatprep.subr.mxu0 0.0
    %2075 = vmatpush1.msra.mxu0 0.0
    %2076 = vmatprep.subr.mxu0 0.0
    %2077 = vmatpush1.msra.mxu0 0.0
    %2078 = vmatprep.subr.mxu0 0.0
    %2079 = vmatpush1.msra.mxu0 0.0
    %2080 = vmatprep.mubr.f32.mxu0 0.0
    %2081 = vmatmul.mubr.f32.gmra.mrb[0].mxu0 %v2005
    %v2082 = vpop.f32.mrb[0].mxu0
    %v2083 = vadd.f32 %v2002, %v2082
    %v2084 = vpop.f32.mrb[0].mxu0
    %2085 = vmatprep.mubr.f32.mxu0 0.0
    %2086 = vmatmul.mubr.f32.gmra.mrb[0].mxu0 %v2008
    %v2087 = vpop.f32.mrb[0].mxu0
    %v2088 = vadd.f32 %v2002, %v2087
    %v2089 = vpop.f32.mrb[0].mxu0
    %2090 = vmatprep.mubr.f32.mxu0 0.0
    %2091 = vmatmul.mubr.f32.gmra.mrb[0].mxu0 %v2011
    %v2092 = vpop.f32.mrb[0].mxu0
    %v2093 = vadd.f32 %v2002, %v2092
    %v2094 = vpop.f32.mrb[0].mxu0
    %2095 = vmatprep.mubr.f32.mxu0 0.0
    %2096 = vmatmul.mubr.f32.gmra.mrb[0].mxu0 %v2014
    %v2097 = vpop.f32.mrb[0].mxu0
    %v2098 = vadd.f32 %v2002, %v2097
    %v2099 = vpop.f32.mrb[0].mxu0
    %2100 = vdwg.mxu0
    %v2101 = vadd.f32 %v1890, %v2083
    %v2102 = vadd.f32 %v1891, %v2088
    %v2103 = vadd.f32 %v1892, %v2093
    %v2104 = vadd.f32 %v1893, %v2098
    %v2105 = vsel %vm145, %v2101, 0.0
    %2106 = vadd.xlane.f32.xlu0 %v2105
    %v2107 = vpop.xlane.xlu0 %2106
    %v2108 = vsel %vm145, %v2102, 0.0
    %2109 = vadd.xlane.f32.xlu0 %v2108
    %v2110 = vpop.xlane.xlu0 %2109
    %v2111 = vsel %vm145, %v2103, 0.0
    %2112 = vadd.xlane.f32.xlu0 %v2111
    %v2113 = vpop.xlane.xlu0 %2112
    %v2114 = vsel %vm145, %v2104, 0.0
    %2115 = vadd.xlane.f32.xlu0 %v2114
    %v2116 = vpop.xlane.xlu0 %2115
    %v2117 = vmul.f32 %v2107, %v1837
    %v2118 = vmul.f32 %v2110, %v1837
    %v2119 = vmul.f32 %v2113, %v1837
    %v2120 = vmul.f32 %v2116, %v1837
    %v2121 = vsub.f32 %v2101, %v2117
    %v2122 = vsub.f32 %v2102, %v2118
    %v2123 = vsub.f32 %v2103, %v2119
    %v2124 = vsub.f32 %v2104, %v2120
    %v2125 = vmul.f32 %v2121, %v2121
    %v2126 = vmul.f32 %v2122, %v2122
    %v2127 = vmul.f32 %v2123, %v2123
    %v2128 = vmul.f32 %v2124, %v2124
    %v2129 = vsel %vm145, %v2125, 0.0
    %2130 = vadd.xlane.f32.xlu0 %v2129
    %v2131 = vpop.xlane.xlu0 %2130
    %v2132 = vsel %vm145, %v2126, 0.0
    %2133 = vadd.xlane.f32.xlu0 %v2132
    %v2134 = vpop.xlane.xlu0 %2133
    %v2135 = vsel %vm145, %v2127, 0.0
    %2136 = vadd.xlane.f32.xlu0 %v2135
    %v2137 = vpop.xlane.xlu0 %2136
    %v2138 = vsel %vm145, %v2128, 0.0
    %2139 = vadd.xlane.f32.xlu0 %v2138
    %v2140 = vpop.xlane.xlu0 %2139
    %v2141 = vmul.f32 %v2131, %v1837
    %v2142 = vmul.f32 %v2134, %v1837
    %v2143 = vmul.f32 %v2137, %v1837
    %v2144 = vmul.f32 %v2140, %v1837
    %v2145 = vadd.f32 %v2141, 1e-05
    %v2146 = vadd.f32 %v2142, 1e-05
    %v2147 = vadd.f32 %v2143, 1e-05
    %v2148 = vadd.f32 %v2144, 1e-05
    %v2149 = vrsqrt.pop %v2145
    %v2150 = vrsqrt.pop %v2146
    %v2151 = vrsqrt.pop %v2147
    %v2152 = vrsqrt.pop %v2148
    %v2153 = vmul.f32 %v2121, %v2149
    %v2154 = vmul.f32 %v2122, %v2150
    %v2155 = vmul.f32 %v2123, %v2151
    %v2156 = vmul.f32 %v2124, %v2152
    %v2157 = vlaneseq
    %v2158 = vshrl.u32 %v2157, 7
    %v2159 = vsub.s32 7, %v2158
    %v2160 = vrot.slane %v135, %v2159
    %v2161 = vmul.f32 %v2153, %v2160
    %v2162 = vmul.f32 %v2154, %v2160
    %v2163 = vmul.f32 %v2155, %v2160
    %v2164 = vmul.f32 %v2156, %v2160
    %v2165 = vlaneseq
    %v2166 = vshrl.u32 %v2165, 7
    %v2167 = vsub.s32 0, %v2166
    %v2168 = vrot.slane %v136, %v2167
    %v2169 = vadd.f32 %v2161, %v2168
    %v2170 = vadd.f32 %v2162, %v2168
    %v2171 = vadd.f32 %v2163, %v2168
    %v2172 = vadd.f32 %v2164, %v2168
    %s2173 = scalar_lea.vmem %s2, 64
    %v2174 = vld [vmem:[%s2173] sm:$0xff]
    %v2175 = vld [vmem:[%s2173 + $0x8] sm:$0xff]
    %v2176 = vld [vmem:[%s2173 + $0x10] sm:$0xff]
    %v2177 = vld [vmem:[%s2173 + $0x18] sm:$0xff]
    %v2178 = vld [vmem:[%s2173 + $0x20] sm:$0xff]
    %v2179 = vld [vmem:[%s2173 + $0x28] sm:$0xff]
    %v2180 = vld [vmem:[%s2173 + $0x30] sm:$0xff]
    %v2181 = vld [vmem:[%s2173 + $0x38] sm:$0xff]
    %s2182 = scalar_lea.vmem %s3, 128
    %v2183 = vld [vmem:[%s2182] sm:$0xff]
    %v2184 = vld [vmem:[%s2182 + $0x8] sm:$0xff]
    %v2185 = vld [vmem:[%s2182 + $0x10] sm:$0xff]
    %v2186 = vld [vmem:[%s2182 + $0x18] sm:$0xff]
    %v2187 = vld [vmem:[%s2182 + $0x20] sm:$0xff]
    %v2188 = vld [vmem:[%s2182 + $0x28] sm:$0xff]
    %v2189 = vld [vmem:[%s2182 + $0x30] sm:$0xff]
    %v2190 = vld [vmem:[%s2182 + $0x38] sm:$0xff]
    %v2191 = vld [vmem:[%s2182 + $0x40] sm:$0xff]
    %v2192 = vld [vmem:[%s2182 + $0x48] sm:$0xff]
    %v2193 = vld [vmem:[%s2182 + $0x50] sm:$0xff]
    %v2194 = vld [vmem:[%s2182 + $0x58] sm:$0xff]
    %v2195 = vld [vmem:[%s2182 + $0x60] sm:$0xff]
    %v2196 = vld [vmem:[%s2182 + $0x68] sm:$0xff]
    %v2197 = vld [vmem:[%s2182 + $0x70] sm:$0xff]
    %v2198 = vld [vmem:[%s2182 + $0x78] sm:$0xff]
    %s2199 = scalar_lea.vmem %s4, 16
    %v2200 = vld [vmem:[%s2199] sm:$0xff]
    %v2201 = vld [vmem:[%s2199 + $0x8] sm:$0xff]
    %v2202 = vadd.f32 %v2169, %v32
    %v2203 = vadd.f32 %v2170, %v33
    %v2204 = vadd.f32 %v2171, %v34
    %v2205 = vadd.f32 %v2172, %v35
    %v2206 = vlaneseq
    %v2207 = vshrl.u32 %v2206, 7
    %v2208 = vsub.s32 0, %v2207
    %v2209 = vrot.slane %v2200, %v2208
    %v2211 = vsel %vm145, %v2202, 0
    %v2214 = vsel %vm145, %v2203, 0
    %v2217 = vsel %vm145, %v2204, 0
    %v2220 = vsel %vm145, %v2205, 0
    %2222 = vmatprep.subr.mxu0 0.0
    %2223 = vmatpush1.msra.mxu0 %v2174
    %2224 = vmatprep.subr.mxu0 0.0
    %2225 = vmatpush1.msra.mxu0 %v2175
    %2226 = vmatprep.subr.mxu0 0.0
    %2227 = vmatpush1.msra.mxu0 %v2176
    %2228 = vmatprep.subr.mxu0 0.0
    %2229 = vmatpush1.msra.mxu0 %v2177
    %2230 = vmatprep.subr.mxu0 0.0
    %2231 = vmatpush1.msra.mxu0 0.0
    %2232 = vmatprep.subr.mxu0 0.0
    %2233 = vmatpush1.msra.mxu0 0.0
    %2234 = vmatprep.subr.mxu0 0.0
    %2235 = vmatpush1.msra.mxu0 0.0
    %2236 = vmatprep.subr.mxu0 0.0
    %2237 = vmatpush1.msra.mxu0 0.0
    %2238 = vmatprep.subr.mxu0 0.0
    %2239 = vmatpush1.msra.mxu0 0.0
    %2240 = vmatprep.subr.mxu0 0.0
    %2241 = vmatpush1.msra.mxu0 0.0
    %2242 = vmatprep.subr.mxu0 0.0
    %2243 = vmatpush1.msra.mxu0 0.0
    %2244 = vmatprep.subr.mxu0 0.0
    %2245 = vmatpush1.msra.mxu0 0.0
    %2246 = vmatprep.subr.mxu0 0.0
    %2247 = vmatpush1.msra.mxu0 0.0
    %2248 = vmatprep.subr.mxu0 0.0
    %2249 = vmatpush1.msra.mxu0 0.0
    %2250 = vmatprep.subr.mxu0 0.0
    %2251 = vmatpush1.msra.mxu0 0.0
    %2252 = vmatprep.subr.mxu0 0.0
    %2253 = vmatpush1.msra.mxu0 0.0
    %2254 = vmatprep.subr.mxu0 0.0
    %2255 = vmatpush1.msra.mxu0 0.0
    %2256 = vmatprep.subr.mxu0 0.0
    %2257 = vmatpush1.msra.mxu0 0.0
    %2258 = vmatprep.subr.mxu0 0.0
    %2259 = vmatpush1.msra.mxu0 0.0
    %2260 = vmatprep.subr.mxu0 0.0
    %2261 = vmatpush1.msra.mxu0 0.0
    %2262 = vmatprep.subr.mxu0 0.0
    %2263 = vmatpush1.msra.mxu0 0.0
    %2264 = vmatprep.subr.mxu0 0.0
    %2265 = vmatpush1.msra.mxu0 0.0
    %2266 = vmatprep.subr.mxu0 0.0
    %2267 = vmatpush1.msra.mxu0 0.0
    %2268 = vmatprep.subr.mxu0 0.0
    %2269 = vmatpush1.msra.mxu0 0.0
    %2270 = vmatprep.subr.mxu0 0.0
    %2271 = vmatpush1.msra.mxu0 0.0
    %2272 = vmatprep.subr.mxu0 0.0
    %2273 = vmatpush1.msra.mxu0 0.0
    %2274 = vmatprep.subr.mxu0 0.0
    %2275 = vmatpush1.msra.mxu0 0.0
    %2276 = vmatprep.subr.mxu0 0.0
    %2277 = vmatpush1.msra.mxu0 0.0
    %2278 = vmatprep.subr.mxu0 0.0
    %2279 = vmatpush1.msra.mxu0 0.0
    %2280 = vmatprep.subr.mxu0 0.0
    %2281 = vmatpush1.msra.mxu0 0.0
    %2282 = vmatprep.subr.mxu0 0.0
    %2283 = vmatpush1.msra.mxu0 0.0
    %2284 = vmatprep.subr.mxu0 0.0
    %2285 = vmatpush1.msra.mxu0 0.0
    %2286 = vmatprep.mubr.f32.mxu0 0.0
    %2287 = vmatmul.mubr.f32.gmra.mrb[0].mxu0 %v2211
    %v2288 = vpop.f32.mrb[0].mxu0
    %v2289 = vadd.f32 %v2209, %v2288
    %v2290 = vpop.f32.mrb[0].mxu0
    %2291 = vmatprep.mubr.f32.mxu0 0.0
    %2292 = vmatmul.mubr.f32.gmra.mrb[0].mxu0 %v2214
    %v2293 = vpop.f32.mrb[0].mxu0
    %v2294 = vadd.f32 %v2209, %v2293
    %v2295 = vpop.f32.mrb[0].mxu0
    %2296 = vmatprep.mubr.f32.mxu0 0.0
    %2297 = vmatmul.mubr.f32.gmra.mrb[0].mxu0 %v2217
    %v2298 = vpop.f32.mrb[0].mxu0
    %v2299 = vadd.f32 %v2209, %v2298
    %v2300 = vpop.f32.mrb[0].mxu0
    %2301 = vmatprep.mubr.f32.mxu0 0.0
    %2302 = vmatmul.mubr.f32.gmra.mrb[0].mxu0 %v2220
    %v2303 = vpop.f32.mrb[0].mxu0
    %v2304 = vadd.f32 %v2209, %v2303
    %v2305 = vpop.f32.mrb[0].mxu0
    %2306 = vdwg.mxu0
    %v2307 = vlaneseq
    %v2308 = vshrl.u32 %v2307, 7
    %v2309 = vsub.s32 2, %v2308
    %v2310 = vrot.slane %v2200, %v2309
    %v2312 = vsel %vm145, %v2169, 0
    %v2315 = vsel %vm145, %v2170, 0
    %v2318 = vsel %vm145, %v2171, 0
    %v2321 = vsel %vm145, %v2172, 0
    %2323 = vmatprep.subr.mxu0 0.0
    %2324 = vmatpush1.msra.mxu0 %v2183
    %2325 = vmatprep.subr.mxu0 0.0
    %2326 = vmatpush1.msra.mxu0 %v2184
    %2327 = vmatprep.subr.mxu0 0.0
    %2328 = vmatpush1.msra.mxu0 %v2185
    %2329 = vmatprep.subr.mxu0 0.0
    %2330 = vmatpush1.msra.mxu0 %v2186
    %2331 = vmatprep.subr.mxu0 0.0
    %2332 = vmatpush1.msra.mxu0 0.0
    %2333 = vmatprep.subr.mxu0 0.0
    %2334 = vmatpush1.msra.mxu0 0.0
    %2335 = vmatprep.subr.mxu0 0.0
    %2336 = vmatpush1.msra.mxu0 0.0
    %2337 = vmatprep.subr.mxu0 0.0
    %2338 = vmatpush1.msra.mxu0 0.0
    %2339 = vmatprep.subr.mxu0 0.0
    %2340 = vmatpush1.msra.mxu0 0.0
    %2341 = vmatprep.subr.mxu0 0.0
    %2342 = vmatpush1.msra.mxu0 0.0
    %2343 = vmatprep.subr.mxu0 0.0
    %2344 = vmatpush1.msra.mxu0 0.0
    %2345 = vmatprep.subr.mxu0 0.0
    %2346 = vmatpush1.msra.mxu0 0.0
    %2347 = vmatprep.subr.mxu0 0.0
    %2348 = vmatpush1.msra.mxu0 0.0
    %2349 = vmatprep.subr.mxu0 0.0
    %2350 = vmatpush1.msra.mxu0 0.0
    %2351 = vmatprep.subr.mxu0 0.0
    %2352 = vmatpush1.msra.mxu0 0.0
    %2353 = vmatprep.subr.mxu0 0.0
    %2354 = vmatpush1.msra.mxu0 0.0
    %2355 = vmatprep.subr.mxu0 0.0
    %2356 = vmatpush1.msra.mxu0 0.0
    %2357 = vmatprep.subr.mxu0 0.0
    %2358 = vmatpush1.msra.mxu0 0.0
    %2359 = vmatprep.subr.mxu0 0.0
    %2360 = vmatpush1.msra.mxu0 0.0
    %2361 = vmatprep.subr.mxu0 0.0
    %2362 = vmatpush1.msra.mxu0 0.0
    %2363 = vmatprep.subr.mxu0 0.0
    %2364 = vmatpush1.msra.mxu0 0.0
    %2365 = vmatprep.subr.mxu0 0.0
    %2366 = vmatpush1.msra.mxu0 0.0
    %2367 = vmatprep.subr.mxu0 0.0
    %2368 = vmatpush1.msra.mxu0 0.0
    %2369 = vmatprep.subr.mxu0 0.0
    %2370 = vmatpush1.msra.mxu0 0.0
    %2371 = vmatprep.subr.mxu0 0.0
    %2372 = vmatpush1.msra.mxu0 0.0
    %2373 = vmatprep.subr.mxu0 0.0
    %2374 = vmatpush1.msra.mxu0 0.0
    %2375 = vmatprep.subr.mxu0 0.0
    %2376 = vmatpush1.msra.mxu0 0.0
    %2377 = vmatprep.subr.mxu0 0.0
    %2378 = vmatpush1.msra.mxu0 0.0
    %2379 = vmatprep.subr.mxu0 0.0
    %2380 = vmatpush1.msra.mxu0 0.0
    %2381 = vmatprep.subr.mxu0 0.0
    %2382 = vmatpush1.msra.mxu0 0.0
    %2383 = vmatprep.subr.mxu0 0.0
    %2384 = vmatpush1.msra.mxu0 0.0
    %2385 = vmatprep.subr.mxu0 0.0
    %2386 = vmatpush1.msra.mxu0 0.0
    %2387 = vmatprep.mubr.f32.mxu0 0.0
    %2388 = vmatmul.mubr.f32.gmra.mrb[0].mxu0 %v2312
    %v2389 = vpop.f32.mrb[0].mxu0
    %v2390 = vadd.f32 %v2310, %v2389
    %v2391 = vpop.f32.mrb[0].mxu0
    %2392 = vmatprep.mubr.f32.mxu0 0.0
    %2393 = vmatmul.mubr.f32.gmra.mrb[0].mxu0 %v2315
    %v2394 = vpop.f32.mrb[0].mxu0
    %v2395 = vadd.f32 %v2310, %v2394
    %v2396 = vpop.f32.mrb[0].mxu0
    %2397 = vmatprep.mubr.f32.mxu0 0.0
    %2398 = vmatmul.mubr.f32.gmra.mrb[0].mxu0 %v2318
    %v2399 = vpop.f32.mrb[0].mxu0
    %v2400 = vadd.f32 %v2310, %v2399
    %v2401 = vpop.f32.mrb[0].mxu0
    %2402 = vmatprep.mubr.f32.mxu0 0.0
    %2403 = vmatmul.mubr.f32.gmra.mrb[0].mxu0 %v2321
    %v2404 = vpop.f32.mrb[0].mxu0
    %v2405 = vadd.f32 %v2310, %v2404
    %v2406 = vpop.f32.mrb[0].mxu0
    %2407 = vdwg.mxu0
    %v2408 = vlaneseq
    %v2409 = vshrl.u32 %v2408, 7
    %v2410 = vsub.s32 3, %v2409
    %v2411 = vrot.slane %v2200, %v2410
    %2416 = vrot.lane.b32.xlu0 %v2289, 96
    %v2417 = vpop.permute.xlu0 %2416
    %2418 = vrot.lane.b32.xlu0 %v2294, 96
    %v2419 = vpop.permute.xlu0 %2418
    %2420 = vrot.lane.b32.xlu0 %v2299, 96
    %v2421 = vpop.permute.xlu0 %2420
    %2422 = vrot.lane.b32.xlu0 %v2304, 96
    %v2423 = vpop.permute.xlu0 %2422
    %v2424 = vsel %vm360, %v2289, 0
    %v2426 = vsel %vm360, %v2294, 0
    %v2428 = vsel %vm360, %v2299, 0
    %v2430 = vsel %vm360, %v2304, 0
    %v2432 = vsel %vm360, %v2417, 0
    %v2434 = vsel %vm360, %v2419, 0
    %v2436 = vsel %vm360, %v2421, 0
    %v2438 = vsel %vm360, %v2423, 0
    %2440 = vmatprep.subr.mxu0 0.0
    %2441 = vmatpush1.xpose.msra.mxu0 %v2432
    %2442 = vmatprep.subr.mxu0 0.0
    %2443 = vmatpush1.xpose.msra.mxu0 %v2434
    %2444 = vmatprep.subr.mxu0 0.0
    %2445 = vmatpush1.xpose.msra.mxu0 %v2436
    %2446 = vmatprep.subr.mxu0 0.0
    %2447 = vmatpush1.xpose.msra.mxu0 %v2438
    %2448 = vmatprep.subr.mxu0 0.0
    %2449 = vmatpush1.xpose.msra.mxu0 0.0
    %2450 = vmatprep.subr.mxu0 0.0
    %2451 = vmatpush1.xpose.msra.mxu0 0.0
    %2452 = vmatprep.subr.mxu0 0.0
    %2453 = vmatpush1.xpose.msra.mxu0 0.0
    %2454 = vmatprep.subr.mxu0 0.0
    %2455 = vmatpush1.xpose.msra.mxu0 0.0
    %2456 = vmatprep.subr.mxu0 0.0
    %2457 = vmatpush1.xpose.msra.mxu0 0.0
    %2458 = vmatprep.subr.mxu0 0.0
    %2459 = vmatpush1.xpose.msra.mxu0 0.0
    %2460 = vmatprep.subr.mxu0 0.0
    %2461 = vmatpush1.xpose.msra.mxu0 0.0
    %2462 = vmatprep.subr.mxu0 0.0
    %2463 = vmatpush1.xpose.msra.mxu0 0.0
    %2464 = vmatprep.subr.mxu0 0.0
    %2465 = vmatpush1.xpose.msra.mxu0 0.0
    %2466 = vmatprep.subr.mxu0 0.0
    %2467 = vmatpush1.xpose.msra.mxu0 0.0
    %2468 = vmatprep.subr.mxu0 0.0
    %2469 = vmatpush1.xpose.msra.mxu0 0.0
    %2470 = vmatprep.subr.mxu0 0.0
    %2471 = vmatpush1.xpose.msra.mxu0 0.0
    %2472 = vmatprep.subr.mxu0 0.0
    %2473 = vmatpush1.xpose.msra.mxu0 0.0
    %2474 = vmatprep.subr.mxu0 0.0
    %2475 = vmatpush1.xpose.msra.mxu0 0.0
    %2476 = vmatprep.subr.mxu0 0.0
    %2477 = vmatpush1.xpose.msra.mxu0 0.0
    %2478 = vmatprep.subr.mxu0 0.0
    %2479 = vmatpush1.xpose.msra.mxu0 0.0
    %2480 = vmatprep.subr.mxu0 0.0
    %2481 = vmatpush1.xpose.msra.mxu0 0.0
    %2482 = vmatprep.subr.mxu0 0.0
    %2483 = vmatpush1.xpose.msra.mxu0 0.0
    %2484 = vmatprep.subr.mxu0 0.0
    %2485 = vmatpush1.xpose.msra.mxu0 0.0
    %2486 = vmatprep.subr.mxu0 0.0
    %2487 = vmatpush1.xpose.msra.mxu0 0.0
    %2488 = vmatprep.subr.mxu0 0.0
    %2489 = vmatpush1.xpose.msra.mxu0 0.0
    %2490 = vmatprep.subr.mxu0 0.0
    %2491 = vmatpush1.xpose.msra.mxu0 0.0
    %2492 = vmatprep.subr.mxu0 0.0
    %2493 = vmatpush1.xpose.msra.mxu0 0.0
    %2494 = vmatprep.subr.mxu0 0.0
    %2495 = vmatpush1.xpose.msra.mxu0 0.0
    %2496 = vmatprep.subr.mxu0 0.0
    %2497 = vmatpush1.xpose.msra.mxu0 0.0
    %2498 = vmatprep.subr.mxu0 0.0
    %2499 = vmatpush1.xpose.msra.mxu0 0.0
    %2500 = vmatprep.subr.mxu0 0.0
    %2501 = vmatpush1.xpose.msra.mxu0 0.0
    %2502 = vmatprep.subr.mxu0 0.0
    %2503 = vmatpush1.xpose.msra.mxu0 0.0
    %2504 = vmatprep.mubr.f32.mxu0 0.0
    %2505 = vmatmul.mubr.f32.gmra.mrb[0].mxu0 %v2424
    %v2506 = vpop.f32.mrb[0].mxu0
    %v2507 = vadd.f32 %v107, %v2506
    %v2508 = vpop.f32.mrb[0].mxu0
    %2509 = vmatprep.mubr.f32.mxu0 0.0
    %2510 = vmatmul.mubr.f32.gmra.mrb[0].mxu0 %v2426
    %v2511 = vpop.f32.mrb[0].mxu0
    %v2512 = vadd.f32 %v108, %v2511
    %v2513 = vpop.f32.mrb[0].mxu0
    %2514 = vmatprep.mubr.f32.mxu0 0.0
    %2515 = vmatmul.mubr.f32.gmra.mrb[0].mxu0 %v2428
    %v2516 = vpop.f32.mrb[0].mxu0
    %v2517 = vadd.f32 %v109, %v2516
    %v2518 = vpop.f32.mrb[0].mxu0
    %2519 = vmatprep.mubr.f32.mxu0 0.0
    %2520 = vmatmul.mubr.f32.gmra.mrb[0].mxu0 %v2430
    %v2521 = vpop.f32.mrb[0].mxu0
    %v2522 = vadd.f32 %v110, %v2521
    %v2523 = vpop.f32.mrb[0].mxu0
    %2524 = vdwg.mxu0
    %v2525 = vsel %vm145, %v2507, -inf
    %2526 = vmax.xlane.f32.xlu0 %v2525
    %v2527 = vpop.xlane.xlu0 %2526
    %v2528 = vsel %vm145, %v2512, -inf
    %2529 = vmax.xlane.f32.xlu0 %v2528
    %v2530 = vpop.xlane.xlu0 %2529
    %v2531 = vsel %vm145, %v2517, -inf
    %2532 = vmax.xlane.f32.xlu0 %v2531
    %v2533 = vpop.xlane.xlu0 %2532
    %v2534 = vsel %vm145, %v2522, -inf
    %2535 = vmax.xlane.f32.xlu0 %v2534
    %v2536 = vpop.xlane.xlu0 %2535
    %v2537 = vsub.f32 %v2507, %v2527
    %v2538 = vsub.f32 %v2512, %v2530
    %v2539 = vsub.f32 %v2517, %v2533
    %v2540 = vsub.f32 %v2522, %v2536
    %v2541 = vmul.f32 %v2537, 1.442695
    %v2542 = vpow.pop %v2541
    %v2543 = vmul.f32 %v2538, 1.442695
    %v2544 = vpow.pop %v2543
    %v2545 = vmul.f32 %v2539, 1.442695
    %v2546 = vpow.pop %v2545
    %v2547 = vmul.f32 %v2540, 1.442695
    %v2548 = vpow.pop %v2547
    %v2549 = vsel %vm145, %v2542, 0.0
    %2550 = vadd.xlane.f32.xlu0 %v2549
    %v2551 = vpop.xlane.xlu0 %2550
    %v2552 = vsel %vm145, %v2544, 0.0
    %2553 = vadd.xlane.f32.xlu0 %v2552
    %v2554 = vpop.xlane.xlu0 %2553
    %v2555 = vsel %vm145, %v2546, 0.0
    %2556 = vadd.xlane.f32.xlu0 %v2555
    %v2557 = vpop.xlane.xlu0 %2556
    %v2558 = vsel %vm145, %v2548, 0.0
    %2559 = vadd.xlane.f32.xlu0 %v2558
    %v2560 = vpop.xlane.xlu0 %2559
    %v2561 = vrcp.pop %v2551
    %v2562 = vrcp.pop %v2554
    %v2563 = vrcp.pop %v2557
    %v2564 = vrcp.pop %v2560
    %v2565 = vmul.f32 %v2542, %v2561
    %v2566 = vmul.f32 %v2544, %v2562
    %v2567 = vmul.f32 %v2546, %v2563
    %v2568 = vmul.f32 %v2548, %v2564
    %v2570 = vsel %vm145, %v2565, 0
    %v2573 = vsel %vm145, %v2566, 0
    %v2576 = vsel %vm145, %v2567, 0
    %v2579 = vsel %vm145, %v2568, 0
    %2581 = vmatprep.subr.mxu0 0.0
    %2582 = vmatpush1.msra.mxu0 %v2390
    %2583 = vmatprep.subr.mxu0 0.0
    %2584 = vmatpush1.msra.mxu0 %v2395
    %2585 = vmatprep.subr.mxu0 0.0
    %2586 = vmatpush1.msra.mxu0 %v2400
    %2587 = vmatprep.subr.mxu0 0.0
    %2588 = vmatpush1.msra.mxu0 %v2405
    %2589 = vmatprep.subr.mxu0 0.0
    %2590 = vmatpush1.msra.mxu0 0.0
    %2591 = vmatprep.subr.mxu0 0.0
    %2592 = vmatpush1.msra.mxu0 0.0
    %2593 = vmatprep.subr.mxu0 0.0
    %2594 = vmatpush1.msra.mxu0 0.0
    %2595 = vmatprep.subr.mxu0 0.0
    %2596 = vmatpush1.msra.mxu0 0.0
    %2597 = vmatprep.subr.mxu0 0.0
    %2598 = vmatpush1.msra.mxu0 0.0
    %2599 = vmatprep.subr.mxu0 0.0
    %2600 = vmatpush1.msra.mxu0 0.0
    %2601 = vmatprep.subr.mxu0 0.0
    %2602 = vmatpush1.msra.mxu0 0.0
    %2603 = vmatprep.subr.mxu0 0.0
    %2604 = vmatpush1.msra.mxu0 0.0
    %2605 = vmatprep.subr.mxu0 0.0
    %2606 = vmatpush1.msra.mxu0 0.0
    %2607 = vmatprep.subr.mxu0 0.0
    %2608 = vmatpush1.msra.mxu0 0.0
    %2609 = vmatprep.subr.mxu0 0.0
    %2610 = vmatpush1.msra.mxu0 0.0
    %2611 = vmatprep.subr.mxu0 0.0
    %2612 = vmatpush1.msra.mxu0 0.0
    %2613 = vmatprep.subr.mxu0 0.0
    %2614 = vmatpush1.msra.mxu0 0.0
    %2615 = vmatprep.subr.mxu0 0.0
    %2616 = vmatpush1.msra.mxu0 0.0
    %2617 = vmatprep.subr.mxu0 0.0
    %2618 = vmatpush1.msra.mxu0 0.0
    %2619 = vmatprep.subr.mxu0 0.0
    %2620 = vmatpush1.msra.mxu0 0.0
    %2621 = vmatprep.subr.mxu0 0.0
    %2622 = vmatpush1.msra.mxu0 0.0
    %2623 = vmatprep.subr.mxu0 0.0
    %2624 = vmatpush1.msra.mxu0 0.0
    %2625 = vmatprep.subr.mxu0 0.0
    %2626 = vmatpush1.msra.mxu0 0.0
    %2627 = vmatprep.subr.mxu0 0.0
    %2628 = vmatpush1.msra.mxu0 0.0
    %2629 = vmatprep.subr.mxu0 0.0
    %2630 = vmatpush1.msra.mxu0 0.0
    %2631 = vmatprep.subr.mxu0 0.0
    %2632 = vmatpush1.msra.mxu0 0.0
    %2633 = vmatprep.subr.mxu0 0.0
    %2634 = vmatpush1.msra.mxu0 0.0
    %2635 = vmatprep.subr.mxu0 0.0
    %2636 = vmatpush1.msra.mxu0 0.0
    %2637 = vmatprep.subr.mxu0 0.0
    %2638 = vmatpush1.msra.mxu0 0.0
    %2639 = vmatprep.subr.mxu0 0.0
    %2640 = vmatpush1.msra.mxu0 0.0
    %2641 = vmatprep.subr.mxu0 0.0
    %2642 = vmatpush1.msra.mxu0 0.0
    %2643 = vmatprep.subr.mxu0 0.0
    %2644 = vmatpush1.msra.mxu0 0.0
    %2645 = vmatprep.mubr.f32.mxu0 0.0
    %2646 = vmatmul.mubr.f32.gmra.mrb[0].mxu0 %v2570
    %v2647 = vpop.f32.mrb[0].mxu0
    %v2648 = vadd.f32 0.0, %v2647
    %v2649 = vpop.f32.mrb[0].mxu0
    %2650 = vmatprep.mubr.f32.mxu0 0.0
    %2651 = vmatmul.mubr.f32.gmra.mrb[0].mxu0 %v2573
    %v2652 = vpop.f32.mrb[0].mxu0
    %v2653 = vadd.f32 0.0, %v2652
    %v2654 = vpop.f32.mrb[0].mxu0
    %2655 = vmatprep.mubr.f32.mxu0 0.0
    %2656 = vmatmul.mubr.f32.gmra.mrb[0].mxu0 %v2576
    %v2657 = vpop.f32.mrb[0].mxu0
    %v2658 = vadd.f32 0.0, %v2657
    %v2659 = vpop.f32.mrb[0].mxu0
    %2660 = vmatprep.mubr.f32.mxu0 0.0
    %2661 = vmatmul.mubr.f32.gmra.mrb[0].mxu0 %v2579
    %v2662 = vpop.f32.mrb[0].mxu0
    %v2663 = vadd.f32 0.0, %v2662
    %v2664 = vpop.f32.mrb[0].mxu0
    %2665 = vdwg.mxu0
    %v2667 = vsel %vm360, %v2648, 0
    %v2670 = vsel %vm360, %v2653, 0
    %v2673 = vsel %vm360, %v2658, 0
    %v2676 = vsel %vm360, %v2663, 0
    %2678 = vmatprep.subr.mxu0 0.0
    %2679 = vmatpush1.msra.mxu0 %v2187
    %2680 = vmatprep.subr.mxu0 0.0
    %2681 = vmatpush1.msra.mxu0 0.0
    %2682 = vmatprep.subr.mxu0 0.0
    %2683 = vmatpush1.msra.mxu0 0.0
    %2684 = vmatprep.subr.mxu0 0.0
    %2685 = vmatpush1.msra.mxu0 0.0
    %2686 = vmatprep.subr.mxu0 0.0
    %2687 = vmatpush1.msra.mxu0 0.0
    %2688 = vmatprep.subr.mxu0 0.0
    %2689 = vmatpush1.msra.mxu0 0.0
    %2690 = vmatprep.subr.mxu0 0.0
    %2691 = vmatpush1.msra.mxu0 0.0
    %2692 = vmatprep.subr.mxu0 0.0
    %2693 = vmatpush1.msra.mxu0 0.0
    %2694 = vmatprep.subr.mxu0 0.0
    %2695 = vmatpush1.msra.mxu0 0.0
    %2696 = vmatprep.subr.mxu0 0.0
    %2697 = vmatpush1.msra.mxu0 0.0
    %2698 = vmatprep.subr.mxu0 0.0
    %2699 = vmatpush1.msra.mxu0 0.0
    %2700 = vmatprep.subr.mxu0 0.0
    %2701 = vmatpush1.msra.mxu0 0.0
    %2702 = vmatprep.subr.mxu0 0.0
    %2703 = vmatpush1.msra.mxu0 0.0
    %2704 = vmatprep.subr.mxu0 0.0
    %2705 = vmatpush1.msra.mxu0 0.0
    %2706 = vmatprep.subr.mxu0 0.0
    %2707 = vmatpush1.msra.mxu0 0.0
    %2708 = vmatprep.subr.mxu0 0.0
    %2709 = vmatpush1.msra.mxu0 0.0
    %2710 = vmatprep.subr.mxu0 0.0
    %2711 = vmatpush1.msra.mxu0 0.0
    %2712 = vmatprep.subr.mxu0 0.0
    %2713 = vmatpush1.msra.mxu0 0.0
    %2714 = vmatprep.subr.mxu0 0.0
    %2715 = vmatpush1.msra.mxu0 0.0
    %2716 = vmatprep.subr.mxu0 0.0
    %2717 = vmatpush1.msra.mxu0 0.0
    %2718 = vmatprep.subr.mxu0 0.0
    %2719 = vmatpush1.msra.mxu0 0.0
    %2720 = vmatprep.subr.mxu0 0.0
    %2721 = vmatpush1.msra.mxu0 0.0
    %2722 = vmatprep.subr.mxu0 0.0
    %2723 = vmatpush1.msra.mxu0 0.0
    %2724 = vmatprep.subr.mxu0 0.0
    %2725 = vmatpush1.msra.mxu0 0.0
    %2726 = vmatprep.subr.mxu0 0.0
    %2727 = vmatpush1.msra.mxu0 0.0
    %2728 = vmatprep.subr.mxu0 0.0
    %2729 = vmatpush1.msra.mxu0 0.0
    %2730 = vmatprep.subr.mxu0 0.0
    %2731 = vmatpush1.msra.mxu0 0.0
    %2732 = vmatprep.subr.mxu0 0.0
    %2733 = vmatpush1.msra.mxu0 0.0
    %2734 = vmatprep.subr.mxu0 0.0
    %2735 = vmatpush1.msra.mxu0 0.0
    %2736 = vmatprep.subr.mxu0 0.0
    %2737 = vmatpush1.msra.mxu0 0.0
    %2738 = vmatprep.subr.mxu0 0.0
    %2739 = vmatpush1.msra.mxu0 0.0
    %2740 = vmatprep.subr.mxu0 0.0
    %2741 = vmatpush1.msra.mxu0 0.0
    %2742 = vmatprep.mubr.f32.mxu0 0.0
    %2743 = vmatmul.mubr.f32.gmra.mrb[0].mxu0 %v2667
    %v2744 = vpop.f32.mrb[0].mxu0
    %v2745 = vadd.f32 0.0, %v2744
    %v2746 = vpop.f32.mrb[0].mxu0
    %2747 = vmatprep.mubr.f32.mxu0 0.0
    %2748 = vmatmul.mubr.f32.gmra.mrb[0].mxu0 %v2670
    %v2749 = vpop.f32.mrb[0].mxu0
    %v2750 = vadd.f32 0.0, %v2749
    %v2751 = vpop.f32.mrb[0].mxu0
    %2752 = vmatprep.mubr.f32.mxu0 0.0
    %2753 = vmatmul.mubr.f32.gmra.mrb[0].mxu0 %v2673
    %v2754 = vpop.f32.mrb[0].mxu0
    %v2755 = vadd.f32 0.0, %v2754
    %v2756 = vpop.f32.mrb[0].mxu0
    %2757 = vmatprep.mubr.f32.mxu0 0.0
    %2758 = vmatmul.mubr.f32.gmra.mrb[0].mxu0 %v2676
    %v2759 = vpop.f32.mrb[0].mxu0
    %v2760 = vadd.f32 0.0, %v2759
    %v2761 = vpop.f32.mrb[0].mxu0
    %2762 = vdwg.mxu0
    %v2763 = vadd.f32 %v2411, %v2745
    %v2764 = vadd.f32 %v2411, %v2750
    %v2765 = vadd.f32 %v2411, %v2755
    %v2766 = vadd.f32 %v2411, %v2760
    %2767 = vrot.lane.b32.xlu0 %v2289, 120
    %v2768 = vpop.permute.xlu0 %2767
    %2769 = vrot.lane.b32.xlu0 %v2294, 120
    %v2770 = vpop.permute.xlu0 %2769
    %2771 = vrot.lane.b32.xlu0 %v2299, 120
    %v2772 = vpop.permute.xlu0 %2771
    %2773 = vrot.lane.b32.xlu0 %v2304, 120
    %v2774 = vpop.permute.xlu0 %2773
    %2775 = vrot.lane.b32.xlu0 %v2289, 88
    %v2776 = vpop.permute.xlu0 %2775
    %2777 = vrot.lane.b32.xlu0 %v2294, 88
    %v2778 = vpop.permute.xlu0 %2777
    %2779 = vrot.lane.b32.xlu0 %v2299, 88
    %v2780 = vpop.permute.xlu0 %2779
    %2781 = vrot.lane.b32.xlu0 %v2304, 88
    %v2782 = vpop.permute.xlu0 %2781
    %v2783 = vsel %vm360, %v2768, 0
    %v2785 = vsel %vm360, %v2770, 0
    %v2787 = vsel %vm360, %v2772, 0
    %v2789 = vsel %vm360, %v2774, 0
    %v2791 = vsel %vm360, %v2776, 0
    %v2793 = vsel %vm360, %v2778, 0
    %v2795 = vsel %vm360, %v2780, 0
    %v2797 = vsel %vm360, %v2782, 0
    %2799 = vmatprep.subr.mxu0 0.0
    %2800 = vmatpush1.xpose.msra.mxu0 %v2791
    %2801 = vmatprep.subr.mxu0 0.0
    %2802 = vmatpush1.xpose.msra.mxu0 %v2793
    %2803 = vmatprep.subr.mxu0 0.0
    %2804 = vmatpush1.xpose.msra.mxu0 %v2795
    %2805 = vmatprep.subr.mxu0 0.0
    %2806 = vmatpush1.xpose.msra.mxu0 %v2797
    %2807 = vmatprep.subr.mxu0 0.0
    %2808 = vmatpush1.xpose.msra.mxu0 0.0
    %2809 = vmatprep.subr.mxu0 0.0
    %2810 = vmatpush1.xpose.msra.mxu0 0.0
    %2811 = vmatprep.subr.mxu0 0.0
    %2812 = vmatpush1.xpose.msra.mxu0 0.0
    %2813 = vmatprep.subr.mxu0 0.0
    %2814 = vmatpush1.xpose.msra.mxu0 0.0
    %2815 = vmatprep.subr.mxu0 0.0
    %2816 = vmatpush1.xpose.msra.mxu0 0.0
    %2817 = vmatprep.subr.mxu0 0.0
    %2818 = vmatpush1.xpose.msra.mxu0 0.0
    %2819 = vmatprep.subr.mxu0 0.0
    %2820 = vmatpush1.xpose.msra.mxu0 0.0
    %2821 = vmatprep.subr.mxu0 0.0
    %2822 = vmatpush1.xpose.msra.mxu0 0.0
    %2823 = vmatprep.subr.mxu0 0.0
    %2824 = vmatpush1.xpose.msra.mxu0 0.0
    %2825 = vmatprep.subr.mxu0 0.0
    %2826 = vmatpush1.xpose.msra.mxu0 0.0
    %2827 = vmatprep.subr.mxu0 0.0
    %2828 = vmatpush1.xpose.msra.mxu0 0.0
    %2829 = vmatprep.subr.mxu0 0.0
    %2830 = vmatpush1.xpose.msra.mxu0 0.0
    %2831 = vmatprep.subr.mxu0 0.0
    %2832 = vmatpush1.xpose.msra.mxu0 0.0
    %2833 = vmatprep.subr.mxu0 0.0
    %2834 = vmatpush1.xpose.msra.mxu0 0.0
    %2835 = vmatprep.subr.mxu0 0.0
    %2836 = vmatpush1.xpose.msra.mxu0 0.0
    %2837 = vmatprep.subr.mxu0 0.0
    %2838 = vmatpush1.xpose.msra.mxu0 0.0
    %2839 = vmatprep.subr.mxu0 0.0
    %2840 = vmatpush1.xpose.msra.mxu0 0.0
    %2841 = vmatprep.subr.mxu0 0.0
    %2842 = vmatpush1.xpose.msra.mxu0 0.0
    %2843 = vmatprep.subr.mxu0 0.0
    %2844 = vmatpush1.xpose.msra.mxu0 0.0
    %2845 = vmatprep.subr.mxu0 0.0
    %2846 = vmatpush1.xpose.msra.mxu0 0.0
    %2847 = vmatprep.subr.mxu0 0.0
    %2848 = vmatpush1.xpose.msra.mxu0 0.0
    %2849 = vmatprep.subr.mxu0 0.0
    %2850 = vmatpush1.xpose.msra.mxu0 0.0
    %2851 = vmatprep.subr.mxu0 0.0
    %2852 = vmatpush1.xpose.msra.mxu0 0.0
    %2853 = vmatprep.subr.mxu0 0.0
    %2854 = vmatpush1.xpose.msra.mxu0 0.0
    %2855 = vmatprep.subr.mxu0 0.0
    %2856 = vmatpush1.xpose.msra.mxu0 0.0
    %2857 = vmatprep.subr.mxu0 0.0
    %2858 = vmatpush1.xpose.msra.mxu0 0.0
    %2859 = vmatprep.subr.mxu0 0.0
    %2860 = vmatpush1.xpose.msra.mxu0 0.0
    %2861 = vmatprep.subr.mxu0 0.0
    %2862 = vmatpush1.xpose.msra.mxu0 0.0
    %2863 = vmatprep.mubr.f32.mxu0 0.0
    %2864 = vmatmul.mubr.f32.gmra.mrb[0].mxu0 %v2783
    %v2865 = vpop.f32.mrb[0].mxu0
    %v2866 = vadd.f32 %v107, %v2865
    %v2867 = vpop.f32.mrb[0].mxu0
    %2868 = vmatprep.mubr.f32.mxu0 0.0
    %2869 = vmatmul.mubr.f32.gmra.mrb[0].mxu0 %v2785
    %v2870 = vpop.f32.mrb[0].mxu0
    %v2871 = vadd.f32 %v108, %v2870
    %v2872 = vpop.f32.mrb[0].mxu0
    %2873 = vmatprep.mubr.f32.mxu0 0.0
    %2874 = vmatmul.mubr.f32.gmra.mrb[0].mxu0 %v2787
    %v2875 = vpop.f32.mrb[0].mxu0
    %v2876 = vadd.f32 %v109, %v2875
    %v2877 = vpop.f32.mrb[0].mxu0
    %2878 = vmatprep.mubr.f32.mxu0 0.0
    %2879 = vmatmul.mubr.f32.gmra.mrb[0].mxu0 %v2789
    %v2880 = vpop.f32.mrb[0].mxu0
    %v2881 = vadd.f32 %v110, %v2880
    %v2882 = vpop.f32.mrb[0].mxu0
    %2883 = vdwg.mxu0
    %v2884 = vsel %vm145, %v2866, -inf
    %2885 = vmax.xlane.f32.xlu0 %v2884
    %v2886 = vpop.xlane.xlu0 %2885
    %v2887 = vsel %vm145, %v2871, -inf
    %2888 = vmax.xlane.f32.xlu0 %v2887
    %v2889 = vpop.xlane.xlu0 %2888
    %v2890 = vsel %vm145, %v2876, -inf
    %2891 = vmax.xlane.f32.xlu0 %v2890
    %v2892 = vpop.xlane.xlu0 %2891
    %v2893 = vsel %vm145, %v2881, -inf
    %2894 = vmax.xlane.f32.xlu0 %v2893
    %v2895 = vpop.xlane.xlu0 %2894
    %v2896 = vsub.f32 %v2866, %v2886
    %v2897 = vsub.f32 %v2871, %v2889
    %v2898 = vsub.f32 %v2876, %v2892
    %v2899 = vsub.f32 %v2881, %v2895
    %v2900 = vmul.f32 %v2896, 1.442695
    %v2901 = vpow.pop %v2900
    %v2902 = vmul.f32 %v2897, 1.442695
    %v2903 = vpow.pop %v2902
    %v2904 = vmul.f32 %v2898, 1.442695
    %v2905 = vpow.pop %v2904
    %v2906 = vmul.f32 %v2899, 1.442695
    %v2907 = vpow.pop %v2906
    %v2908 = vsel %vm145, %v2901, 0.0
    %2909 = vadd.xlane.f32.xlu0 %v2908
    %v2910 = vpop.xlane.xlu0 %2909
    %v2911 = vsel %vm145, %v2903, 0.0
    %2912 = vadd.xlane.f32.xlu0 %v2911
    %v2913 = vpop.xlane.xlu0 %2912
    %v2914 = vsel %vm145, %v2905, 0.0
    %2915 = vadd.xlane.f32.xlu0 %v2914
    %v2916 = vpop.xlane.xlu0 %2915
    %v2917 = vsel %vm145, %v2907, 0.0
    %2918 = vadd.xlane.f32.xlu0 %v2917
    %v2919 = vpop.xlane.xlu0 %2918
    %v2920 = vrcp.pop %v2910
    %v2921 = vrcp.pop %v2913
    %v2922 = vrcp.pop %v2916
    %v2923 = vrcp.pop %v2919
    %v2924 = vmul.f32 %v2901, %v2920
    %v2925 = vmul.f32 %v2903, %v2921
    %v2926 = vmul.f32 %v2905, %v2922
    %v2927 = vmul.f32 %v2907, %v2923
    %2932 = vrot.lane.b32.xlu0 %v2390, 120
    %v2933 = vpop.permute.xlu0 %2932
    %2934 = vrot.lane.b32.xlu0 %v2395, 120
    %v2935 = vpop.permute.xlu0 %2934
    %2936 = vrot.lane.b32.xlu0 %v2400, 120
    %v2937 = vpop.permute.xlu0 %2936
    %2938 = vrot.lane.b32.xlu0 %v2405, 120
    %v2939 = vpop.permute.xlu0 %2938
    %v2945 = vsel %vm145, %v2924, 0
    %v2948 = vsel %vm145, %v2925, 0
    %v2951 = vsel %vm145, %v2926, 0
    %v2954 = vsel %vm145, %v2927, 0
    %2956 = vmatprep.subr.mxu0 0.0
    %2957 = vmatpush1.msra.mxu0 %v2933
    %2958 = vmatprep.subr.mxu0 0.0
    %2959 = vmatpush1.msra.mxu0 %v2935
    %2960 = vmatprep.subr.mxu0 0.0
    %2961 = vmatpush1.msra.mxu0 %v2937
    %2962 = vmatprep.subr.mxu0 0.0
    %2963 = vmatpush1.msra.mxu0 %v2939
    %2964 = vmatprep.subr.mxu0 0.0
    %2965 = vmatpush1.msra.mxu0 0.0
    %2966 = vmatprep.subr.mxu0 0.0
    %2967 = vmatpush1.msra.mxu0 0.0
    %2968 = vmatprep.subr.mxu0 0.0
    %2969 = vmatpush1.msra.mxu0 0.0
    %2970 = vmatprep.subr.mxu0 0.0
    %2971 = vmatpush1.msra.mxu0 0.0
    %2972 = vmatprep.subr.mxu0 0.0
    %2973 = vmatpush1.msra.mxu0 0.0
    %2974 = vmatprep.subr.mxu0 0.0
    %2975 = vmatpush1.msra.mxu0 0.0
    %2976 = vmatprep.subr.mxu0 0.0
    %2977 = vmatpush1.msra.mxu0 0.0
    %2978 = vmatprep.subr.mxu0 0.0
    %2979 = vmatpush1.msra.mxu0 0.0
    %2980 = vmatprep.subr.mxu0 0.0
    %2981 = vmatpush1.msra.mxu0 0.0
    %2982 = vmatprep.subr.mxu0 0.0
    %2983 = vmatpush1.msra.mxu0 0.0
    %2984 = vmatprep.subr.mxu0 0.0
    %2985 = vmatpush1.msra.mxu0 0.0
    %2986 = vmatprep.subr.mxu0 0.0
    %2987 = vmatpush1.msra.mxu0 0.0
    %2988 = vmatprep.subr.mxu0 0.0
    %2989 = vmatpush1.msra.mxu0 0.0
    %2990 = vmatprep.subr.mxu0 0.0
    %2991 = vmatpush1.msra.mxu0 0.0
    %2992 = vmatprep.subr.mxu0 0.0
    %2993 = vmatpush1.msra.mxu0 0.0
    %2994 = vmatprep.subr.mxu0 0.0
    %2995 = vmatpush1.msra.mxu0 0.0
    %2996 = vmatprep.subr.mxu0 0.0
    %2997 = vmatpush1.msra.mxu0 0.0
    %2998 = vmatprep.subr.mxu0 0.0
    %2999 = vmatpush1.msra.mxu0 0.0
    %3000 = vmatprep.subr.mxu0 0.0
    %3001 = vmatpush1.msra.mxu0 0.0
    %3002 = vmatprep.subr.mxu0 0.0
    %3003 = vmatpush1.msra.mxu0 0.0
    %3004 = vmatprep.subr.mxu0 0.0
    %3005 = vmatpush1.msra.mxu0 0.0
    %3006 = vmatprep.subr.mxu0 0.0
    %3007 = vmatpush1.msra.mxu0 0.0
    %3008 = vmatprep.subr.mxu0 0.0
    %3009 = vmatpush1.msra.mxu0 0.0
    %3010 = vmatprep.subr.mxu0 0.0
    %3011 = vmatpush1.msra.mxu0 0.0
    %3012 = vmatprep.subr.mxu0 0.0
    %3013 = vmatpush1.msra.mxu0 0.0
    %3014 = vmatprep.subr.mxu0 0.0
    %3015 = vmatpush1.msra.mxu0 0.0
    %3016 = vmatprep.subr.mxu0 0.0
    %3017 = vmatpush1.msra.mxu0 0.0
    %3018 = vmatprep.subr.mxu0 0.0
    %3019 = vmatpush1.msra.mxu0 0.0
    %3020 = vmatprep.mubr.f32.mxu0 0.0
    %3021 = vmatmul.mubr.f32.gmra.mrb[0].mxu0 %v2945
    %v3022 = vpop.f32.mrb[0].mxu0
    %v3023 = vadd.f32 0.0, %v3022
    %v3024 = vpop.f32.mrb[0].mxu0
    %3025 = vmatprep.mubr.f32.mxu0 0.0
    %3026 = vmatmul.mubr.f32.gmra.mrb[0].mxu0 %v2948
    %v3027 = vpop.f32.mrb[0].mxu0
    %v3028 = vadd.f32 0.0, %v3027
    %v3029 = vpop.f32.mrb[0].mxu0
    %3030 = vmatprep.mubr.f32.mxu0 0.0
    %3031 = vmatmul.mubr.f32.gmra.mrb[0].mxu0 %v2951
    %v3032 = vpop.f32.mrb[0].mxu0
    %v3033 = vadd.f32 0.0, %v3032
    %v3034 = vpop.f32.mrb[0].mxu0
    %3035 = vmatprep.mubr.f32.mxu0 0.0
    %3036 = vmatmul.mubr.f32.gmra.mrb[0].mxu0 %v2954
    %v3037 = vpop.f32.mrb[0].mxu0
    %v3038 = vadd.f32 0.0, %v3037
    %v3039 = vpop.f32.mrb[0].mxu0
    %3040 = vdwg.mxu0
    %v3042 = vsel %vm360, %v3023, 0
    %v3045 = vsel %vm360, %v3028, 0
    %v3048 = vsel %vm360, %v3033, 0
    %v3051 = vsel %vm360, %v3038, 0
    %3053 = vmatprep.subr.mxu0 0.0
    %3054 = vmatpush1.msra.mxu0 %v2188
    %3055 = vmatprep.subr.mxu0 0.0
    %3056 = vmatpush1.msra.mxu0 0.0
    %3057 = vmatprep.subr.mxu0 0.0
    %3058 = vmatpush1.msra.mxu0 0.0
    %3059 = vmatprep.subr.mxu0 0.0
    %3060 = vmatpush1.msra.mxu0 0.0
    %3061 = vmatprep.subr.mxu0 0.0
    %3062 = vmatpush1.msra.mxu0 0.0
    %3063 = vmatprep.subr.mxu0 0.0
    %3064 = vmatpush1.msra.mxu0 0.0
    %3065 = vmatprep.subr.mxu0 0.0
    %3066 = vmatpush1.msra.mxu0 0.0
    %3067 = vmatprep.subr.mxu0 0.0
    %3068 = vmatpush1.msra.mxu0 0.0
    %3069 = vmatprep.subr.mxu0 0.0
    %3070 = vmatpush1.msra.mxu0 0.0
    %3071 = vmatprep.subr.mxu0 0.0
    %3072 = vmatpush1.msra.mxu0 0.0
    %3073 = vmatprep.subr.mxu0 0.0
    %3074 = vmatpush1.msra.mxu0 0.0
    %3075 = vmatprep.subr.mxu0 0.0
    %3076 = vmatpush1.msra.mxu0 0.0
    %3077 = vmatprep.subr.mxu0 0.0
    %3078 = vmatpush1.msra.mxu0 0.0
    %3079 = vmatprep.subr.mxu0 0.0
    %3080 = vmatpush1.msra.mxu0 0.0
    %3081 = vmatprep.subr.mxu0 0.0
    %3082 = vmatpush1.msra.mxu0 0.0
    %3083 = vmatprep.subr.mxu0 0.0
    %3084 = vmatpush1.msra.mxu0 0.0
    %3085 = vmatprep.subr.mxu0 0.0
    %3086 = vmatpush1.msra.mxu0 0.0
    %3087 = vmatprep.subr.mxu0 0.0
    %3088 = vmatpush1.msra.mxu0 0.0
    %3089 = vmatprep.subr.mxu0 0.0
    %3090 = vmatpush1.msra.mxu0 0.0
    %3091 = vmatprep.subr.mxu0 0.0
    %3092 = vmatpush1.msra.mxu0 0.0
    %3093 = vmatprep.subr.mxu0 0.0
    %3094 = vmatpush1.msra.mxu0 0.0
    %3095 = vmatprep.subr.mxu0 0.0
    %3096 = vmatpush1.msra.mxu0 0.0
    %3097 = vmatprep.subr.mxu0 0.0
    %3098 = vmatpush1.msra.mxu0 0.0
    %3099 = vmatprep.subr.mxu0 0.0
    %3100 = vmatpush1.msra.mxu0 0.0
    %3101 = vmatprep.subr.mxu0 0.0
    %3102 = vmatpush1.msra.mxu0 0.0
    %3103 = vmatprep.subr.mxu0 0.0
    %3104 = vmatpush1.msra.mxu0 0.0
    %3105 = vmatprep.subr.mxu0 0.0
    %3106 = vmatpush1.msra.mxu0 0.0
    %3107 = vmatprep.subr.mxu0 0.0
    %3108 = vmatpush1.msra.mxu0 0.0
    %3109 = vmatprep.subr.mxu0 0.0
    %3110 = vmatpush1.msra.mxu0 0.0
    %3111 = vmatprep.subr.mxu0 0.0
    %3112 = vmatpush1.msra.mxu0 0.0
    %3113 = vmatprep.subr.mxu0 0.0
    %3114 = vmatpush1.msra.mxu0 0.0
    %3115 = vmatprep.subr.mxu0 0.0
    %3116 = vmatpush1.msra.mxu0 0.0
    %3117 = vmatprep.mubr.f32.mxu0 0.0
    %3118 = vmatmul.mubr.f32.gmra.mrb[0].mxu0 %v3042
    %v3119 = vpop.f32.mrb[0].mxu0
    %v3120 = vadd.f32 0.0, %v3119
    %v3121 = vpop.f32.mrb[0].mxu0
    %3122 = vmatprep.mubr.f32.mxu0 0.0
    %3123 = vmatmul.mubr.f32.gmra.mrb[0].mxu0 %v3045
    %v3124 = vpop.f32.mrb[0].mxu0
    %v3125 = vadd.f32 0.0, %v3124
    %v3126 = vpop.f32.mrb[0].mxu0
    %3127 = vmatprep.mubr.f32.mxu0 0.0
    %3128 = vmatmul.mubr.f32.gmra.mrb[0].mxu0 %v3048
    %v3129 = vpop.f32.mrb[0].mxu0
    %v3130 = vadd.f32 0.0, %v3129
    %v3131 = vpop.f32.mrb[0].mxu0
    %3132 = vmatprep.mubr.f32.mxu0 0.0
    %3133 = vmatmul.mubr.f32.gmra.mrb[0].mxu0 %v3051
    %v3134 = vpop.f32.mrb[0].mxu0
    %v3135 = vadd.f32 0.0, %v3134
    %v3136 = vpop.f32.mrb[0].mxu0
    %3137 = vdwg.mxu0
    %v3138 = vadd.f32 %v2763, %v3120
    %v3139 = vadd.f32 %v2764, %v3125
    %v3140 = vadd.f32 %v2765, %v3130
    %v3141 = vadd.f32 %v2766, %v3135
    %3142 = vrot.lane.b32.xlu0 %v2289, 112
    %v3143 = vpop.permute.xlu0 %3142
    %3144 = vrot.lane.b32.xlu0 %v2294, 112
    %v3145 = vpop.permute.xlu0 %3144
    %3146 = vrot.lane.b32.xlu0 %v2299, 112
    %v3147 = vpop.permute.xlu0 %3146
    %3148 = vrot.lane.b32.xlu0 %v2304, 112
    %v3149 = vpop.permute.xlu0 %3148
    %3150 = vrot.lane.b32.xlu0 %v2289, 80
    %v3151 = vpop.permute.xlu0 %3150
    %3152 = vrot.lane.b32.xlu0 %v2294, 80
    %v3153 = vpop.permute.xlu0 %3152
    %3154 = vrot.lane.b32.xlu0 %v2299, 80
    %v3155 = vpop.permute.xlu0 %3154
    %3156 = vrot.lane.b32.xlu0 %v2304, 80
    %v3157 = vpop.permute.xlu0 %3156
    %v3158 = vsel %vm360, %v3143, 0
    %v3160 = vsel %vm360, %v3145, 0
    %v3162 = vsel %vm360, %v3147, 0
    %v3164 = vsel %vm360, %v3149, 0
    %v3166 = vsel %vm360, %v3151, 0
    %v3168 = vsel %vm360, %v3153, 0
    %v3170 = vsel %vm360, %v3155, 0
    %v3172 = vsel %vm360, %v3157, 0
    %3174 = vmatprep.subr.mxu0 0.0
    %3175 = vmatpush1.xpose.msra.mxu0 %v3166
    %3176 = vmatprep.subr.mxu0 0.0
    %3177 = vmatpush1.xpose.msra.mxu0 %v3168
    %3178 = vmatprep.subr.mxu0 0.0
    %3179 = vmatpush1.xpose.msra.mxu0 %v3170
    %3180 = vmatprep.subr.mxu0 0.0
    %3181 = vmatpush1.xpose.msra.mxu0 %v3172
    %3182 = vmatprep.subr.mxu0 0.0
    %3183 = vmatpush1.xpose.msra.mxu0 0.0
    %3184 = vmatprep.subr.mxu0 0.0
    %3185 = vmatpush1.xpose.msra.mxu0 0.0
    %3186 = vmatprep.subr.mxu0 0.0
    %3187 = vmatpush1.xpose.msra.mxu0 0.0
    %3188 = vmatprep.subr.mxu0 0.0
    %3189 = vmatpush1.xpose.msra.mxu0 0.0
    %3190 = vmatprep.subr.mxu0 0.0
    %3191 = vmatpush1.xpose.msra.mxu0 0.0
    %3192 = vmatprep.subr.mxu0 0.0
    %3193 = vmatpush1.xpose.msra.mxu0 0.0
    %3194 = vmatprep.subr.mxu0 0.0
    %3195 = vmatpush1.xpose.msra.mxu0 0.0
    %3196 = vmatprep.subr.mxu0 0.0
    %3197 = vmatpush1.xpose.msra.mxu0 0.0
    %3198 = vmatprep.subr.mxu0 0.0
    %3199 = vmatpush1.xpose.msra.mxu0 0.0
    %3200 = vmatprep.subr.mxu0 0.0
    %3201 = vmatpush1.xpose.msra.mxu0 0.0
    %3202 = vmatprep.subr.mxu0 0.0
    %3203 = vmatpush1.xpose.msra.mxu0 0.0
    %3204 = vmatprep.subr.mxu0 0.0
    %3205 = vmatpush1.xpose.msra.mxu0 0.0
    %3206 = vmatprep.subr.mxu0 0.0
    %3207 = vmatpush1.xpose.msra.mxu0 0.0
    %3208 = vmatprep.subr.mxu0 0.0
    %3209 = vmatpush1.xpose.msra.mxu0 0.0
    %3210 = vmatprep.subr.mxu0 0.0
    %3211 = vmatpush1.xpose.msra.mxu0 0.0
    %3212 = vmatprep.subr.mxu0 0.0
    %3213 = vmatpush1.xpose.msra.mxu0 0.0
    %3214 = vmatprep.subr.mxu0 0.0
    %3215 = vmatpush1.xpose.msra.mxu0 0.0
    %3216 = vmatprep.subr.mxu0 0.0
    %3217 = vmatpush1.xpose.msra.mxu0 0.0
    %3218 = vmatprep.subr.mxu0 0.0
    %3219 = vmatpush1.xpose.msra.mxu0 0.0
    %3220 = vmatprep.subr.mxu0 0.0
    %3221 = vmatpush1.xpose.msra.mxu0 0.0
    %3222 = vmatprep.subr.mxu0 0.0
    %3223 = vmatpush1.xpose.msra.mxu0 0.0
    %3224 = vmatprep.subr.mxu0 0.0
    %3225 = vmatpush1.xpose.msra.mxu0 0.0
    %3226 = vmatprep.subr.mxu0 0.0
    %3227 = vmatpush1.xpose.msra.mxu0 0.0
    %3228 = vmatprep.subr.mxu0 0.0
    %3229 = vmatpush1.xpose.msra.mxu0 0.0
    %3230 = vmatprep.subr.mxu0 0.0
    %3231 = vmatpush1.xpose.msra.mxu0 0.0
    %3232 = vmatprep.subr.mxu0 0.0
    %3233 = vmatpush1.xpose.msra.mxu0 0.0
    %3234 = vmatprep.subr.mxu0 0.0
    %3235 = vmatpush1.xpose.msra.mxu0 0.0
    %3236 = vmatprep.subr.mxu0 0.0
    %3237 = vmatpush1.xpose.msra.mxu0 0.0
    %3238 = vmatprep.mubr.f32.mxu0 0.0
    %3239 = vmatmul.mubr.f32.gmra.mrb[0].mxu0 %v3158
    %v3240 = vpop.f32.mrb[0].mxu0
    %v3241 = vadd.f32 %v107, %v3240
    %v3242 = vpop.f32.mrb[0].mxu0
    %3243 = vmatprep.mubr.f32.mxu0 0.0
    %3244 = vmatmul.mubr.f32.gmra.mrb[0].mxu0 %v3160
    %v3245 = vpop.f32.mrb[0].mxu0
    %v3246 = vadd.f32 %v108, %v3245
    %v3247 = vpop.f32.mrb[0].mxu0
    %3248 = vmatprep.mubr.f32.mxu0 0.0
    %3249 = vmatmul.mubr.f32.gmra.mrb[0].mxu0 %v3162
    %v3250 = vpop.f32.mrb[0].mxu0
    %v3251 = vadd.f32 %v109, %v3250
    %v3252 = vpop.f32.mrb[0].mxu0
    %3253 = vmatprep.mubr.f32.mxu0 0.0
    %3254 = vmatmul.mubr.f32.gmra.mrb[0].mxu0 %v3164
    %v3255 = vpop.f32.mrb[0].mxu0
    %v3256 = vadd.f32 %v110, %v3255
    %v3257 = vpop.f32.mrb[0].mxu0
    %3258 = vdwg.mxu0
    %v3259 = vsel %vm145, %v3241, -inf
    %3260 = vmax.xlane.f32.xlu0 %v3259
    %v3261 = vpop.xlane.xlu0 %3260
    %v3262 = vsel %vm145, %v3246, -inf
    %3263 = vmax.xlane.f32.xlu0 %v3262
    %v3264 = vpop.xlane.xlu0 %3263
    %v3265 = vsel %vm145, %v3251, -inf
    %3266 = vmax.xlane.f32.xlu0 %v3265
    %v3267 = vpop.xlane.xlu0 %3266
    %v3268 = vsel %vm145, %v3256, -inf
    %3269 = vmax.xlane.f32.xlu0 %v3268
    %v3270 = vpop.xlane.xlu0 %3269
    %v3271 = vsub.f32 %v3241, %v3261
    %v3272 = vsub.f32 %v3246, %v3264
    %v3273 = vsub.f32 %v3251, %v3267
    %v3274 = vsub.f32 %v3256, %v3270
    %v3275 = vmul.f32 %v3271, 1.442695
    %v3276 = vpow.pop %v3275
    %v3277 = vmul.f32 %v3272, 1.442695
    %v3278 = vpow.pop %v3277
    %v3279 = vmul.f32 %v3273, 1.442695
    %v3280 = vpow.pop %v3279
    %v3281 = vmul.f32 %v3274, 1.442695
    %v3282 = vpow.pop %v3281
    %v3283 = vsel %vm145, %v3276, 0.0
    %3284 = vadd.xlane.f32.xlu0 %v3283
    %v3285 = vpop.xlane.xlu0 %3284
    %v3286 = vsel %vm145, %v3278, 0.0
    %3287 = vadd.xlane.f32.xlu0 %v3286
    %v3288 = vpop.xlane.xlu0 %3287
    %v3289 = vsel %vm145, %v3280, 0.0
    %3290 = vadd.xlane.f32.xlu0 %v3289
    %v3291 = vpop.xlane.xlu0 %3290
    %v3292 = vsel %vm145, %v3282, 0.0
    %3293 = vadd.xlane.f32.xlu0 %v3292
    %v3294 = vpop.xlane.xlu0 %3293
    %v3295 = vrcp.pop %v3285
    %v3296 = vrcp.pop %v3288
    %v3297 = vrcp.pop %v3291
    %v3298 = vrcp.pop %v3294
    %v3299 = vmul.f32 %v3276, %v3295
    %v3300 = vmul.f32 %v3278, %v3296
    %v3301 = vmul.f32 %v3280, %v3297
    %v3302 = vmul.f32 %v3282, %v3298
    %3303 = vrot.lane.b32.xlu0 %v2390, 112
    %v3304 = vpop.permute.xlu0 %3303
    %3305 = vrot.lane.b32.xlu0 %v2395, 112
    %v3306 = vpop.permute.xlu0 %3305
    %3307 = vrot.lane.b32.xlu0 %v2400, 112
    %v3308 = vpop.permute.xlu0 %3307
    %3309 = vrot.lane.b32.xlu0 %v2405, 112
    %v3310 = vpop.permute.xlu0 %3309
    %v3316 = vsel %vm145, %v3299, 0
    %v3319 = vsel %vm145, %v3300, 0
    %v3322 = vsel %vm145, %v3301, 0
    %v3325 = vsel %vm145, %v3302, 0
    %3327 = vmatprep.subr.mxu0 0.0
    %3328 = vmatpush1.msra.mxu0 %v3304
    %3329 = vmatprep.subr.mxu0 0.0
    %3330 = vmatpush1.msra.mxu0 %v3306
    %3331 = vmatprep.subr.mxu0 0.0
    %3332 = vmatpush1.msra.mxu0 %v3308
    %3333 = vmatprep.subr.mxu0 0.0
    %3334 = vmatpush1.msra.mxu0 %v3310
    %3335 = vmatprep.subr.mxu0 0.0
    %3336 = vmatpush1.msra.mxu0 0.0
    %3337 = vmatprep.subr.mxu0 0.0
    %3338 = vmatpush1.msra.mxu0 0.0
    %3339 = vmatprep.subr.mxu0 0.0
    %3340 = vmatpush1.msra.mxu0 0.0
    %3341 = vmatprep.subr.mxu0 0.0
    %3342 = vmatpush1.msra.mxu0 0.0
    %3343 = vmatprep.subr.mxu0 0.0
    %3344 = vmatpush1.msra.mxu0 0.0
    %3345 = vmatprep.subr.mxu0 0.0
    %3346 = vmatpush1.msra.mxu0 0.0
    %3347 = vmatprep.subr.mxu0 0.0
    %3348 = vmatpush1.msra.mxu0 0.0
    %3349 = vmatprep.subr.mxu0 0.0
    %3350 = vmatpush1.msra.mxu0 0.0
    %3351 = vmatprep.subr.mxu0 0.0
    %3352 = vmatpush1.msra.mxu0 0.0
    %3353 = vmatprep.subr.mxu0 0.0
    %3354 = vmatpush1.msra.mxu0 0.0
    %3355 = vmatprep.subr.mxu0 0.0
    %3356 = vmatpush1.msra.mxu0 0.0
    %3357 = vmatprep.subr.mxu0 0.0
    %3358 = vmatpush1.msra.mxu0 0.0
    %3359 = vmatprep.subr.mxu0 0.0
    %3360 = vmatpush1.msra.mxu0 0.0
    %3361 = vmatprep.subr.mxu0 0.0
    %3362 = vmatpush1.msra.mxu0 0.0
    %3363 = vmatprep.subr.mxu0 0.0
    %3364 = vmatpush1.msra.mxu0 0.0
    %3365 = vmatprep.subr.mxu0 0.0
    %3366 = vmatpush1.msra.mxu0 0.0
    %3367 = vmatprep.subr.mxu0 0.0
    %3368 = vmatpush1.msra.mxu0 0.0
    %3369 = vmatprep.subr.mxu0 0.0
    %3370 = vmatpush1.msra.mxu0 0.0
    %3371 = vmatprep.subr.mxu0 0.0
    %3372 = vmatpush1.msra.mxu0 0.0
    %3373 = vmatprep.subr.mxu0 0.0
    %3374 = vmatpush1.msra.mxu0 0.0
    %3375 = vmatprep.subr.mxu0 0.0
    %3376 = vmatpush1.msra.mxu0 0.0
    %3377 = vmatprep.subr.mxu0 0.0
    %3378 = vmatpush1.msra.mxu0 0.0
    %3379 = vmatprep.subr.mxu0 0.0
    %3380 = vmatpush1.msra.mxu0 0.0
    %3381 = vmatprep.subr.mxu0 0.0
    %3382 = vmatpush1.msra.mxu0 0.0
    %3383 = vmatprep.subr.mxu0 0.0
    %3384 = vmatpush1.msra.mxu0 0.0
    %3385 = vmatprep.subr.mxu0 0.0
    %3386 = vmatpush1.msra.mxu0 0.0
    %3387 = vmatprep.subr.mxu0 0.0
    %3388 = vmatpush1.msra.mxu0 0.0
    %3389 = vmatprep.subr.mxu0 0.0
    %3390 = vmatpush1.msra.mxu0 0.0
    %3391 = vmatprep.mubr.f32.mxu0 0.0
    %3392 = vmatmul.mubr.f32.gmra.mrb[0].mxu0 %v3316
    %v3393 = vpop.f32.mrb[0].mxu0
    %v3394 = vadd.f32 0.0, %v3393
    %v3395 = vpop.f32.mrb[0].mxu0
    %3396 = vmatprep.mubr.f32.mxu0 0.0
    %3397 = vmatmul.mubr.f32.gmra.mrb[0].mxu0 %v3319
    %v3398 = vpop.f32.mrb[0].mxu0
    %v3399 = vadd.f32 0.0, %v3398
    %v3400 = vpop.f32.mrb[0].mxu0
    %3401 = vmatprep.mubr.f32.mxu0 0.0
    %3402 = vmatmul.mubr.f32.gmra.mrb[0].mxu0 %v3322
    %v3403 = vpop.f32.mrb[0].mxu0
    %v3404 = vadd.f32 0.0, %v3403
    %v3405 = vpop.f32.mrb[0].mxu0
    %3406 = vmatprep.mubr.f32.mxu0 0.0
    %3407 = vmatmul.mubr.f32.gmra.mrb[0].mxu0 %v3325
    %v3408 = vpop.f32.mrb[0].mxu0
    %v3409 = vadd.f32 0.0, %v3408
    %v3410 = vpop.f32.mrb[0].mxu0
    %3411 = vdwg.mxu0
    %v3413 = vsel %vm360, %v3394, 0
    %v3416 = vsel %vm360, %v3399, 0
    %v3419 = vsel %vm360, %v3404, 0
    %v3422 = vsel %vm360, %v3409, 0
    %3424 = vmatprep.subr.mxu0 0.0
    %3425 = vmatpush1.msra.mxu0 %v2189
    %3426 = vmatprep.subr.mxu0 0.0
    %3427 = vmatpush1.msra.mxu0 0.0
    %3428 = vmatprep.subr.mxu0 0.0
    %3429 = vmatpush1.msra.mxu0 0.0
    %3430 = vmatprep.subr.mxu0 0.0
    %3431 = vmatpush1.msra.mxu0 0.0
    %3432 = vmatprep.subr.mxu0 0.0
    %3433 = vmatpush1.msra.mxu0 0.0
    %3434 = vmatprep.subr.mxu0 0.0
    %3435 = vmatpush1.msra.mxu0 0.0
    %3436 = vmatprep.subr.mxu0 0.0
    %3437 = vmatpush1.msra.mxu0 0.0
    %3438 = vmatprep.subr.mxu0 0.0
    %3439 = vmatpush1.msra.mxu0 0.0
    %3440 = vmatprep.subr.mxu0 0.0
    %3441 = vmatpush1.msra.mxu0 0.0
    %3442 = vmatprep.subr.mxu0 0.0
    %3443 = vmatpush1.msra.mxu0 0.0
    %3444 = vmatprep.subr.mxu0 0.0
    %3445 = vmatpush1.msra.mxu0 0.0
    %3446 = vmatprep.subr.mxu0 0.0
    %3447 = vmatpush1.msra.mxu0 0.0
    %3448 = vmatprep.subr.mxu0 0.0
    %3449 = vmatpush1.msra.mxu0 0.0
    %3450 = vmatprep.subr.mxu0 0.0
    %3451 = vmatpush1.msra.mxu0 0.0
    %3452 = vmatprep.subr.mxu0 0.0
    %3453 = vmatpush1.msra.mxu0 0.0
    %3454 = vmatprep.subr.mxu0 0.0
    %3455 = vmatpush1.msra.mxu0 0.0
    %3456 = vmatprep.subr.mxu0 0.0
    %3457 = vmatpush1.msra.mxu0 0.0
    %3458 = vmatprep.subr.mxu0 0.0
    %3459 = vmatpush1.msra.mxu0 0.0
    %3460 = vmatprep.subr.mxu0 0.0
    %3461 = vmatpush1.msra.mxu0 0.0
    %3462 = vmatprep.subr.mxu0 0.0
    %3463 = vmatpush1.msra.mxu0 0.0
    %3464 = vmatprep.subr.mxu0 0.0
    %3465 = vmatpush1.msra.mxu0 0.0
    %3466 = vmatprep.subr.mxu0 0.0
    %3467 = vmatpush1.msra.mxu0 0.0
    %3468 = vmatprep.subr.mxu0 0.0
    %3469 = vmatpush1.msra.mxu0 0.0
    %3470 = vmatprep.subr.mxu0 0.0
    %3471 = vmatpush1.msra.mxu0 0.0
    %3472 = vmatprep.subr.mxu0 0.0
    %3473 = vmatpush1.msra.mxu0 0.0
    %3474 = vmatprep.subr.mxu0 0.0
    %3475 = vmatpush1.msra.mxu0 0.0
    %3476 = vmatprep.subr.mxu0 0.0
    %3477 = vmatpush1.msra.mxu0 0.0
    %3478 = vmatprep.subr.mxu0 0.0
    %3479 = vmatpush1.msra.mxu0 0.0
    %3480 = vmatprep.subr.mxu0 0.0
    %3481 = vmatpush1.msra.mxu0 0.0
    %3482 = vmatprep.subr.mxu0 0.0
    %3483 = vmatpush1.msra.mxu0 0.0
    %3484 = vmatprep.subr.mxu0 0.0
    %3485 = vmatpush1.msra.mxu0 0.0
    %3486 = vmatprep.subr.mxu0 0.0
    %3487 = vmatpush1.msra.mxu0 0.0
    %3488 = vmatprep.mubr.f32.mxu0 0.0
    %3489 = vmatmul.mubr.f32.gmra.mrb[0].mxu0 %v3413
    %v3490 = vpop.f32.mrb[0].mxu0
    %v3491 = vadd.f32 0.0, %v3490
    %v3492 = vpop.f32.mrb[0].mxu0
    %3493 = vmatprep.mubr.f32.mxu0 0.0
    %3494 = vmatmul.mubr.f32.gmra.mrb[0].mxu0 %v3416
    %v3495 = vpop.f32.mrb[0].mxu0
    %v3496 = vadd.f32 0.0, %v3495
    %v3497 = vpop.f32.mrb[0].mxu0
    %3498 = vmatprep.mubr.f32.mxu0 0.0
    %3499 = vmatmul.mubr.f32.gmra.mrb[0].mxu0 %v3419
    %v3500 = vpop.f32.mrb[0].mxu0
    %v3501 = vadd.f32 0.0, %v3500
    %v3502 = vpop.f32.mrb[0].mxu0
    %3503 = vmatprep.mubr.f32.mxu0 0.0
    %3504 = vmatmul.mubr.f32.gmra.mrb[0].mxu0 %v3422
    %v3505 = vpop.f32.mrb[0].mxu0
    %v3506 = vadd.f32 0.0, %v3505
    %v3507 = vpop.f32.mrb[0].mxu0
    %3508 = vdwg.mxu0
    %v3509 = vadd.f32 %v3138, %v3491
    %v3510 = vadd.f32 %v3139, %v3496
    %v3511 = vadd.f32 %v3140, %v3501
    %v3512 = vadd.f32 %v3141, %v3506
    %3513 = vrot.lane.b32.xlu0 %v2289, 104
    %v3514 = vpop.permute.xlu0 %3513
    %3515 = vrot.lane.b32.xlu0 %v2294, 104
    %v3516 = vpop.permute.xlu0 %3515
    %3517 = vrot.lane.b32.xlu0 %v2299, 104
    %v3518 = vpop.permute.xlu0 %3517
    %3519 = vrot.lane.b32.xlu0 %v2304, 104
    %v3520 = vpop.permute.xlu0 %3519
    %3521 = vrot.lane.b32.xlu0 %v2289, 72
    %v3522 = vpop.permute.xlu0 %3521
    %3523 = vrot.lane.b32.xlu0 %v2294, 72
    %v3524 = vpop.permute.xlu0 %3523
    %3525 = vrot.lane.b32.xlu0 %v2299, 72
    %v3526 = vpop.permute.xlu0 %3525
    %3527 = vrot.lane.b32.xlu0 %v2304, 72
    %v3528 = vpop.permute.xlu0 %3527
    %v3529 = vsel %vm360, %v3514, 0
    %v3531 = vsel %vm360, %v3516, 0
    %v3533 = vsel %vm360, %v3518, 0
    %v3535 = vsel %vm360, %v3520, 0
    %v3537 = vsel %vm360, %v3522, 0
    %v3539 = vsel %vm360, %v3524, 0
    %v3541 = vsel %vm360, %v3526, 0
    %v3543 = vsel %vm360, %v3528, 0
    %3545 = vmatprep.subr.mxu0 0.0
    %3546 = vmatpush1.xpose.msra.mxu0 %v3537
    %3547 = vmatprep.subr.mxu0 0.0
    %3548 = vmatpush1.xpose.msra.mxu0 %v3539
    %3549 = vmatprep.subr.mxu0 0.0
    %3550 = vmatpush1.xpose.msra.mxu0 %v3541
    %3551 = vmatprep.subr.mxu0 0.0
    %3552 = vmatpush1.xpose.msra.mxu0 %v3543
    %3553 = vmatprep.subr.mxu0 0.0
    %3554 = vmatpush1.xpose.msra.mxu0 0.0
    %3555 = vmatprep.subr.mxu0 0.0
    %3556 = vmatpush1.xpose.msra.mxu0 0.0
    %3557 = vmatprep.subr.mxu0 0.0
    %3558 = vmatpush1.xpose.msra.mxu0 0.0
    %3559 = vmatprep.subr.mxu0 0.0
    %3560 = vmatpush1.xpose.msra.mxu0 0.0
    %3561 = vmatprep.subr.mxu0 0.0
    %3562 = vmatpush1.xpose.msra.mxu0 0.0
    %3563 = vmatprep.subr.mxu0 0.0
    %3564 = vmatpush1.xpose.msra.mxu0 0.0
    %3565 = vmatprep.subr.mxu0 0.0
    %3566 = vmatpush1.xpose.msra.mxu0 0.0
    %3567 = vmatprep.subr.mxu0 0.0
    %3568 = vmatpush1.xpose.msra.mxu0 0.0
    %3569 = vmatprep.subr.mxu0 0.0
    %3570 = vmatpush1.xpose.msra.mxu0 0.0
    %3571 = vmatprep.subr.mxu0 0.0
    %3572 = vmatpush1.xpose.msra.mxu0 0.0
    %3573 = vmatprep.subr.mxu0 0.0
    %3574 = vmatpush1.xpose.msra.mxu0 0.0
    %3575 = vmatprep.subr.mxu0 0.0
    %3576 = vmatpush1.xpose.msra.mxu0 0.0
    %3577 = vmatprep.subr.mxu0 0.0
    %3578 = vmatpush1.xpose.msra.mxu0 0.0
    %3579 = vmatprep.subr.mxu0 0.0
    %3580 = vmatpush1.xpose.msra.mxu0 0.0
    %3581 = vmatprep.subr.mxu0 0.0
    %3582 = vmatpush1.xpose.msra.mxu0 0.0
    %3583 = vmatprep.subr.mxu0 0.0
    %3584 = vmatpush1.xpose.msra.mxu0 0.0
    %3585 = vmatprep.subr.mxu0 0.0
    %3586 = vmatpush1.xpose.msra.mxu0 0.0
    %3587 = vmatprep.subr.mxu0 0.0
    %3588 = vmatpush1.xpose.msra.mxu0 0.0
    %3589 = vmatprep.subr.mxu0 0.0
    %3590 = vmatpush1.xpose.msra.mxu0 0.0
    %3591 = vmatprep.subr.mxu0 0.0
    %3592 = vmatpush1.xpose.msra.mxu0 0.0
    %3593 = vmatprep.subr.mxu0 0.0
    %3594 = vmatpush1.xpose.msra.mxu0 0.0
    %3595 = vmatprep.subr.mxu0 0.0
    %3596 = vmatpush1.xpose.msra.mxu0 0.0
    %3597 = vmatprep.subr.mxu0 0.0
    %3598 = vmatpush1.xpose.msra.mxu0 0.0
    %3599 = vmatprep.subr.mxu0 0.0
    %3600 = vmatpush1.xpose.msra.mxu0 0.0
    %3601 = vmatprep.subr.mxu0 0.0
    %3602 = vmatpush1.xpose.msra.mxu0 0.0
    %3603 = vmatprep.subr.mxu0 0.0
    %3604 = vmatpush1.xpose.msra.mxu0 0.0
    %3605 = vmatprep.subr.mxu0 0.0
    %3606 = vmatpush1.xpose.msra.mxu0 0.0
    %3607 = vmatprep.subr.mxu0 0.0
    %3608 = vmatpush1.xpose.msra.mxu0 0.0
    %3609 = vmatprep.mubr.f32.mxu0 0.0
    %3610 = vmatmul.mubr.f32.gmra.mrb[0].mxu0 %v3529
    %v3611 = vpop.f32.mrb[0].mxu0
    %v3612 = vadd.f32 %v107, %v3611
    %v3613 = vpop.f32.mrb[0].mxu0
    %3614 = vmatprep.mubr.f32.mxu0 0.0
    %3615 = vmatmul.mubr.f32.gmra.mrb[0].mxu0 %v3531
    %v3616 = vpop.f32.mrb[0].mxu0
    %v3617 = vadd.f32 %v108, %v3616
    %v3618 = vpop.f32.mrb[0].mxu0
    %3619 = vmatprep.mubr.f32.mxu0 0.0
    %3620 = vmatmul.mubr.f32.gmra.mrb[0].mxu0 %v3533
    %v3621 = vpop.f32.mrb[0].mxu0
    %v3622 = vadd.f32 %v109, %v3621
    %v3623 = vpop.f32.mrb[0].mxu0
    %3624 = vmatprep.mubr.f32.mxu0 0.0
    %3625 = vmatmul.mubr.f32.gmra.mrb[0].mxu0 %v3535
    %v3626 = vpop.f32.mrb[0].mxu0
    %v3627 = vadd.f32 %v110, %v3626
    %v3628 = vpop.f32.mrb[0].mxu0
    %3629 = vdwg.mxu0
    %v3630 = vsel %vm145, %v3612, -inf
    %3631 = vmax.xlane.f32.xlu0 %v3630
    %v3632 = vpop.xlane.xlu0 %3631
    %v3633 = vsel %vm145, %v3617, -inf
    %3634 = vmax.xlane.f32.xlu0 %v3633
    %v3635 = vpop.xlane.xlu0 %3634
    %v3636 = vsel %vm145, %v3622, -inf
    %3637 = vmax.xlane.f32.xlu0 %v3636
    %v3638 = vpop.xlane.xlu0 %3637
    %v3639 = vsel %vm145, %v3627, -inf
    %3640 = vmax.xlane.f32.xlu0 %v3639
    %v3641 = vpop.xlane.xlu0 %3640
    %v3642 = vsub.f32 %v3612, %v3632
    %v3643 = vsub.f32 %v3617, %v3635
    %v3644 = vsub.f32 %v3622, %v3638
    %v3645 = vsub.f32 %v3627, %v3641
    %v3646 = vmul.f32 %v3642, 1.442695
    %v3647 = vpow.pop %v3646
    %v3648 = vmul.f32 %v3643, 1.442695
    %v3649 = vpow.pop %v3648
    %v3650 = vmul.f32 %v3644, 1.442695
    %v3651 = vpow.pop %v3650
    %v3652 = vmul.f32 %v3645, 1.442695
    %v3653 = vpow.pop %v3652
    %v3654 = vsel %vm145, %v3647, 0.0
    %3655 = vadd.xlane.f32.xlu0 %v3654
    %v3656 = vpop.xlane.xlu0 %3655
    %v3657 = vsel %vm145, %v3649, 0.0
    %3658 = vadd.xlane.f32.xlu0 %v3657
    %v3659 = vpop.xlane.xlu0 %3658
    %v3660 = vsel %vm145, %v3651, 0.0
    %3661 = vadd.xlane.f32.xlu0 %v3660
    %v3662 = vpop.xlane.xlu0 %3661
    %v3663 = vsel %vm145, %v3653, 0.0
    %3664 = vadd.xlane.f32.xlu0 %v3663
    %v3665 = vpop.xlane.xlu0 %3664
    %v3666 = vrcp.pop %v3656
    %v3667 = vrcp.pop %v3659
    %v3668 = vrcp.pop %v3662
    %v3669 = vrcp.pop %v3665
    %v3670 = vmul.f32 %v3647, %v3666
    %v3671 = vmul.f32 %v3649, %v3667
    %v3672 = vmul.f32 %v3651, %v3668
    %v3673 = vmul.f32 %v3653, %v3669
    %3674 = vrot.lane.b32.xlu0 %v2390, 104
    %v3675 = vpop.permute.xlu0 %3674
    %3676 = vrot.lane.b32.xlu0 %v2395, 104
    %v3677 = vpop.permute.xlu0 %3676
    %3678 = vrot.lane.b32.xlu0 %v2400, 104
    %v3679 = vpop.permute.xlu0 %3678
    %3680 = vrot.lane.b32.xlu0 %v2405, 104
    %v3681 = vpop.permute.xlu0 %3680
    %v3687 = vsel %vm145, %v3670, 0
    %v3690 = vsel %vm145, %v3671, 0
    %v3693 = vsel %vm145, %v3672, 0
    %v3696 = vsel %vm145, %v3673, 0
    %3698 = vmatprep.subr.mxu0 0.0
    %3699 = vmatpush1.msra.mxu0 %v3675
    %3700 = vmatprep.subr.mxu0 0.0
    %3701 = vmatpush1.msra.mxu0 %v3677
    %3702 = vmatprep.subr.mxu0 0.0
    %3703 = vmatpush1.msra.mxu0 %v3679
    %3704 = vmatprep.subr.mxu0 0.0
    %3705 = vmatpush1.msra.mxu0 %v3681
    %3706 = vmatprep.subr.mxu0 0.0
    %3707 = vmatpush1.msra.mxu0 0.0
    %3708 = vmatprep.subr.mxu0 0.0
    %3709 = vmatpush1.msra.mxu0 0.0
    %3710 = vmatprep.subr.mxu0 0.0
    %3711 = vmatpush1.msra.mxu0 0.0
    %3712 = vmatprep.subr.mxu0 0.0
    %3713 = vmatpush1.msra.mxu0 0.0
    %3714 = vmatprep.subr.mxu0 0.0
    %3715 = vmatpush1.msra.mxu0 0.0
    %3716 = vmatprep.subr.mxu0 0.0
    %3717 = vmatpush1.msra.mxu0 0.0
    %3718 = vmatprep.subr.mxu0 0.0
    %3719 = vmatpush1.msra.mxu0 0.0
    %3720 = vmatprep.subr.mxu0 0.0
    %3721 = vmatpush1.msra.mxu0 0.0
    %3722 = vmatprep.subr.mxu0 0.0
    %3723 = vmatpush1.msra.mxu0 0.0
    %3724 = vmatprep.subr.mxu0 0.0
    %3725 = vmatpush1.msra.mxu0 0.0
    %3726 = vmatprep.subr.mxu0 0.0
    %3727 = vmatpush1.msra.mxu0 0.0
    %3728 = vmatprep.subr.mxu0 0.0
    %3729 = vmatpush1.msra.mxu0 0.0
    %3730 = vmatprep.subr.mxu0 0.0
    %3731 = vmatpush1.msra.mxu0 0.0
    %3732 = vmatprep.subr.mxu0 0.0
    %3733 = vmatpush1.msra.mxu0 0.0
    %3734 = vmatprep.subr.mxu0 0.0
    %3735 = vmatpush1.msra.mxu0 0.0
    %3736 = vmatprep.subr.mxu0 0.0
    %3737 = vmatpush1.msra.mxu0 0.0
    %3738 = vmatprep.subr.mxu0 0.0
    %3739 = vmatpush1.msra.mxu0 0.0
    %3740 = vmatprep.subr.mxu0 0.0
    %3741 = vmatpush1.msra.mxu0 0.0
    %3742 = vmatprep.subr.mxu0 0.0
    %3743 = vmatpush1.msra.mxu0 0.0
    %3744 = vmatprep.subr.mxu0 0.0
    %3745 = vmatpush1.msra.mxu0 0.0
    %3746 = vmatprep.subr.mxu0 0.0
    %3747 = vmatpush1.msra.mxu0 0.0
    %3748 = vmatprep.subr.mxu0 0.0
    %3749 = vmatpush1.msra.mxu0 0.0
    %3750 = vmatprep.subr.mxu0 0.0
    %3751 = vmatpush1.msra.mxu0 0.0
    %3752 = vmatprep.subr.mxu0 0.0
    %3753 = vmatpush1.msra.mxu0 0.0
    %3754 = vmatprep.subr.mxu0 0.0
    %3755 = vmatpush1.msra.mxu0 0.0
    %3756 = vmatprep.subr.mxu0 0.0
    %3757 = vmatpush1.msra.mxu0 0.0
    %3758 = vmatprep.subr.mxu0 0.0
    %3759 = vmatpush1.msra.mxu0 0.0
    %3760 = vmatprep.subr.mxu0 0.0
    %3761 = vmatpush1.msra.mxu0 0.0
    %3762 = vmatprep.mubr.f32.mxu0 0.0
    %3763 = vmatmul.mubr.f32.gmra.mrb[0].mxu0 %v3687
    %v3764 = vpop.f32.mrb[0].mxu0
    %v3765 = vadd.f32 0.0, %v3764
    %v3766 = vpop.f32.mrb[0].mxu0
    %3767 = vmatprep.mubr.f32.mxu0 0.0
    %3768 = vmatmul.mubr.f32.gmra.mrb[0].mxu0 %v3690
    %v3769 = vpop.f32.mrb[0].mxu0
    %v3770 = vadd.f32 0.0, %v3769
    %v3771 = vpop.f32.mrb[0].mxu0
    %3772 = vmatprep.mubr.f32.mxu0 0.0
    %3773 = vmatmul.mubr.f32.gmra.mrb[0].mxu0 %v3693
    %v3774 = vpop.f32.mrb[0].mxu0
    %v3775 = vadd.f32 0.0, %v3774
    %v3776 = vpop.f32.mrb[0].mxu0
    %3777 = vmatprep.mubr.f32.mxu0 0.0
    %3778 = vmatmul.mubr.f32.gmra.mrb[0].mxu0 %v3696
    %v3779 = vpop.f32.mrb[0].mxu0
    %v3780 = vadd.f32 0.0, %v3779
    %v3781 = vpop.f32.mrb[0].mxu0
    %3782 = vdwg.mxu0
    %v3784 = vsel %vm360, %v3765, 0
    %v3787 = vsel %vm360, %v3770, 0
    %v3790 = vsel %vm360, %v3775, 0
    %v3793 = vsel %vm360, %v3780, 0
    %3795 = vmatprep.subr.mxu0 0.0
    %3796 = vmatpush1.msra.mxu0 %v2190
    %3797 = vmatprep.subr.mxu0 0.0
    %3798 = vmatpush1.msra.mxu0 0.0
    %3799 = vmatprep.subr.mxu0 0.0
    %3800 = vmatpush1.msra.mxu0 0.0
    %3801 = vmatprep.subr.mxu0 0.0
    %3802 = vmatpush1.msra.mxu0 0.0
    %3803 = vmatprep.subr.mxu0 0.0
    %3804 = vmatpush1.msra.mxu0 0.0
    %3805 = vmatprep.subr.mxu0 0.0
    %3806 = vmatpush1.msra.mxu0 0.0
    %3807 = vmatprep.subr.mxu0 0.0
    %3808 = vmatpush1.msra.mxu0 0.0
    %3809 = vmatprep.subr.mxu0 0.0
    %3810 = vmatpush1.msra.mxu0 0.0
    %3811 = vmatprep.subr.mxu0 0.0
    %3812 = vmatpush1.msra.mxu0 0.0
    %3813 = vmatprep.subr.mxu0 0.0
    %3814 = vmatpush1.msra.mxu0 0.0
    %3815 = vmatprep.subr.mxu0 0.0
    %3816 = vmatpush1.msra.mxu0 0.0
    %3817 = vmatprep.subr.mxu0 0.0
    %3818 = vmatpush1.msra.mxu0 0.0
    %3819 = vmatprep.subr.mxu0 0.0
    %3820 = vmatpush1.msra.mxu0 0.0
    %3821 = vmatprep.subr.mxu0 0.0
    %3822 = vmatpush1.msra.mxu0 0.0
    %3823 = vmatprep.subr.mxu0 0.0
    %3824 = vmatpush1.msra.mxu0 0.0
    %3825 = vmatprep.subr.mxu0 0.0
    %3826 = vmatpush1.msra.mxu0 0.0
    %3827 = vmatprep.subr.mxu0 0.0
    %3828 = vmatpush1.msra.mxu0 0.0
    %3829 = vmatprep.subr.mxu0 0.0
    %3830 = vmatpush1.msra.mxu0 0.0
    %3831 = vmatprep.subr.mxu0 0.0
    %3832 = vmatpush1.msra.mxu0 0.0
    %3833 = vmatprep.subr.mxu0 0.0
    %3834 = vmatpush1.msra.mxu0 0.0
    %3835 = vmatprep.subr.mxu0 0.0
    %3836 = vmatpush1.msra.mxu0 0.0
    %3837 = vmatprep.subr.mxu0 0.0
    %3838 = vmatpush1.msra.mxu0 0.0
    %3839 = vmatprep.subr.mxu0 0.0
    %3840 = vmatpush1.msra.mxu0 0.0
    %3841 = vmatprep.subr.mxu0 0.0
    %3842 = vmatpush1.msra.mxu0 0.0
    %3843 = vmatprep.subr.mxu0 0.0
    %3844 = vmatpush1.msra.mxu0 0.0
    %3845 = vmatprep.subr.mxu0 0.0
    %3846 = vmatpush1.msra.mxu0 0.0
    %3847 = vmatprep.subr.mxu0 0.0
    %3848 = vmatpush1.msra.mxu0 0.0
    %3849 = vmatprep.subr.mxu0 0.0
    %3850 = vmatpush1.msra.mxu0 0.0
    %3851 = vmatprep.subr.mxu0 0.0
    %3852 = vmatpush1.msra.mxu0 0.0
    %3853 = vmatprep.subr.mxu0 0.0
    %3854 = vmatpush1.msra.mxu0 0.0
    %3855 = vmatprep.subr.mxu0 0.0
    %3856 = vmatpush1.msra.mxu0 0.0
    %3857 = vmatprep.subr.mxu0 0.0
    %3858 = vmatpush1.msra.mxu0 0.0
    %3859 = vmatprep.mubr.f32.mxu0 0.0
    %3860 = vmatmul.mubr.f32.gmra.mrb[0].mxu0 %v3784
    %v3861 = vpop.f32.mrb[0].mxu0
    %v3862 = vadd.f32 0.0, %v3861
    %v3863 = vpop.f32.mrb[0].mxu0
    %3864 = vmatprep.mubr.f32.mxu0 0.0
    %3865 = vmatmul.mubr.f32.gmra.mrb[0].mxu0 %v3787
    %v3866 = vpop.f32.mrb[0].mxu0
    %v3867 = vadd.f32 0.0, %v3866
    %v3868 = vpop.f32.mrb[0].mxu0
    %3869 = vmatprep.mubr.f32.mxu0 0.0
    %3870 = vmatmul.mubr.f32.gmra.mrb[0].mxu0 %v3790
    %v3871 = vpop.f32.mrb[0].mxu0
    %v3872 = vadd.f32 0.0, %v3871
    %v3873 = vpop.f32.mrb[0].mxu0
    %3874 = vmatprep.mubr.f32.mxu0 0.0
    %3875 = vmatmul.mubr.f32.gmra.mrb[0].mxu0 %v3793
    %v3876 = vpop.f32.mrb[0].mxu0
    %v3877 = vadd.f32 0.0, %v3876
    %v3878 = vpop.f32.mrb[0].mxu0
    %3879 = vdwg.mxu0
    %v3880 = vadd.f32 %v3509, %v3862
    %v3881 = vadd.f32 %v3510, %v3867
    %v3882 = vadd.f32 %v3511, %v3872
    %v3883 = vadd.f32 %v3512, %v3877
    %v3884 = vadd.f32 %v2169, %v3880
    %v3885 = vadd.f32 %v2170, %v3881
    %v3886 = vadd.f32 %v2171, %v3882
    %v3887 = vadd.f32 %v2172, %v3883
    %v3888 = vsel %vm145, %v3884, 0.0
    %3889 = vadd.xlane.f32.xlu0 %v3888
    %v3890 = vpop.xlane.xlu0 %3889
    %v3891 = vsel %vm145, %v3885, 0.0
    %3892 = vadd.xlane.f32.xlu0 %v3891
    %v3893 = vpop.xlane.xlu0 %3892
    %v3894 = vsel %vm145, %v3886, 0.0
    %3895 = vadd.xlane.f32.xlu0 %v3894
    %v3896 = vpop.xlane.xlu0 %3895
    %v3897 = vsel %vm145, %v3887, 0.0
    %3898 = vadd.xlane.f32.xlu0 %v3897
    %v3899 = vpop.xlane.xlu0 %3898
    %v3900 = vmul.f32 %v3890, %v1837
    %v3901 = vmul.f32 %v3893, %v1837
    %v3902 = vmul.f32 %v3896, %v1837
    %v3903 = vmul.f32 %v3899, %v1837
    %v3904 = vsub.f32 %v3884, %v3900
    %v3905 = vsub.f32 %v3885, %v3901
    %v3906 = vsub.f32 %v3886, %v3902
    %v3907 = vsub.f32 %v3887, %v3903
    %v3908 = vmul.f32 %v3904, %v3904
    %v3909 = vmul.f32 %v3905, %v3905
    %v3910 = vmul.f32 %v3906, %v3906
    %v3911 = vmul.f32 %v3907, %v3907
    %v3912 = vsel %vm145, %v3908, 0.0
    %3913 = vadd.xlane.f32.xlu0 %v3912
    %v3914 = vpop.xlane.xlu0 %3913
    %v3915 = vsel %vm145, %v3909, 0.0
    %3916 = vadd.xlane.f32.xlu0 %v3915
    %v3917 = vpop.xlane.xlu0 %3916
    %v3918 = vsel %vm145, %v3910, 0.0
    %3919 = vadd.xlane.f32.xlu0 %v3918
    %v3920 = vpop.xlane.xlu0 %3919
    %v3921 = vsel %vm145, %v3911, 0.0
    %3922 = vadd.xlane.f32.xlu0 %v3921
    %v3923 = vpop.xlane.xlu0 %3922
    %v3924 = vmul.f32 %v3914, %v1837
    %v3925 = vmul.f32 %v3917, %v1837
    %v3926 = vmul.f32 %v3920, %v1837
    %v3927 = vmul.f32 %v3923, %v1837
    %v3928 = vadd.f32 %v3924, 1e-05
    %v3929 = vadd.f32 %v3925, 1e-05
    %v3930 = vadd.f32 %v3926, 1e-05
    %v3931 = vadd.f32 %v3927, 1e-05
    %v3932 = vrsqrt.pop %v3928
    %v3933 = vrsqrt.pop %v3929
    %v3934 = vrsqrt.pop %v3930
    %v3935 = vrsqrt.pop %v3931
    %v3936 = vmul.f32 %v3904, %v3932
    %v3937 = vmul.f32 %v3905, %v3933
    %v3938 = vmul.f32 %v3906, %v3934
    %v3939 = vmul.f32 %v3907, %v3935
    %v3940 = vlaneseq
    %v3941 = vshrl.u32 %v3940, 7
    %v3942 = vsub.s32 4, %v3941
    %v3943 = vrot.slane %v2200, %v3942
    %v3944 = vmul.f32 %v3936, %v3943
    %v3945 = vmul.f32 %v3937, %v3943
    %v3946 = vmul.f32 %v3938, %v3943
    %v3947 = vmul.f32 %v3939, %v3943
    %v3948 = vlaneseq
    %v3949 = vshrl.u32 %v3948, 7
    %v3950 = vsub.s32 5, %v3949
    %v3951 = vrot.slane %v2200, %v3950
    %v3952 = vadd.f32 %v3944, %v3951
    %v3953 = vadd.f32 %v3945, %v3951
    %v3954 = vadd.f32 %v3946, %v3951
    %v3955 = vadd.f32 %v3947, %v3951
    %v3956 = vlaneseq
    %v3957 = vshrl.u32 %v3956, 7
    %v3958 = vsub.s32 1, %v3957
    %v3959 = vrot.slane %v2200, %v3958
    %v3961 = vsel %vm145, %v3952, 0
    %v3964 = vsel %vm145, %v3953, 0
    %v3967 = vsel %vm145, %v3954, 0
    %v3970 = vsel %vm145, %v3955, 0
    %3972 = vmatprep.subr.mxu0 0.0
    %3973 = vmatpush1.msra.mxu0 %v2178
    %3974 = vmatprep.subr.mxu0 0.0
    %3975 = vmatpush1.msra.mxu0 %v2179
    %3976 = vmatprep.subr.mxu0 0.0
    %3977 = vmatpush1.msra.mxu0 %v2180
    %3978 = vmatprep.subr.mxu0 0.0
    %3979 = vmatpush1.msra.mxu0 %v2181
    %3980 = vmatprep.subr.mxu0 0.0
    %3981 = vmatpush1.msra.mxu0 0.0
    %3982 = vmatprep.subr.mxu0 0.0
    %3983 = vmatpush1.msra.mxu0 0.0
    %3984 = vmatprep.subr.mxu0 0.0
    %3985 = vmatpush1.msra.mxu0 0.0
    %3986 = vmatprep.subr.mxu0 0.0
    %3987 = vmatpush1.msra.mxu0 0.0
    %3988 = vmatprep.subr.mxu0 0.0
    %3989 = vmatpush1.msra.mxu0 0.0
    %3990 = vmatprep.subr.mxu0 0.0
    %3991 = vmatpush1.msra.mxu0 0.0
    %3992 = vmatprep.subr.mxu0 0.0
    %3993 = vmatpush1.msra.mxu0 0.0
    %3994 = vmatprep.subr.mxu0 0.0
    %3995 = vmatpush1.msra.mxu0 0.0
    %3996 = vmatprep.subr.mxu0 0.0
    %3997 = vmatpush1.msra.mxu0 0.0
    %3998 = vmatprep.subr.mxu0 0.0
    %3999 = vmatpush1.msra.mxu0 0.0
    %4000 = vmatprep.subr.mxu0 0.0
    %4001 = vmatpush1.msra.mxu0 0.0
    %4002 = vmatprep.subr.mxu0 0.0
    %4003 = vmatpush1.msra.mxu0 0.0
    %4004 = vmatprep.subr.mxu0 0.0
    %4005 = vmatpush1.msra.mxu0 0.0
    %4006 = vmatprep.subr.mxu0 0.0
    %4007 = vmatpush1.msra.mxu0 0.0
    %4008 = vmatprep.subr.mxu0 0.0
    %4009 = vmatpush1.msra.mxu0 0.0
    %4010 = vmatprep.subr.mxu0 0.0
    %4011 = vmatpush1.msra.mxu0 0.0
    %4012 = vmatprep.subr.mxu0 0.0
    %4013 = vmatpush1.msra.mxu0 0.0
    %4014 = vmatprep.subr.mxu0 0.0
    %4015 = vmatpush1.msra.mxu0 0.0
    %4016 = vmatprep.subr.mxu0 0.0
    %4017 = vmatpush1.msra.mxu0 0.0
    %4018 = vmatprep.subr.mxu0 0.0
    %4019 = vmatpush1.msra.mxu0 0.0
    %4020 = vmatprep.subr.mxu0 0.0
    %4021 = vmatpush1.msra.mxu0 0.0
    %4022 = vmatprep.subr.mxu0 0.0
    %4023 = vmatpush1.msra.mxu0 0.0
    %4024 = vmatprep.subr.mxu0 0.0
    %4025 = vmatpush1.msra.mxu0 0.0
    %4026 = vmatprep.subr.mxu0 0.0
    %4027 = vmatpush1.msra.mxu0 0.0
    %4028 = vmatprep.subr.mxu0 0.0
    %4029 = vmatpush1.msra.mxu0 0.0
    %4030 = vmatprep.subr.mxu0 0.0
    %4031 = vmatpush1.msra.mxu0 0.0
    %4032 = vmatprep.subr.mxu0 0.0
    %4033 = vmatpush1.msra.mxu0 0.0
    %4034 = vmatprep.subr.mxu0 0.0
    %4035 = vmatpush1.msra.mxu0 0.0
    %4036 = vmatprep.mubr.f32.mxu0 0.0
    %4037 = vmatmul.mubr.f32.gmra.mrb[0].mxu0 %v3961
    %v4038 = vpop.f32.mrb[0].mxu0
    %v4039 = vadd.f32 %v3959, %v4038
    %v4040 = vpop.f32.mrb[0].mxu0
    %4041 = vmatprep.mubr.f32.mxu0 0.0
    %4042 = vmatmul.mubr.f32.gmra.mrb[0].mxu0 %v3964
    %v4043 = vpop.f32.mrb[0].mxu0
    %v4044 = vadd.f32 %v3959, %v4043
    %v4045 = vpop.f32.mrb[0].mxu0
    %4046 = vmatprep.mubr.f32.mxu0 0.0
    %4047 = vmatmul.mubr.f32.gmra.mrb[0].mxu0 %v3967
    %v4048 = vpop.f32.mrb[0].mxu0
    %v4049 = vadd.f32 %v3959, %v4048
    %v4050 = vpop.f32.mrb[0].mxu0
    %4051 = vmatprep.mubr.f32.mxu0 0.0
    %4052 = vmatmul.mubr.f32.gmra.mrb[0].mxu0 %v3970
    %v4053 = vpop.f32.mrb[0].mxu0
    %v4054 = vadd.f32 %v3959, %v4053
    %v4055 = vpop.f32.mrb[0].mxu0
    %4056 = vdwg.mxu0
    %v4057 = vmax.f32 %v4039, 0.0
    %v4058 = vmax.f32 %v4044, 0.0
    %v4059 = vmax.f32 %v4049, 0.0
    %v4060 = vmax.f32 %v4054, 0.0
    %v4061 = vlaneseq
    %v4062 = vshrl.u32 %v4061, 7
    %v4063 = vsub.s32 6, %v4062
    %v4064 = vrot.slane %v2200, %v4063
    %v4066 = vsel %vm2003, %v4057, 0
    %v4069 = vsel %vm2003, %v4058, 0
    %v4072 = vsel %vm2003, %v4059, 0
    %v4075 = vsel %vm2003, %v4060, 0
    %4077 = vmatprep.subr.mxu0 0.0
    %4078 = vmatpush1.msra.mxu0 %v2191
    %4079 = vmatprep.subr.mxu0 0.0
    %4080 = vmatpush1.msra.mxu0 %v2192
    %4081 = vmatprep.subr.mxu0 0.0
    %4082 = vmatpush1.msra.mxu0 %v2193
    %4083 = vmatprep.subr.mxu0 0.0
    %4084 = vmatpush1.msra.mxu0 %v2194
    %4085 = vmatprep.subr.mxu0 0.0
    %4086 = vmatpush1.msra.mxu0 %v2195
    %4087 = vmatprep.subr.mxu0 0.0
    %4088 = vmatpush1.msra.mxu0 %v2196
    %4089 = vmatprep.subr.mxu0 0.0
    %4090 = vmatpush1.msra.mxu0 %v2197
    %4091 = vmatprep.subr.mxu0 0.0
    %4092 = vmatpush1.msra.mxu0 %v2198
    %4093 = vmatprep.subr.mxu0 0.0
    %4094 = vmatpush1.msra.mxu0 0.0
    %4095 = vmatprep.subr.mxu0 0.0
    %4096 = vmatpush1.msra.mxu0 0.0
    %4097 = vmatprep.subr.mxu0 0.0
    %4098 = vmatpush1.msra.mxu0 0.0
    %4099 = vmatprep.subr.mxu0 0.0
    %4100 = vmatpush1.msra.mxu0 0.0
    %4101 = vmatprep.subr.mxu0 0.0
    %4102 = vmatpush1.msra.mxu0 0.0
    %4103 = vmatprep.subr.mxu0 0.0
    %4104 = vmatpush1.msra.mxu0 0.0
    %4105 = vmatprep.subr.mxu0 0.0
    %4106 = vmatpush1.msra.mxu0 0.0
    %4107 = vmatprep.subr.mxu0 0.0
    %4108 = vmatpush1.msra.mxu0 0.0
    %4109 = vmatprep.subr.mxu0 0.0
    %4110 = vmatpush1.msra.mxu0 0.0
    %4111 = vmatprep.subr.mxu0 0.0
    %4112 = vmatpush1.msra.mxu0 0.0
    %4113 = vmatprep.subr.mxu0 0.0
    %4114 = vmatpush1.msra.mxu0 0.0
    %4115 = vmatprep.subr.mxu0 0.0
    %4116 = vmatpush1.msra.mxu0 0.0
    %4117 = vmatprep.subr.mxu0 0.0
    %4118 = vmatpush1.msra.mxu0 0.0
    %4119 = vmatprep.subr.mxu0 0.0
    %4120 = vmatpush1.msra.mxu0 0.0
    %4121 = vmatprep.subr.mxu0 0.0
    %4122 = vmatpush1.msra.mxu0 0.0
    %4123 = vmatprep.subr.mxu0 0.0
    %4124 = vmatpush1.msra.mxu0 0.0
    %4125 = vmatprep.subr.mxu0 0.0
    %4126 = vmatpush1.msra.mxu0 0.0
    %4127 = vmatprep.subr.mxu0 0.0
    %4128 = vmatpush1.msra.mxu0 0.0
    %4129 = vmatprep.subr.mxu0 0.0
    %4130 = vmatpush1.msra.mxu0 0.0
    %4131 = vmatprep.subr.mxu0 0.0
    %4132 = vmatpush1.msra.mxu0 0.0
    %4133 = vmatprep.subr.mxu0 0.0
    %4134 = vmatpush1.msra.mxu0 0.0
    %4135 = vmatprep.subr.mxu0 0.0
    %4136 = vmatpush1.msra.mxu0 0.0
    %4137 = vmatprep.subr.mxu0 0.0
    %4138 = vmatpush1.msra.mxu0 0.0
    %4139 = vmatprep.subr.mxu0 0.0
    %4140 = vmatpush1.msra.mxu0 0.0
    %4141 = vmatprep.mubr.f32.mxu0 0.0
    %4142 = vmatmul.mubr.f32.gmra.mrb[0].mxu0 %v4066
    %v4143 = vpop.f32.mrb[0].mxu0
    %v4144 = vadd.f32 %v4064, %v4143
    %v4145 = vpop.f32.mrb[0].mxu0
    %4146 = vmatprep.mubr.f32.mxu0 0.0
    %4147 = vmatmul.mubr.f32.gmra.mrb[0].mxu0 %v4069
    %v4148 = vpop.f32.mrb[0].mxu0
    %v4149 = vadd.f32 %v4064, %v4148
    %v4150 = vpop.f32.mrb[0].mxu0
    %4151 = vmatprep.mubr.f32.mxu0 0.0
    %4152 = vmatmul.mubr.f32.gmra.mrb[0].mxu0 %v4072
    %v4153 = vpop.f32.mrb[0].mxu0
    %v4154 = vadd.f32 %v4064, %v4153
    %v4155 = vpop.f32.mrb[0].mxu0
    %4156 = vmatprep.mubr.f32.mxu0 0.0
    %4157 = vmatmul.mubr.f32.gmra.mrb[0].mxu0 %v4075
    %v4158 = vpop.f32.mrb[0].mxu0
    %v4159 = vadd.f32 %v4064, %v4158
    %v4160 = vpop.f32.mrb[0].mxu0
    %4161 = vdwg.mxu0
    %v4162 = vadd.f32 %v3952, %v4144
    %v4163 = vadd.f32 %v3953, %v4149
    %v4164 = vadd.f32 %v3954, %v4154
    %v4165 = vadd.f32 %v3955, %v4159
    %v4166 = vsel %vm145, %v4162, 0.0
    %4167 = vadd.xlane.f32.xlu0 %v4166
    %v4168 = vpop.xlane.xlu0 %4167
    %v4169 = vsel %vm145, %v4163, 0.0
    %4170 = vadd.xlane.f32.xlu0 %v4169
    %v4171 = vpop.xlane.xlu0 %4170
    %v4172 = vsel %vm145, %v4164, 0.0
    %4173 = vadd.xlane.f32.xlu0 %v4172
    %v4174 = vpop.xlane.xlu0 %4173
    %v4175 = vsel %vm145, %v4165, 0.0
    %4176 = vadd.xlane.f32.xlu0 %v4175
    %v4177 = vpop.xlane.xlu0 %4176
    %v4178 = vmul.f32 %v4168, %v1837
    %v4179 = vmul.f32 %v4171, %v1837
    %v4180 = vmul.f32 %v4174, %v1837
    %v4181 = vmul.f32 %v4177, %v1837
    %v4182 = vsub.f32 %v4162, %v4178
    %v4183 = vsub.f32 %v4163, %v4179
    %v4184 = vsub.f32 %v4164, %v4180
    %v4185 = vsub.f32 %v4165, %v4181
    %v4186 = vmul.f32 %v4182, %v4182
    %v4187 = vmul.f32 %v4183, %v4183
    %v4188 = vmul.f32 %v4184, %v4184
    %v4189 = vmul.f32 %v4185, %v4185
    %v4190 = vsel %vm145, %v4186, 0.0
    %4191 = vadd.xlane.f32.xlu0 %v4190
    %v4192 = vpop.xlane.xlu0 %4191
    %v4193 = vsel %vm145, %v4187, 0.0
    %4194 = vadd.xlane.f32.xlu0 %v4193
    %v4195 = vpop.xlane.xlu0 %4194
    %v4196 = vsel %vm145, %v4188, 0.0
    %4197 = vadd.xlane.f32.xlu0 %v4196
    %v4198 = vpop.xlane.xlu0 %4197
    %v4199 = vsel %vm145, %v4189, 0.0
    %4200 = vadd.xlane.f32.xlu0 %v4199
    %v4201 = vpop.xlane.xlu0 %4200
    %v4202 = vmul.f32 %v4192, %v1837
    %v4203 = vmul.f32 %v4195, %v1837
    %v4204 = vmul.f32 %v4198, %v1837
    %v4205 = vmul.f32 %v4201, %v1837
    %v4206 = vadd.f32 %v4202, 1e-05
    %v4207 = vadd.f32 %v4203, 1e-05
    %v4208 = vadd.f32 %v4204, 1e-05
    %v4209 = vadd.f32 %v4205, 1e-05
    %v4210 = vrsqrt.pop %v4206
    %v4211 = vrsqrt.pop %v4207
    %v4212 = vrsqrt.pop %v4208
    %v4213 = vrsqrt.pop %v4209
    %v4214 = vmul.f32 %v4182, %v4210
    %v4215 = vmul.f32 %v4183, %v4211
    %v4216 = vmul.f32 %v4184, %v4212
    %v4217 = vmul.f32 %v4185, %v4213
    %v4218 = vlaneseq
    %v4219 = vshrl.u32 %v4218, 7
    %v4220 = vsub.s32 7, %v4219
    %v4221 = vrot.slane %v2200, %v4220
    %v4222 = vmul.f32 %v4214, %v4221
    %v4223 = vmul.f32 %v4215, %v4221
    %v4224 = vmul.f32 %v4216, %v4221
    %v4225 = vmul.f32 %v4217, %v4221
    %v4226 = vlaneseq
    %v4227 = vshrl.u32 %v4226, 7
    %v4228 = vsub.s32 0, %v4227
    %v4229 = vrot.slane %v2201, %v4228
    %v4230 = vadd.f32 %v4222, %v4229
    %v4231 = vadd.f32 %v4223, %v4229
    %v4232 = vadd.f32 %v4224, %v4229
    %v4233 = vadd.f32 %v4225, %v4229
    %v4234 = vld [vmem:[%s5] sm:$0x1]
    %v4235 = vld [vmem:[%s5 + $0x1] sm:$0x1]
    %v4236 = vsel %vm145, %v4230, 0.0
    %4237 = vadd.xlane.f32.xlu0 %v4236
    %v4238 = vpop.xlane.xlu0 %4237
    %v4239 = vsel %vm145, %v4231, 0.0
    %4240 = vadd.xlane.f32.xlu0 %v4239
    %v4241 = vpop.xlane.xlu0 %4240
    %v4242 = vsel %vm145, %v4232, 0.0
    %4243 = vadd.xlane.f32.xlu0 %v4242
    %v4244 = vpop.xlane.xlu0 %4243
    %v4245 = vsel %vm145, %v4233, 0.0
    %4246 = vadd.xlane.f32.xlu0 %v4245
    %v4247 = vpop.xlane.xlu0 %4246
    %v4248 = vmul.f32 %v4238, %v1837
    %v4249 = vmul.f32 %v4241, %v1837
    %v4250 = vmul.f32 %v4244, %v1837
    %v4251 = vmul.f32 %v4247, %v1837
    %v4252 = vsub.f32 %v4230, %v4248
    %v4253 = vsub.f32 %v4231, %v4249
    %v4254 = vsub.f32 %v4232, %v4250
    %v4255 = vsub.f32 %v4233, %v4251
    %v4256 = vmul.f32 %v4252, %v4252
    %v4257 = vmul.f32 %v4253, %v4253
    %v4258 = vmul.f32 %v4254, %v4254
    %v4259 = vmul.f32 %v4255, %v4255
    %v4260 = vsel %vm145, %v4256, 0.0
    %4261 = vadd.xlane.f32.xlu0 %v4260
    %v4262 = vpop.xlane.xlu0 %4261
    %v4263 = vsel %vm145, %v4257, 0.0
    %4264 = vadd.xlane.f32.xlu0 %v4263
    %v4265 = vpop.xlane.xlu0 %4264
    %v4266 = vsel %vm145, %v4258, 0.0
    %4267 = vadd.xlane.f32.xlu0 %v4266
    %v4268 = vpop.xlane.xlu0 %4267
    %v4269 = vsel %vm145, %v4259, 0.0
    %4270 = vadd.xlane.f32.xlu0 %v4269
    %v4271 = vpop.xlane.xlu0 %4270
    %v4272 = vmul.f32 %v4262, %v1837
    %v4273 = vmul.f32 %v4265, %v1837
    %v4274 = vmul.f32 %v4268, %v1837
    %v4275 = vmul.f32 %v4271, %v1837
    %v4276 = vadd.f32 %v4272, 1e-05
    %v4277 = vadd.f32 %v4273, 1e-05
    %v4278 = vadd.f32 %v4274, 1e-05
    %v4279 = vadd.f32 %v4275, 1e-05
    %v4280 = vrsqrt.pop %v4276
    %v4281 = vrsqrt.pop %v4277
    %v4282 = vrsqrt.pop %v4278
    %v4283 = vrsqrt.pop %v4279
    %v4284 = vmul.f32 %v4252, %v4280
    %v4285 = vmul.f32 %v4253, %v4281
    %v4286 = vmul.f32 %v4254, %v4282
    %v4287 = vmul.f32 %v4255, %v4283
    %v4288 = vlaneseq
    %v4289 = vshrl.u32 %v4288, 7
    %v4290 = vsub.s32 0, %v4289
    %v4291 = vrot.slane %v4234, %v4290
    %v4292 = vmul.f32 %v4284, %v4291
    %v4293 = vmul.f32 %v4285, %v4291
    %v4294 = vmul.f32 %v4286, %v4291
    %v4295 = vmul.f32 %v4287, %v4291
    %v4296 = vlaneseq
    %v4297 = vshrl.u32 %v4296, 7
    %v4298 = vsub.s32 0, %v4297
    %v4299 = vrot.slane %v4235, %v4298
    %v4300 = vadd.f32 %v4292, %v4299
    %v4301 = vadd.f32 %v4293, %v4299
    %v4302 = vadd.f32 %v4294, %v4299
    %v4303 = vadd.f32 %v4295, %v4299
    %4304 = vst.msk [vmem:[#allocation2] sm:$0xff] %vm145, %v4300
    %4305 = vst.msk [vmem:[#allocation2 + $0x8] sm:$0xff] %vm145, %v4301
    %4306 = vst.msk [vmem:[#allocation2 + $0x10] sm:$0xff] %vm145, %v4302
    %4307 = vst.msk [vmem:[#allocation2 + $0x18] sm:$0xff] %vm145, %v4303
    %vm4308 = vcmp.eq.s32.totalorder %v102, %v37
    %v4309 = vsel %vm4308, 0.0625, 0.0
    %v4311 = vsel %vm145, %v4309, 0
    %4313 = vmatprep.subr.mxu0 0.0
    %4314 = vmatpush1.msra.mxu0 %v4300
    %4315 = vmatprep.subr.mxu0 0.0
    %4316 = vmatpush1.msra.mxu0 %v4301
    %4317 = vmatprep.subr.mxu0 0.0
    %4318 = vmatpush1.msra.mxu0 %v4302
    %4319 = vmatprep.subr.mxu0 0.0
    %4320 = vmatpush1.msra.mxu0 %v4303
    %4321 = vmatprep.subr.mxu0 0.0
    %4322 = vmatpush1.msra.mxu0 0.0
    %4323 = vmatprep.subr.mxu0 0.0
    %4324 = vmatpush1.msra.mxu0 0.0
    %4325 = vmatprep.subr.mxu0 0.0
    %4326 = vmatpush1.msra.mxu0 0.0
    %4327 = vmatprep.subr.mxu0 0.0
    %4328 = vmatpush1.msra.mxu0 0.0
    %4329 = vmatprep.subr.mxu0 0.0
    %4330 = vmatpush1.msra.mxu0 0.0
    %4331 = vmatprep.subr.mxu0 0.0
    %4332 = vmatpush1.msra.mxu0 0.0
    %4333 = vmatprep.subr.mxu0 0.0
    %4334 = vmatpush1.msra.mxu0 0.0
    %4335 = vmatprep.subr.mxu0 0.0
    %4336 = vmatpush1.msra.mxu0 0.0
    %4337 = vmatprep.subr.mxu0 0.0
    %4338 = vmatpush1.msra.mxu0 0.0
    %4339 = vmatprep.subr.mxu0 0.0
    %4340 = vmatpush1.msra.mxu0 0.0
    %4341 = vmatprep.subr.mxu0 0.0
    %4342 = vmatpush1.msra.mxu0 0.0
    %4343 = vmatprep.subr.mxu0 0.0
    %4344 = vmatpush1.msra.mxu0 0.0
    %4345 = vmatprep.subr.mxu0 0.0
    %4346 = vmatpush1.msra.mxu0 0.0
    %4347 = vmatprep.subr.mxu0 0.0
    %4348 = vmatpush1.msra.mxu0 0.0
    %4349 = vmatprep.subr.mxu0 0.0
    %4350 = vmatpush1.msra.mxu0 0.0
    %4351 = vmatprep.subr.mxu0 0.0
    %4352 = vmatpush1.msra.mxu0 0.0
    %4353 = vmatprep.subr.mxu0 0.0
    %4354 = vmatpush1.msra.mxu0 0.0
    %4355 = vmatprep.subr.mxu0 0.0
    %4356 = vmatpush1.msra.mxu0 0.0
    %4357 = vmatprep.subr.mxu0 0.0
    %4358 = vmatpush1.msra.mxu0 0.0
    %4359 = vmatprep.subr.mxu0 0.0
    %4360 = vmatpush1.msra.mxu0 0.0
    %4361 = vmatprep.subr.mxu0 0.0
    %4362 = vmatpush1.msra.mxu0 0.0
    %4363 = vmatprep.subr.mxu0 0.0
    %4364 = vmatpush1.msra.mxu0 0.0
    %4365 = vmatprep.subr.mxu0 0.0
    %4366 = vmatpush1.msra.mxu0 0.0
    %4367 = vmatprep.subr.mxu0 0.0
    %4368 = vmatpush1.msra.mxu0 0.0
    %4369 = vmatprep.subr.mxu0 0.0
    %4370 = vmatpush1.msra.mxu0 0.0
    %4371 = vmatprep.subr.mxu0 0.0
    %4372 = vmatpush1.msra.mxu0 0.0
    %4373 = vmatprep.subr.mxu0 0.0
    %4374 = vmatpush1.msra.mxu0 0.0
    %4375 = vmatprep.subr.mxu0 0.0
    %4376 = vmatpush1.msra.mxu0 0.0
    %4377 = vmatprep.mubr.f32.mxu0 0.0
    %4378 = vmatmul.mubr.f32.gmra.mrb[0].mxu0 %v4311
    %v4379 = vpop.f32.mrb[0].mxu0
    %v4380 = vadd.f32 0.0, %v4379
    %v4381 = vpop.f32.mrb[0].mxu0
    %4382 = vdwg.mxu0
    %vm4383 = vcmask 254976
    %4384 = vst.msk [vmem:[#allocation4] sm:$0x3] %vm4383, %v4380
    %v4385 = vsel %vm4383, %v4380, 0.0
    %v4386 = vrot.slane %v4385, 4
    %v4387 = vadd.f32 %v4385, %v4386
    %v4388 = vrot.slane %v4387, 2
    %v4389 = vadd.f32 %v4387, %v4388
    %v4390 = vrot.slane %v4389, 1
    %v4391 = vadd.f32 %v4389, %v4390
    %v4392 = vrcp.pop 2.0
    %v4393 = vmul.f32 %v4391, %v4392
    %vm4394 = vcmask 253952
    %4395 = vst.msk [vmem:[#allocation6] sm:$0x1] %vm4394, %v4393
    // Predicated region
    $region26: #{spatial_temporal_encoder_forward.1} parent=1 // pred_check
      _
    $region27: #{spatial_temporal_encoder_forward.1} parent=1 // pred_check_branch
      %4397 = sbr.rel (0) target = $region29
    $region28: #{spatial_temporal_encoder_forward.1} parent=1 // pred_region
      %s4399 = ssub.s32 512, 512
      %4400 = vsyncadd [#allocation3], %s4399
      %s4401 = sshll.u32 [#allocation2], 4
      %s4402 = int_to_ptr.vmem [resolvable:$true] %s4401
      %4407 = dma.vmem_to_hbm [thread:$0]  %s4402, 512, %s6, [#allocation3], 128, 128, 8
    $region29: #{spatial_temporal_encoder_forward.1} parent=1 // pred_fallthru
      _
    // Predicated region
    $region30: #{spatial_temporal_encoder_forward.1} parent=1 // pred_check
      _
    $region31: #{spatial_temporal_encoder_forward.1} parent=1 // pred_check_branch
      %4409 = sbr.rel (0) target = $region33
    $region32: #{spatial_temporal_encoder_forward.1} parent=1 // pred_region
      %s4411 = ssub.s32 32, 32
      %4412 = vsyncadd [#allocation5], %s4411
      %s4414 = sshll.u32 [#allocation4], 4
      %s4415 = int_to_ptr.vmem [resolvable:$true] %s4414
      %4417 = dma.vmem_to_hbm [thread:$0]  %s4415, 32, %s7, [#allocation5]
    $region33: #{spatial_temporal_encoder_forward.1} parent=1 // pred_fallthru
      _
    // Predicated region
    $region34: #{spatial_temporal_encoder_forward.1} parent=1 // pred_check
      _
    $region35: #{spatial_temporal_encoder_forward.1} parent=1 // pred_check_branch
      %4419 = sbr.rel (0) target = $region37
    $region36: #{spatial_temporal_encoder_forward.1} parent=1 // pred_region
      %s4421 = ssub.s32 16, 16
      %4422 = vsyncadd [#allocation5], %s4421
      %s4424 = sshll.u32 [#allocation6], 4
      %s4425 = int_to_ptr.vmem [resolvable:$true] %s4424
      %4427 = dma.vmem_to_hbm [thread:$0]  %s4425, 16, %s8, [#allocation5]
    $region37: #{spatial_temporal_encoder_forward.1} parent=1 // pred_fallthru
      _
    // Predicated region
    $region38: #{spatial_temporal_encoder_forward.1} parent=1 // pred_check
      _
    $region39: #{spatial_temporal_encoder_forward.1} parent=1 // pred_check_branch
      %4429 = sbr.rel (0) target = $region41
    $region40: #{spatial_temporal_encoder_forward.1} parent=1 // pred_region
      %4430 = dma.done [#allocation3], 512
    $region41: #{spatial_temporal_encoder_forward.1} parent=1 // pred_fallthru
      _
    // Predicated region
    $region42: #{spatial_temporal_encoder_forward.1} parent=1 // pred_check
      _
    $region43: #{spatial_temporal_encoder_forward.1} parent=1 // pred_check_branch
      %4432 = sbr.rel (0) target = $region45
    $region44: #{spatial_temporal_encoder_forward.1} parent=1 // pred_region
      %4433 = dma.done [#allocation5], 32
    $region45: #{spatial_temporal_encoder_forward.1} parent=1 // pred_fallthru
      _
    // Predicated region
    $region46: #{spatial_temporal_encoder_forward.1} parent=1 // pred_check
      _
    $region47: #{spatial_temporal_encoder_forward.1} parent=1 // pred_check_branch
      %4435 = sbr.rel (0) target = $region49
    $region48: #{spatial_temporal_encoder_forward.1} parent=1 // pred_region
      %4436 = dma.done [#allocation5], 16
    $region49: #{spatial_temporal_encoder_forward.1} parent=1 // pred_fallthru
      _
    %4437 = vsyncpa [#allocation3], 1
    %4438 = vsyncpa [#allocation5], 1

</llo_original>
